<compile_context>
chip_gen: v7x
topology: tpu7x:2x2x1
jax: 0.10.0
libtpu: 0.0.40
codegen_flags: <defaults>
</compile_context>

<pallas_src>
import functools

import jax
import jax.numpy as jnp
from jax.experimental import pallas as pl
from jax.experimental.pallas import tpu as pltpu  # noqa: F401  (no TPU-specific ops needed at this size)


def _round_up(x, m):
    return (x + m - 1) // m * m


# ------------------------------ Pallas kernel ------------------------------ #

def _conv_bn_relu_pool_kernel(x_ref, w_ref, p_ref, out_ref, *,
                              kh, kw, h_out, w_out, w_pad, n_batch, eps):
    """Fused Conv2d + training-mode BN + ReLU + freq max-pool.

    x_ref:   (Cin_p, M_alloc) f32  zero-padded input, lanes ordered (h, n, w_pad)
    w_ref:   (kh*kw, Cout, Cin_p) f32  one (Cout, Cin_p) weight tap per leading row
    p_ref:   (Cout, 2) f32  column 0 = gamma, column 1 = beta
    out_ref: (Cout, N*W_pad) f32  pooled output (the last W_pad-W_out cols of each
             batch block are junk; the wrapper slices them off)
    """
    cout = out_ref.shape[0]
    row_len = n_batch * w_pad            # lanes per output frequency row
    m_comp = h_out * row_len             # columns the kernel computes on
    m_valid = n_batch * h_out * w_out    # real conv outputs (BN population size)
    inv_m = 1.0 / float(m_valid)

    # ---- Conv: kh*kw shifted accumulating matmuls, f32 register accumulator ----
    # For tap (i, j): column c = h*row_len + n*w_pad + w needs input column
    # c + i*row_len + j  (valid for w < w_out; other columns are masked below).
    yt = jnp.zeros((cout, m_comp), dtype=jnp.float32)
    for i in range(kh):
        for j in range(kw):
            shift = i * row_len + j
            xs = x_ref[:, shift:shift + m_comp]              # (Cin_p, m_comp)
            yt = yt + jnp.dot(w_ref[i * kw + j], xs,
                              preferred_element_type=jnp.float32)

    # ---- Mask off the W-padding columns (w >= w_out within each w_pad block) ----
    col = jax.lax.broadcasted_iota(jnp.int32, (cout, m_comp), 1)
    valid = (col % w_pad) < w_out
    yt = jnp.where(valid, yt, 0.0)

    # ---- Training-mode BatchNorm (batch statistics, biased var) + ReLU --------
    mean = jnp.sum(yt, axis=1, keepdims=True) * inv_m                     # (Cout,1)
    centered = yt - mean
    var = jnp.sum(jnp.where(valid, centered * centered, 0.0),
                  axis=1, keepdims=True) * inv_m                          # (Cout,1)
    scale = p_ref[:, 0:1] * jax.lax.rsqrt(var + eps)
    z = jnp.maximum(centered * scale + p_ref[:, 1:2], 0.0)                # (Cout,m_comp)

    # ---- MaxPool over freq: max over h_out contiguous (Cout, row_len) slices ---
    pooled = z[:, 0:row_len]
    for hh in range(1, h_out):
        pooled = jnp.maximum(pooled, z[:, hh * row_len:(hh + 1) * row_len])
    out_ref[...] = pooled                                                 # (Cout, N*W_pad)


# --------------------------------- Wrapper ---------------------------------- #

@functools.partial(jax.jit, static_argnames=("eps",))
def conv_v_forward(x, weight, bias, gamma, beta, eps=1e-5):
    """Forward pass of Conv_V.  x: (N, Cin, H, W) f32 -> (N, Cout, W_out) f32.

    `bias` is accepted for parity with the PyTorch module but is not passed to
    the kernel: training-mode BN subtracts the batch mean, which cancels a
    per-channel conv bias exactly (the forward output does not depend on it).
    """
    N, Cin, H, W = x.shape
    Cout, _, kh, kw = weight.shape
    assert kw % 2 == 1, "padding=(0, kw//2) only matches PyTorch for odd kw"
    pad_w = kw // 2
    W_pad = W + 2 * pad_w
    H_out = H - kh + 1
    W_out = W_pad - kw + 1               # == W for odd kw

    cin_p = _round_up(Cin, 8)            # aligned sublane tiles for the matmuls
    row_len = N * W_pad
    m_data = H * row_len                 # real flattened input columns
    max_shift = (kh - 1) * row_len + (kw - 1)
    m_alloc = _round_up(H_out * row_len + max_shift, 128)   # >= m_data + kw - 1

    # Layout plumbing only (~10 KiB): pad W, lanes ordered (h, n, w_pad).
    xp = jnp.pad(x, ((0, 0), (0, 0), (0, 0), (pad_w, pad_w)))       # (N,Cin,H,W_pad)
    x2d = xp.transpose(1, 2, 0, 3).reshape(Cin, m_data)             # (Cin, H*N*W_pad)
    x2d = jnp.pad(x2d.astype(jnp.float32),
                  ((0, cin_p - Cin), (0, m_alloc - m_data)))        # (Cin_p, m_alloc)

    # One (Cout, Cin_p) weight tap per (i, j); packed gamma/beta in one operand.
    w_taps = weight.transpose(2, 3, 0, 1).reshape(kh * kw, Cout, Cin)
    w_taps = jnp.pad(w_taps, ((0, 0), (0, 0), (0, cin_p - Cin))).astype(jnp.float32)
    params = jnp.stack([gamma, beta], axis=1).astype(jnp.float32)    # (Cout, 2)

    kernel = functools.partial(_conv_bn_relu_pool_kernel,
                               kh=kh, kw=kw, h_out=H_out, w_out=W_out,
                               w_pad=W_pad, n_batch=N, eps=eps)

    out2d = pl.pallas_call(
        kernel,
        out_shape=jax.ShapeDtypeStruct((Cout, row_len), jnp.float32),
        grid=(1,),
        in_specs=[
            pl.BlockSpec((cin_p, m_alloc), lambda i: (0, 0)),
            pl.BlockSpec((kh * kw, Cout, cin_p), lambda i: (0, 0, 0)),
            pl.BlockSpec((Cout, 2), lambda i: (0, 0)),
        ],
        out_specs=pl.BlockSpec((Cout, row_len), lambda i: (0, 0)),
    )(x2d, w_taps, params)

    # (Cout, N, W_pad) -> drop pad columns -> PyTorch's (N, Cout, W_out).
    out = out2d.reshape(Cout, N, W_pad)[:, :, :W_out].transpose(1, 0, 2)
    return out
    # TODO(synk): BatchNorm2d running-mean/var buffer updates (training side
    # effect) are not modeled; they do not affect the forward output.


# --------------------------- Pure-JAX reference ----------------------------- #

def conv_v_reference(x, weight, bias, gamma, beta, eps=1e-5):
    """Independent reference: lax.conv + training-mode BN + ReLU + freq max-pool."""
    Cout, Cin, kh, kw = weight.shape
    y = jax.lax.conv_general_dilated(
        x, weight, window_strides=(1, 1),
        padding=((0, 0), (kw // 2, kw // 2)),
        dimension_numbers=("NCHW", "OIHW", "NCHW"),
        preferred_element_type=jnp.float32)
    y = y + bias.reshape(1, Cout, 1, 1)
    mean = jnp.mean(y, axis=(0, 2, 3), keepdims=True)
    var = jnp.mean((y - mean) ** 2, axis=(0, 2, 3), keepdims=True)
    z = (y - mean) * (gamma.reshape(1, Cout, 1, 1) / jnp.sqrt(var + eps)) \
        + beta.reshape(1, Cout, 1, 1)
    z = jnp.maximum(z, 0.0)
    return jnp.max(z, axis=2)            # MaxPool2d((freq,1)) + squeeze(2)


# ---------------------------------- Main ------------------------------------ #

if __name__ == "__main__":
    # Module config: Conv_V(input_channels=4, output_channels=8, filter_shape=(5, 5))
    N, Cin, H, W = 2, 4, 16, 16
    Cout, kh, kw = 8, 5, 5

    key = jax.random.PRNGKey(0)
    kx, kw_, kb, kg, kbeta = jax.random.split(key, 5)

    x = jax.random.normal(kx, (N, Cin, H, W), dtype=jnp.float32)
    weight = 0.1 * jax.random.normal(kw_, (Cout, Cin, kh, kw), dtype=jnp.float32)
    bias = 0.1 * jax.random.normal(kb, (Cout,), dtype=jnp.float32)
    gamma = 1.0 + 0.1 * jax.random.normal(kg, (Cout,), dtype=jnp.float32)
    beta = 0.1 * jax.random.normal(kbeta, (Cout,), dtype=jnp.float32)

    out = jax.block_until_ready(conv_v_forward(x, weight, bias, gamma, beta))
    assert out.shape == (N, Cout, W), f"bad output shape {out.shape}"

    # Full-f32 reference (also numerically confirms the conv-bias cancellation).
    ref = jax.block_until_ready(conv_v_reference(x, weight, bias, gamma, beta))
    err = jnp.max(jnp.abs(out - ref))
    assert jnp.allclose(out, ref, rtol=1e-3, atol=1e-3), f"max abs diff {err}"

    print("KERNEL_OK")
</pallas_src>

<mosaic_0001>
module attributes {stable_mosaic.version = 11 : i64} {
  func.func @_conv_bn_relu_pool_kernel(%arg0: i32, %arg1: memref<8x768xf32, #tpu.memory_space<vmem>>, %arg2: memref<25x8x8xf32, #tpu.memory_space<vmem>>, %arg3: memref<8x2xf32, #tpu.memory_space<vmem>>, %arg4: memref<8x40xf32, #tpu.memory_space<vmem>>) attributes {dimension_semantics = [#tpu.dimension_semantics<arbitrary>], iteration_bounds = array<i64: 1>, scalar_prefetch = 0 : i64, scratch_operands = 0 : i64, tpu.core_type = #tpu.core_type<tc>, window_params = [{pipeline_mode = #tpu.pipeline_mode<synchronous>, transform_indices = @transform_0, window_bounds = array<i64: 8, 768>}, {pipeline_mode = #tpu.pipeline_mode<synchronous>, transform_indices = @transform_1, window_bounds = array<i64: 25, 8, 8>}, {pipeline_mode = #tpu.pipeline_mode<synchronous>, transform_indices = @transform_2, window_bounds = array<i64: 8, 2>}, {pipeline_mode = #tpu.pipeline_mode<synchronous>, transform_indices = @transform_3, window_bounds = array<i64: 8, 40>}]} {
    %cst = arith.constant 0.000000e+00 : f32
    %0 = vector.broadcast %cst : f32 to vector<8x480xf32>
    %c0 = arith.constant 0 : index
    %c0_0 = arith.constant 0 : index
    %1 = vector.load %arg1[%c0, %c0_0] : memref<8x768xf32, #tpu.memory_space<vmem>>, vector<8x480xf32>
    %c0_1 = arith.constant 0 : index
    %c0_2 = arith.constant 0 : index
    %c0_3 = arith.constant 0 : index
    %2 = vector.load %arg2[%c0_1, %c0_2, %c0_3] : memref<25x8x8xf32, #tpu.memory_space<vmem>>, vector<1x8x8xf32>
    %3 = vector.shape_cast %2 : vector<1x8x8xf32> to vector<8x8xf32>
    %cst_4 = arith.constant dense<0.000000e+00> : vector<8x480xf32>
    %4 = tpu.matmul %3, %1, %cst_4 {dimension_numbers = #tpu.dot_dimension_numbers<[1], [0], [0], [1], [0, 0, 1, 1], [], []>} : vector<8x8xf32>, vector<8x480xf32>, vector<8x480xf32> -> vector<8x480xf32>
    %5 = arith.addf %0, %4 : vector<8x480xf32>
    %c0_5 = arith.constant 0 : index
    %c1 = arith.constant 1 : index
    %6 = vector.load %arg1[%c0_5, %c1] : memref<8x768xf32, #tpu.memory_space<vmem>>, vector<8x480xf32>
    %c1_6 = arith.constant 1 : index
    %c0_7 = arith.constant 0 : index
    %c0_8 = arith.constant 0 : index
    %7 = vector.load %arg2[%c1_6, %c0_7, %c0_8] : memref<25x8x8xf32, #tpu.memory_space<vmem>>, vector<1x8x8xf32>
    %8 = vector.shape_cast %7 : vector<1x8x8xf32> to vector<8x8xf32>
    %cst_9 = arith.constant dense<0.000000e+00> : vector<8x480xf32>
    %9 = tpu.matmul %8, %6, %cst_9 {dimension_numbers = #tpu.dot_dimension_numbers<[1], [0], [0], [1], [0, 0, 1, 1], [], []>} : vector<8x8xf32>, vector<8x480xf32>, vector<8x480xf32> -> vector<8x480xf32>
    %10 = arith.addf %5, %9 : vector<8x480xf32>
    %c0_10 = arith.constant 0 : index
    %c2 = arith.constant 2 : index
    %11 = vector.load %arg1[%c0_10, %c2] : memref<8x768xf32, #tpu.memory_space<vmem>>, vector<8x480xf32>
    %c2_11 = arith.constant 2 : index
    %c0_12 = arith.constant 0 : index
    %c0_13 = arith.constant 0 : index
    %12 = vector.load %arg2[%c2_11, %c0_12, %c0_13] : memref<25x8x8xf32, #tpu.memory_space<vmem>>, vector<1x8x8xf32>
    %13 = vector.shape_cast %12 : vector<1x8x8xf32> to vector<8x8xf32>
    %cst_14 = arith.constant dense<0.000000e+00> : vector<8x480xf32>
    %14 = tpu.matmul %13, %11, %cst_14 {dimension_numbers = #tpu.dot_dimension_numbers<[1], [0], [0], [1], [0, 0, 1, 1], [], []>} : vector<8x8xf32>, vector<8x480xf32>, vector<8x480xf32> -> vector<8x480xf32>
    %15 = arith.addf %10, %14 : vector<8x480xf32>
    %c0_15 = arith.constant 0 : index
    %c3 = arith.constant 3 : index
    %16 = vector.load %arg1[%c0_15, %c3] : memref<8x768xf32, #tpu.memory_space<vmem>>, vector<8x480xf32>
    %c3_16 = arith.constant 3 : index
    %c0_17 = arith.constant 0 : index
    %c0_18 = arith.constant 0 : index
    %17 = vector.load %arg2[%c3_16, %c0_17, %c0_18] : memref<25x8x8xf32, #tpu.memory_space<vmem>>, vector<1x8x8xf32>
    %18 = vector.shape_cast %17 : vector<1x8x8xf32> to vector<8x8xf32>
    %cst_19 = arith.constant dense<0.000000e+00> : vector<8x480xf32>
    %19 = tpu.matmul %18, %16, %cst_19 {dimension_numbers = #tpu.dot_dimension_numbers<[1], [0], [0], [1], [0, 0, 1, 1], [], []>} : vector<8x8xf32>, vector<8x480xf32>, vector<8x480xf32> -> vector<8x480xf32>
    %20 = arith.addf %15, %19 : vector<8x480xf32>
    %c0_20 = arith.constant 0 : index
    %c4 = arith.constant 4 : index
    %21 = vector.load %arg1[%c0_20, %c4] : memref<8x768xf32, #tpu.memory_space<vmem>>, vector<8x480xf32>
    %c4_21 = arith.constant 4 : index
    %c0_22 = arith.constant 0 : index
    %c0_23 = arith.constant 0 : index
    %22 = vector.load %arg2[%c4_21, %c0_22, %c0_23] : memref<25x8x8xf32, #tpu.memory_space<vmem>>, vector<1x8x8xf32>
    %23 = vector.shape_cast %22 : vector<1x8x8xf32> to vector<8x8xf32>
    %cst_24 = arith.constant dense<0.000000e+00> : vector<8x480xf32>
    %24 = tpu.matmul %23, %21, %cst_24 {dimension_numbers = #tpu.dot_dimension_numbers<[1], [0], [0], [1], [0, 0, 1, 1], [], []>} : vector<8x8xf32>, vector<8x480xf32>, vector<8x480xf32> -> vector<8x480xf32>
    %25 = arith.addf %20, %24 : vector<8x480xf32>
    %c0_25 = arith.constant 0 : index
    %c40 = arith.constant 40 : index
    %26 = vector.load %arg1[%c0_25, %c40] : memref<8x768xf32, #tpu.memory_space<vmem>>, vector<8x480xf32>
    %c5 = arith.constant 5 : index
    %c0_26 = arith.constant 0 : index
    %c0_27 = arith.constant 0 : index
    %27 = vector.load %arg2[%c5, %c0_26, %c0_27] : memref<25x8x8xf32, #tpu.memory_space<vmem>>, vector<1x8x8xf32>
    %28 = vector.shape_cast %27 : vector<1x8x8xf32> to vector<8x8xf32>
    %cst_28 = arith.constant dense<0.000000e+00> : vector<8x480xf32>
    %29 = tpu.matmul %28, %26, %cst_28 {dimension_numbers = #tpu.dot_dimension_numbers<[1], [0], [0], [1], [0, 0, 1, 1], [], []>} : vector<8x8xf32>, vector<8x480xf32>, vector<8x480xf32> -> vector<8x480xf32>
    %30 = arith.addf %25, %29 : vector<8x480xf32>
    %c0_29 = arith.constant 0 : index
    %c41 = arith.constant 41 : index
    %31 = vector.load %arg1[%c0_29, %c41] : memref<8x768xf32, #tpu.memory_space<vmem>>, vector<8x480xf32>
    %c6 = arith.constant 6 : index
    %c0_30 = arith.constant 0 : index
    %c0_31 = arith.constant 0 : index
    %32 = vector.load %arg2[%c6, %c0_30, %c0_31] : memref<25x8x8xf32, #tpu.memory_space<vmem>>, vector<1x8x8xf32>
    %33 = vector.shape_cast %32 : vector<1x8x8xf32> to vector<8x8xf32>
    %cst_32 = arith.constant dense<0.000000e+00> : vector<8x480xf32>
    %34 = tpu.matmul %33, %31, %cst_32 {dimension_numbers = #tpu.dot_dimension_numbers<[1], [0], [0], [1], [0, 0, 1, 1], [], []>} : vector<8x8xf32>, vector<8x480xf32>, vector<8x480xf32> -> vector<8x480xf32>
    %35 = arith.addf %30, %34 : vector<8x480xf32>
    %c0_33 = arith.constant 0 : index
    %c42 = arith.constant 42 : index
    %36 = vector.load %arg1[%c0_33, %c42] : memref<8x768xf32, #tpu.memory_space<vmem>>, vector<8x480xf32>
    %c7 = arith.constant 7 : index
    %c0_34 = arith.constant 0 : index
    %c0_35 = arith.constant 0 : index
    %37 = vector.load %arg2[%c7, %c0_34, %c0_35] : memref<25x8x8xf32, #tpu.memory_space<vmem>>, vector<1x8x8xf32>
    %38 = vector.shape_cast %37 : vector<1x8x8xf32> to vector<8x8xf32>
    %cst_36 = arith.constant dense<0.000000e+00> : vector<8x480xf32>
    %39 = tpu.matmul %38, %36, %cst_36 {dimension_numbers = #tpu.dot_dimension_numbers<[1], [0], [0], [1], [0, 0, 1, 1], [], []>} : vector<8x8xf32>, vector<8x480xf32>, vector<8x480xf32> -> vector<8x480xf32>
    %40 = arith.addf %35, %39 : vector<8x480xf32>
    %c0_37 = arith.constant 0 : index
    %c43 = arith.constant 43 : index
    %41 = vector.load %arg1[%c0_37, %c43] : memref<8x768xf32, #tpu.memory_space<vmem>>, vector<8x480xf32>
    %c8 = arith.constant 8 : index
    %c0_38 = arith.constant 0 : index
    %c0_39 = arith.constant 0 : index
    %42 = vector.load %arg2[%c8, %c0_38, %c0_39] : memref<25x8x8xf32, #tpu.memory_space<vmem>>, vector<1x8x8xf32>
    %43 = vector.shape_cast %42 : vector<1x8x8xf32> to vector<8x8xf32>
    %cst_40 = arith.constant dense<0.000000e+00> : vector<8x480xf32>
    %44 = tpu.matmul %43, %41, %cst_40 {dimension_numbers = #tpu.dot_dimension_numbers<[1], [0], [0], [1], [0, 0, 1, 1], [], []>} : vector<8x8xf32>, vector<8x480xf32>, vector<8x480xf32> -> vector<8x480xf32>
    %45 = arith.addf %40, %44 : vector<8x480xf32>
    %c0_41 = arith.constant 0 : index
    %c44 = arith.constant 44 : index
    %46 = vector.load %arg1[%c0_41, %c44] : memref<8x768xf32, #tpu.memory_space<vmem>>, vector<8x480xf32>
    %c9 = arith.constant 9 : index
    %c0_42 = arith.constant 0 : index
    %c0_43 = arith.constant 0 : index
    %47 = vector.load %arg2[%c9, %c0_42, %c0_43] : memref<25x8x8xf32, #tpu.memory_space<vmem>>, vector<1x8x8xf32>
    %48 = vector.shape_cast %47 : vector<1x8x8xf32> to vector<8x8xf32>
    %cst_44 = arith.constant dense<0.000000e+00> : vector<8x480xf32>
    %49 = tpu.matmul %48, %46, %cst_44 {dimension_numbers = #tpu.dot_dimension_numbers<[1], [0], [0], [1], [0, 0, 1, 1], [], []>} : vector<8x8xf32>, vector<8x480xf32>, vector<8x480xf32> -> vector<8x480xf32>
    %50 = arith.addf %45, %49 : vector<8x480xf32>
    %c0_45 = arith.constant 0 : index
    %c80 = arith.constant 80 : index
    %51 = vector.load %arg1[%c0_45, %c80] : memref<8x768xf32, #tpu.memory_space<vmem>>, vector<8x480xf32>
    %c10 = arith.constant 10 : index
    %c0_46 = arith.constant 0 : index
    %c0_47 = arith.constant 0 : index
    %52 = vector.load %arg2[%c10, %c0_46, %c0_47] : memref<25x8x8xf32, #tpu.memory_space<vmem>>, vector<1x8x8xf32>
    %53 = vector.shape_cast %52 : vector<1x8x8xf32> to vector<8x8xf32>
    %cst_48 = arith.constant dense<0.000000e+00> : vector<8x480xf32>
    %54 = tpu.matmul %53, %51, %cst_48 {dimension_numbers = #tpu.dot_dimension_numbers<[1], [0], [0], [1], [0, 0, 1, 1], [], []>} : vector<8x8xf32>, vector<8x480xf32>, vector<8x480xf32> -> vector<8x480xf32>
    %55 = arith.addf %50, %54 : vector<8x480xf32>
    %c0_49 = arith.constant 0 : index
    %c81 = arith.constant 81 : index
    %56 = vector.load %arg1[%c0_49, %c81] : memref<8x768xf32, #tpu.memory_space<vmem>>, vector<8x480xf32>
    %c11 = arith.constant 11 : index
    %c0_50 = arith.constant 0 : index
    %c0_51 = arith.constant 0 : index
    %57 = vector.load %arg2[%c11, %c0_50, %c0_51] : memref<25x8x8xf32, #tpu.memory_space<vmem>>, vector<1x8x8xf32>
    %58 = vector.shape_cast %57 : vector<1x8x8xf32> to vector<8x8xf32>
    %cst_52 = arith.constant dense<0.000000e+00> : vector<8x480xf32>
    %59 = tpu.matmul %58, %56, %cst_52 {dimension_numbers = #tpu.dot_dimension_numbers<[1], [0], [0], [1], [0, 0, 1, 1], [], []>} : vector<8x8xf32>, vector<8x480xf32>, vector<8x480xf32> -> vector<8x480xf32>
    %60 = arith.addf %55, %59 : vector<8x480xf32>
    %c0_53 = arith.constant 0 : index
    %c82 = arith.constant 82 : index
    %61 = vector.load %arg1[%c0_53, %c82] : memref<8x768xf32, #tpu.memory_space<vmem>>, vector<8x480xf32>
    %c12 = arith.constant 12 : index
    %c0_54 = arith.constant 0 : index
    %c0_55 = arith.constant 0 : index
    %62 = vector.load %arg2[%c12, %c0_54, %c0_55] : memref<25x8x8xf32, #tpu.memory_space<vmem>>, vector<1x8x8xf32>
    %63 = vector.shape_cast %62 : vector<1x8x8xf32> to vector<8x8xf32>
    %cst_56 = arith.constant dense<0.000000e+00> : vector<8x480xf32>
    %64 = tpu.matmul %63, %61, %cst_56 {dimension_numbers = #tpu.dot_dimension_numbers<[1], [0], [0], [1], [0, 0, 1, 1], [], []>} : vector<8x8xf32>, vector<8x480xf32>, vector<8x480xf32> -> vector<8x480xf32>
    %65 = arith.addf %60, %64 : vector<8x480xf32>
    %c0_57 = arith.constant 0 : index
    %c83 = arith.constant 83 : index
    %66 = vector.load %arg1[%c0_57, %c83] : memref<8x768xf32, #tpu.memory_space<vmem>>, vector<8x480xf32>
    %c13 = arith.constant 13 : index
    %c0_58 = arith.constant 0 : index
    %c0_59 = arith.constant 0 : index
    %67 = vector.load %arg2[%c13, %c0_58, %c0_59] : memref<25x8x8xf32, #tpu.memory_space<vmem>>, vector<1x8x8xf32>
    %68 = vector.shape_cast %67 : vector<1x8x8xf32> to vector<8x8xf32>
    %cst_60 = arith.constant dense<0.000000e+00> : vector<8x480xf32>
    %69 = tpu.matmul %68, %66, %cst_60 {dimension_numbers = #tpu.dot_dimension_numbers<[1], [0], [0], [1], [0, 0, 1, 1], [], []>} : vector<8x8xf32>, vector<8x480xf32>, vector<8x480xf32> -> vector<8x480xf32>
    %70 = arith.addf %65, %69 : vector<8x480xf32>
    %c0_61 = arith.constant 0 : index
    %c84 = arith.constant 84 : index
    %71 = vector.load %arg1[%c0_61, %c84] : memref<8x768xf32, #tpu.memory_space<vmem>>, vector<8x480xf32>
    %c14 = arith.constant 14 : index
    %c0_62 = arith.constant 0 : index
    %c0_63 = arith.constant 0 : index
    %72 = vector.load %arg2[%c14, %c0_62, %c0_63] : memref<25x8x8xf32, #tpu.memory_space<vmem>>, vector<1x8x8xf32>
    %73 = vector.shape_cast %72 : vector<1x8x8xf32> to vector<8x8xf32>
    %cst_64 = arith.constant dense<0.000000e+00> : vector<8x480xf32>
    %74 = tpu.matmul %73, %71, %cst_64 {dimension_numbers = #tpu.dot_dimension_numbers<[1], [0], [0], [1], [0, 0, 1, 1], [], []>} : vector<8x8xf32>, vector<8x480xf32>, vector<8x480xf32> -> vector<8x480xf32>
    %75 = arith.addf %70, %74 : vector<8x480xf32>
    %c0_65 = arith.constant 0 : index
    %c120 = arith.constant 120 : index
    %76 = vector.load %arg1[%c0_65, %c120] : memref<8x768xf32, #tpu.memory_space<vmem>>, vector<8x480xf32>
    %c15 = arith.constant 15 : index
    %c0_66 = arith.constant 0 : index
    %c0_67 = arith.constant 0 : index
    %77 = vector.load %arg2[%c15, %c0_66, %c0_67] : memref<25x8x8xf32, #tpu.memory_space<vmem>>, vector<1x8x8xf32>
    %78 = vector.shape_cast %77 : vector<1x8x8xf32> to vector<8x8xf32>
    %cst_68 = arith.constant dense<0.000000e+00> : vector<8x480xf32>
    %79 = tpu.matmul %78, %76, %cst_68 {dimension_numbers = #tpu.dot_dimension_numbers<[1], [0], [0], [1], [0, 0, 1, 1], [], []>} : vector<8x8xf32>, vector<8x480xf32>, vector<8x480xf32> -> vector<8x480xf32>
    %80 = arith.addf %75, %79 : vector<8x480xf32>
    %c0_69 = arith.constant 0 : index
    %c121 = arith.constant 121 : index
    %81 = vector.load %arg1[%c0_69, %c121] : memref<8x768xf32, #tpu.memory_space<vmem>>, vector<8x480xf32>
    %c16 = arith.constant 16 : index
    %c0_70 = arith.constant 0 : index
    %c0_71 = arith.constant 0 : index
    %82 = vector.load %arg2[%c16, %c0_70, %c0_71] : memref<25x8x8xf32, #tpu.memory_space<vmem>>, vector<1x8x8xf32>
    %83 = vector.shape_cast %82 : vector<1x8x8xf32> to vector<8x8xf32>
    %cst_72 = arith.constant dense<0.000000e+00> : vector<8x480xf32>
    %84 = tpu.matmul %83, %81, %cst_72 {dimension_numbers = #tpu.dot_dimension_numbers<[1], [0], [0], [1], [0, 0, 1, 1], [], []>} : vector<8x8xf32>, vector<8x480xf32>, vector<8x480xf32> -> vector<8x480xf32>
    %85 = arith.addf %80, %84 : vector<8x480xf32>
    %c0_73 = arith.constant 0 : index
    %c122 = arith.constant 122 : index
    %86 = vector.load %arg1[%c0_73, %c122] : memref<8x768xf32, #tpu.memory_space<vmem>>, vector<8x480xf32>
    %c17 = arith.constant 17 : index
    %c0_74 = arith.constant 0 : index
    %c0_75 = arith.constant 0 : index
    %87 = vector.load %arg2[%c17, %c0_74, %c0_75] : memref<25x8x8xf32, #tpu.memory_space<vmem>>, vector<1x8x8xf32>
    %88 = vector.shape_cast %87 : vector<1x8x8xf32> to vector<8x8xf32>
    %cst_76 = arith.constant dense<0.000000e+00> : vector<8x480xf32>
    %89 = tpu.matmul %88, %86, %cst_76 {dimension_numbers = #tpu.dot_dimension_numbers<[1], [0], [0], [1], [0, 0, 1, 1], [], []>} : vector<8x8xf32>, vector<8x480xf32>, vector<8x480xf32> -> vector<8x480xf32>
    %90 = arith.addf %85, %89 : vector<8x480xf32>
    %c0_77 = arith.constant 0 : index
    %c123 = arith.constant 123 : index
    %91 = vector.load %arg1[%c0_77, %c123] : memref<8x768xf32, #tpu.memory_space<vmem>>, vector<8x480xf32>
    %c18 = arith.constant 18 : index
    %c0_78 = arith.constant 0 : index
    %c0_79 = arith.constant 0 : index
    %92 = vector.load %arg2[%c18, %c0_78, %c0_79] : memref<25x8x8xf32, #tpu.memory_space<vmem>>, vector<1x8x8xf32>
    %93 = vector.shape_cast %92 : vector<1x8x8xf32> to vector<8x8xf32>
    %cst_80 = arith.constant dense<0.000000e+00> : vector<8x480xf32>
    %94 = tpu.matmul %93, %91, %cst_80 {dimension_numbers = #tpu.dot_dimension_numbers<[1], [0], [0], [1], [0, 0, 1, 1], [], []>} : vector<8x8xf32>, vector<8x480xf32>, vector<8x480xf32> -> vector<8x480xf32>
    %95 = arith.addf %90, %94 : vector<8x480xf32>
    %c0_81 = arith.constant 0 : index
    %c124 = arith.constant 124 : index
    %96 = vector.load %arg1[%c0_81, %c124] : memref<8x768xf32, #tpu.memory_space<vmem>>, vector<8x480xf32>
    %c19 = arith.constant 19 : index
    %c0_82 = arith.constant 0 : index
    %c0_83 = arith.constant 0 : index
    %97 = vector.load %arg2[%c19, %c0_82, %c0_83] : memref<25x8x8xf32, #tpu.memory_space<vmem>>, vector<1x8x8xf32>
    %98 = vector.shape_cast %97 : vector<1x8x8xf32> to vector<8x8xf32>
    %cst_84 = arith.constant dense<0.000000e+00> : vector<8x480xf32>
    %99 = tpu.matmul %98, %96, %cst_84 {dimension_numbers = #tpu.dot_dimension_numbers<[1], [0], [0], [1], [0, 0, 1, 1], [], []>} : vector<8x8xf32>, vector<8x480xf32>, vector<8x480xf32> -> vector<8x480xf32>
    %100 = arith.addf %95, %99 : vector<8x480xf32>
    %c0_85 = arith.constant 0 : index
    %c160 = arith.constant 160 : index
    %101 = vector.load %arg1[%c0_85, %c160] : memref<8x768xf32, #tpu.memory_space<vmem>>, vector<8x480xf32>
    %c20 = arith.constant 20 : index
    %c0_86 = arith.constant 0 : index
    %c0_87 = arith.constant 0 : index
    %102 = vector.load %arg2[%c20, %c0_86, %c0_87] : memref<25x8x8xf32, #tpu.memory_space<vmem>>, vector<1x8x8xf32>
    %103 = vector.shape_cast %102 : vector<1x8x8xf32> to vector<8x8xf32>
    %cst_88 = arith.constant dense<0.000000e+00> : vector<8x480xf32>
    %104 = tpu.matmul %103, %101, %cst_88 {dimension_numbers = #tpu.dot_dimension_numbers<[1], [0], [0], [1], [0, 0, 1, 1], [], []>} : vector<8x8xf32>, vector<8x480xf32>, vector<8x480xf32> -> vector<8x480xf32>
    %105 = arith.addf %100, %104 : vector<8x480xf32>
    %c0_89 = arith.constant 0 : index
    %c161 = arith.constant 161 : index
    %106 = vector.load %arg1[%c0_89, %c161] : memref<8x768xf32, #tpu.memory_space<vmem>>, vector<8x480xf32>
    %c21 = arith.constant 21 : index
    %c0_90 = arith.constant 0 : index
    %c0_91 = arith.constant 0 : index
    %107 = vector.load %arg2[%c21, %c0_90, %c0_91] : memref<25x8x8xf32, #tpu.memory_space<vmem>>, vector<1x8x8xf32>
    %108 = vector.shape_cast %107 : vector<1x8x8xf32> to vector<8x8xf32>
    %cst_92 = arith.constant dense<0.000000e+00> : vector<8x480xf32>
    %109 = tpu.matmul %108, %106, %cst_92 {dimension_numbers = #tpu.dot_dimension_numbers<[1], [0], [0], [1], [0, 0, 1, 1], [], []>} : vector<8x8xf32>, vector<8x480xf32>, vector<8x480xf32> -> vector<8x480xf32>
    %110 = arith.addf %105, %109 : vector<8x480xf32>
    %c0_93 = arith.constant 0 : index
    %c162 = arith.constant 162 : index
    %111 = vector.load %arg1[%c0_93, %c162] : memref<8x768xf32, #tpu.memory_space<vmem>>, vector<8x480xf32>
    %c22 = arith.constant 22 : index
    %c0_94 = arith.constant 0 : index
    %c0_95 = arith.constant 0 : index
    %112 = vector.load %arg2[%c22, %c0_94, %c0_95] : memref<25x8x8xf32, #tpu.memory_space<vmem>>, vector<1x8x8xf32>
    %113 = vector.shape_cast %112 : vector<1x8x8xf32> to vector<8x8xf32>
    %cst_96 = arith.constant dense<0.000000e+00> : vector<8x480xf32>
    %114 = tpu.matmul %113, %111, %cst_96 {dimension_numbers = #tpu.dot_dimension_numbers<[1], [0], [0], [1], [0, 0, 1, 1], [], []>} : vector<8x8xf32>, vector<8x480xf32>, vector<8x480xf32> -> vector<8x480xf32>
    %115 = arith.addf %110, %114 : vector<8x480xf32>
    %c0_97 = arith.constant 0 : index
    %c163 = arith.constant 163 : index
    %116 = vector.load %arg1[%c0_97, %c163] : memref<8x768xf32, #tpu.memory_space<vmem>>, vector<8x480xf32>
    %c23 = arith.constant 23 : index
    %c0_98 = arith.constant 0 : index
    %c0_99 = arith.constant 0 : index
    %117 = vector.load %arg2[%c23, %c0_98, %c0_99] : memref<25x8x8xf32, #tpu.memory_space<vmem>>, vector<1x8x8xf32>
    %118 = vector.shape_cast %117 : vector<1x8x8xf32> to vector<8x8xf32>
    %cst_100 = arith.constant dense<0.000000e+00> : vector<8x480xf32>
    %119 = tpu.matmul %118, %116, %cst_100 {dimension_numbers = #tpu.dot_dimension_numbers<[1], [0], [0], [1], [0, 0, 1, 1], [], []>} : vector<8x8xf32>, vector<8x480xf32>, vector<8x480xf32> -> vector<8x480xf32>
    %120 = arith.addf %115, %119 : vector<8x480xf32>
    %c0_101 = arith.constant 0 : index
    %c164 = arith.constant 164 : index
    %121 = vector.load %arg1[%c0_101, %c164] : memref<8x768xf32, #tpu.memory_space<vmem>>, vector<8x480xf32>
    %c24 = arith.constant 24 : index
    %c0_102 = arith.constant 0 : index
    %c0_103 = arith.constant 0 : index
    %122 = vector.load %arg2[%c24, %c0_102, %c0_103] : memref<25x8x8xf32, #tpu.memory_space<vmem>>, vector<1x8x8xf32>
    %123 = vector.shape_cast %122 : vector<1x8x8xf32> to vector<8x8xf32>
    %cst_104 = arith.constant dense<0.000000e+00> : vector<8x480xf32>
    %124 = tpu.matmul %123, %121, %cst_104 {dimension_numbers = #tpu.dot_dimension_numbers<[1], [0], [0], [1], [0, 0, 1, 1], [], []>} : vector<8x8xf32>, vector<8x480xf32>, vector<8x480xf32> -> vector<8x480xf32>
    %125 = arith.addf %120, %124 : vector<8x480xf32>
    %126 = tpu.iota {dimensions = array<i32: 1>} : vector<8x480xi32>
    %c20_i32 = arith.constant 20 : i32
    %c0_i32 = arith.constant 0 : i32
    %127 = arith.cmpi eq, %c20_i32, %c0_i32 : i32
    %c1_i32 = arith.constant 1 : i32
    %128 = arith.select %127, %c1_i32, %c20_i32 : i32
    %129 = vector.broadcast %128 : i32 to vector<8x480xi32>
    %130 = arith.remsi %126, %129 : vector<8x480xi32>
    %c0_i32_105 = arith.constant 0 : i32
    %131 = vector.broadcast %c0_i32_105 : i32 to vector<8x480xi32>
    %132 = arith.cmpi ne, %130, %131 : vector<8x480xi32>
    %c0_i32_106 = arith.constant 0 : i32
    %133 = vector.broadcast %c0_i32_106 : i32 to vector<8x480xi32>
    %134 = arith.cmpi slt, %130, %133 : vector<8x480xi32>
    %c0_i32_107 = arith.constant 0 : i32
    %135 = arith.cmpi slt, %128, %c0_i32_107 : i32
    %136 = vector.broadcast %135 : i1 to vector<8x480xi1>
    %137 = vector.broadcast %136 : vector<8x480xi1> to vector<8x480xi1>
    %138 = arith.xori %134, %137 : vector<8x480xi1>
    %139 = arith.andi %138, %132 : vector<8x480xi1>
    %140 = vector.broadcast %128 : i32 to vector<8x480xi32>
    %141 = arith.addi %130, %140 : vector<8x480xi32>
    %142 = arith.select %139, %141, %130 : vector<8x480xi1>, vector<8x480xi32>
    %c16_i32 = arith.constant 16 : i32
    %143 = vector.broadcast %c16_i32 : i32 to vector<8x480xi32>
    %144 = arith.cmpi slt, %142, %143 : vector<8x480xi32>
    %cst_108 = arith.constant 0.000000e+00 : f32
    %145 = vector.broadcast %cst_108 : f32 to vector<8x480xf32>
    %146 = arith.select %144, %125, %145 : vector<8x480xi1>, vector<8x480xf32>
    %cst_109 = arith.constant dense<0.000000e+00> : vector<8xf32>
    %147 = vector.multi_reduction <add>, %146, %cst_109 [1] : vector<8x480xf32> to vector<8xf32>
    %148 = vector.shape_cast %147 : vector<8xf32> to vector<8x1xf32>
    %cst_110 = arith.constant 0.00260416674 : f32
    %149 = vector.broadcast %cst_110 : f32 to vector<8x1xf32>
    %150 = arith.mulf %148, %149 : vector<8x1xf32>
    %151 = vector.broadcast %150 : vector<8x1xf32> to vector<8x480xf32>
    %152 = arith.subf %146, %151 : vector<8x480xf32>
    %153 = arith.mulf %152, %152 : vector<8x480xf32>
    %cst_111 = arith.constant 0.000000e+00 : f32
    %154 = vector.broadcast %cst_111 : f32 to vector<8x480xf32>
    %155 = arith.select %144, %153, %154 : vector<8x480xi1>, vector<8x480xf32>
    %cst_112 = arith.constant dense<0.000000e+00> : vector<8xf32>
    %156 = vector.multi_reduction <add>, %155, %cst_112 [1] : vector<8x480xf32> to vector<8xf32>
    %157 = vector.shape_cast %156 : vector<8xf32> to vector<8x1xf32>
    %cst_113 = arith.constant 0.00260416674 : f32
    %158 = vector.broadcast %cst_113 : f32 to vector<8x1xf32>
    %159 = arith.mulf %157, %158 : vector<8x1xf32>
    %c0_114 = arith.constant 0 : index
    %c0_115 = arith.constant 0 : index
    %160 = vector.load %arg3[%c0_114, %c0_115] : memref<8x2xf32, #tpu.memory_space<vmem>>, vector<8x1xf32>
    %cst_116 = arith.constant 9.99999974E-6 : f32
    %161 = vector.broadcast %cst_116 : f32 to vector<8x1xf32>
    %162 = arith.addf %159, %161 : vector<8x1xf32>
    %163 = math.rsqrt %162 : vector<8x1xf32>
    %164 = arith.mulf %160, %163 : vector<8x1xf32>
    %165 = vector.broadcast %164 : vector<8x1xf32> to vector<8x480xf32>
    %166 = arith.mulf %152, %165 : vector<8x480xf32>
    %c0_117 = arith.constant 0 : index
    %c1_118 = arith.constant 1 : index
    %167 = vector.load %arg3[%c0_117, %c1_118] : memref<8x2xf32, #tpu.memory_space<vmem>>, vector<8x1xf32>
    %168 = vector.broadcast %167 : vector<8x1xf32> to vector<8x480xf32>
    %169 = arith.addf %166, %168 : vector<8x480xf32>
    %cst_119 = arith.constant 0.000000e+00 : f32
    %170 = vector.broadcast %cst_119 : f32 to vector<8x480xf32>
    %171 = arith.maximumf %169, %170 : vector<8x480xf32>
    %172 = vector.extract_strided_slice %171 {offsets = [0, 0], sizes = [8, 40], strides = [1, 1]} : vector<8x480xf32> to vector<8x40xf32>
    %173 = vector.extract_strided_slice %171 {offsets = [0, 40], sizes = [8, 40], strides = [1, 1]} : vector<8x480xf32> to vector<8x40xf32>
    %174 = arith.maximumf %172, %173 : vector<8x40xf32>
    %175 = vector.extract_strided_slice %171 {offsets = [0, 80], sizes = [8, 40], strides = [1, 1]} : vector<8x480xf32> to vector<8x40xf32>
    %176 = arith.maximumf %174, %175 : vector<8x40xf32>
    %177 = vector.extract_strided_slice %171 {offsets = [0, 120], sizes = [8, 40], strides = [1, 1]} : vector<8x480xf32> to vector<8x40xf32>
    %178 = arith.maximumf %176, %177 : vector<8x40xf32>
    %179 = vector.extract_strided_slice %171 {offsets = [0, 160], sizes = [8, 40], strides = [1, 1]} : vector<8x480xf32> to vector<8x40xf32>
    %180 = arith.maximumf %178, %179 : vector<8x40xf32>
    %181 = vector.extract_strided_slice %171 {offsets = [0, 200], sizes = [8, 40], strides = [1, 1]} : vector<8x480xf32> to vector<8x40xf32>
    %182 = arith.maximumf %180, %181 : vector<8x40xf32>
    %183 = vector.extract_strided_slice %171 {offsets = [0, 240], sizes = [8, 40], strides = [1, 1]} : vector<8x480xf32> to vector<8x40xf32>
    %184 = arith.maximumf %182, %183 : vector<8x40xf32>
    %185 = vector.extract_strided_slice %171 {offsets = [0, 280], sizes = [8, 40], strides = [1, 1]} : vector<8x480xf32> to vector<8x40xf32>
    %186 = arith.maximumf %184, %185 : vector<8x40xf32>
    %187 = vector.extract_strided_slice %171 {offsets = [0, 320], sizes = [8, 40], strides = [1, 1]} : vector<8x480xf32> to vector<8x40xf32>
    %188 = arith.maximumf %186, %187 : vector<8x40xf32>
    %189 = vector.extract_strided_slice %171 {offsets = [0, 360], sizes = [8, 40], strides = [1, 1]} : vector<8x480xf32> to vector<8x40xf32>
    %190 = arith.maximumf %188, %189 : vector<8x40xf32>
    %191 = vector.extract_strided_slice %171 {offsets = [0, 400], sizes = [8, 40], strides = [1, 1]} : vector<8x480xf32> to vector<8x40xf32>
    %192 = arith.maximumf %190, %191 : vector<8x40xf32>
    %193 = vector.extract_strided_slice %171 {offsets = [0, 440], sizes = [8, 40], strides = [1, 1]} : vector<8x480xf32> to vector<8x40xf32>
    %194 = arith.maximumf %192, %193 : vector<8x40xf32>
    %c0_120 = arith.constant 0 : index
    %c0_121 = arith.constant 0 : index
    %195 = vector.load %arg4[%c0_120, %c0_121] : memref<8x40xf32, #tpu.memory_space<vmem>>, vector<8x40xf32>
    tpu.vector_store %arg4[%c0_120, %c0_121], %194 {strides = array<i32>} : memref<8x40xf32, #tpu.memory_space<vmem>>, vector<8x40xf32>,
    return
  }
  func.func @transform_0(%arg0: i32) -> (i32, i32) {
    %c0_i32 = arith.constant 0 : i32
    %c0_i32_0 = arith.constant 0 : i32
    %c0_i32_1 = arith.constant 0 : i32
    return %c0_i32, %c0_i32_0 : i32, i32
  }
  func.func @transform_1(%arg0: i32) -> (i32, i32, i32) {
    %c0_i32 = arith.constant 0 : i32
    %c0_i32_0 = arith.constant 0 : i32
    %c0_i32_1 = arith.constant 0 : i32
    %c0_i32_2 = arith.constant 0 : i32
    return %c0_i32, %c0_i32_0, %c0_i32_1 : i32, i32, i32
  }
  func.func @transform_2(%arg0: i32) -> (i32, i32) {
    %c0_i32 = arith.constant 0 : i32
    %c0_i32_0 = arith.constant 0 : i32
    %c0_i32_1 = arith.constant 0 : i32
    return %c0_i32, %c0_i32_0 : i32, i32
  }
  func.func @transform_3(%arg0: i32) -> (i32, i32) {
    %c0_i32 = arith.constant 0 : i32
    %c0_i32_0 = arith.constant 0 : i32
    %c0_i32_1 = arith.constant 0 : i32
    return %c0_i32, %c0_i32_0 : i32, i32
  }
}

</mosaic_0001>

<llo_original>
// kernel: conv_v_forward.1
$region0: #{conv_v_forward.1}
  #allocation0 [shape = 'u32[]', space=smem, size = 0x4, offset = 0x4, fixed_abs, tag = 'smem constant byte address 0x4 - core index']
  #allocation1 [shape = 'u32[144,128]{1,0:T(1,128)}', space=vmem, size = 0x12000, scoped, tag = 'internal scratch']
  %s0 = inlined_call_operand.vmem [shape: f32[8,768], index: 0, kind: input, shape index: {}]
  %s1 = inlined_call_operand.vmem [shape: f32[25,8,8], index: 1, kind: input, shape index: {}]
  %s2 = inlined_call_operand.vmem [shape: f32[8,2], index: 2, kind: input, shape index: {}]
  %s3 = inlined_call_operand.vmem [shape: f32[8,40], index: 3, kind: output, shape index: {}]
  %s4 = sld [smem:[#allocation0]]
  $region22: #{conv_v_forward.1} parent=0
    _
  %s6 = ssub.s32 1, %s4
  %s7 = scalar_select 0, %s6, %s4
  // Predicated region
  $region2: #{conv_v_forward.1} parent=0 // pred_check
    _
  $region3: #{conv_v_forward.1} parent=0 // pred_check_branch
    %9 = sbr.rel (0) target = $region5
  $region4: #{conv_v_forward.1} parent=0 // pred_region
    _
  $region5: #{conv_v_forward.1} parent=0 // pred_fallthru
    _
  // Predicated region
  $region6: #{conv_v_forward.1} parent=0 // pred_check
    _
  $region7: #{conv_v_forward.1} parent=0 // pred_check_branch
    %11 = sbr.rel (0) target = $region9
  $region8: #{conv_v_forward.1} parent=0 // pred_region
    _
  $region9: #{conv_v_forward.1} parent=0 // pred_fallthru
    _
  // Predicated region
  $region10: #{conv_v_forward.1} parent=0 // pred_check
    _
  $region11: #{conv_v_forward.1} parent=0 // pred_check_branch
    %13 = sbr.rel (0) target = $region13
  $region12: #{conv_v_forward.1} parent=0 // pred_region
    _
  $region13: #{conv_v_forward.1} parent=0 // pred_fallthru
    _
  %v14 = vld [vmem:[%s0] sm:$0xff]
  %v15 = vld [vmem:[%s0 + $0x8] sm:$0xff]
  %v16 = vld [vmem:[%s0 + $0x10] sm:$0xff]
  %v17 = vld [vmem:[%s0 + $0x18] sm:$0xff]
  %v18 = vld [vmem:[%s1] sm:$0xff]
  %s19 = scalar_lea.vmem %s1, 8
  %v20 = vld [vmem:[%s19] sm:$0xff]
  %25 = vrot.lane.b32.xlu0 %v14, 127
  %v26 = vpop.permute.xlu0 %25
  %27 = vrot.lane.b32.xlu0 %v15, 127
  %v28 = vpop.permute.xlu0 %27
  %29 = vrot.lane.b32.xlu0 %v16, 127
  %v30 = vpop.permute.xlu0 %29
  %31 = vrot.lane.b32.xlu0 %v17, 127
  %v32 = vpop.permute.xlu0 %31
  %vm33 = vcmask 1039360
  %v34 = vsel %vm33, %v26, %v28
  %v35 = vsel %vm33, %v28, %v30
  %v36 = vsel %vm33, %v30, %v32
  %vm41 = vcmask 64512
  %v43 = vsel %vm41, %v20, 0
  %45 = vmatprep.subr.mxu0 %v35
  %46 = vmatpush1.msra.mxu0 %v34
  %47 = vmatprep.subr.mxu0 0.0
  %48 = vmatpush1.msra.mxu0 0.0
  %49 = vmatprep.subr.mxu0 0.0
  %50 = vmatpush1.msra.mxu0 0.0
  %51 = vmatprep.subr.mxu0 0.0
  %52 = vmatpush1.msra.mxu0 0.0
  %53 = vmatprep.subr.mxu0 0.0
  %54 = vmatpush1.msra.mxu0 0.0
  %55 = vmatprep.subr.mxu0 0.0
  %56 = vmatpush1.msra.mxu0 0.0
  %57 = vmatprep.subr.mxu0 0.0
  %58 = vmatpush1.msra.mxu0 0.0
  %59 = vmatprep.subr.mxu0 0.0
  %60 = vmatpush1.msra.mxu0 0.0
  %61 = vmatprep.subr.mxu0 0.0
  %62 = vmatpush1.msra.mxu0 0.0
  %63 = vmatprep.subr.mxu0 0.0
  %64 = vmatpush1.msra.mxu0 0.0
  %65 = vmatprep.subr.mxu0 0.0
  %66 = vmatpush1.msra.mxu0 0.0
  %67 = vmatprep.subr.mxu0 0.0
  %68 = vmatpush1.msra.mxu0 0.0
  %69 = vmatprep.subr.mxu0 0.0
  %70 = vmatpush1.msra.mxu0 0.0
  %71 = vmatprep.subr.mxu0 0.0
  %72 = vmatpush1.msra.mxu0 0.0
  %73 = vmatprep.subr.mxu0 0.0
  %74 = vmatpush1.msra.mxu0 0.0
  %75 = vmatprep.subr.mxu0 0.0
  %76 = vmatpush1.msra.mxu0 0.0
  %77 = vmatprep.subr.mxu0 0.0
  %78 = vmatpush1.msra.mxu0 0.0
  %79 = vmatprep.subr.mxu0 0.0
  %80 = vmatpush1.msra.mxu0 0.0
  %81 = vmatprep.subr.mxu0 0.0
  %82 = vmatpush1.msra.mxu0 0.0
  %83 = vmatprep.subr.mxu0 0.0
  %84 = vmatpush1.msra.mxu0 0.0
  %85 = vmatprep.subr.mxu0 0.0
  %86 = vmatpush1.msra.mxu0 0.0
  %87 = vmatprep.subr.mxu0 0.0
  %88 = vmatpush1.msra.mxu0 0.0
  %89 = vmatprep.subr.mxu0 0.0
  %90 = vmatpush1.msra.mxu0 0.0
  %91 = vmatprep.subr.mxu0 0.0
  %92 = vmatpush1.msra.mxu0 0.0
  %93 = vmatprep.subr.mxu0 0.0
  %94 = vmatpush1.msra.mxu0 0.0
  %95 = vmatprep.subr.mxu0 0.0
  %96 = vmatpush1.msra.mxu0 0.0
  %97 = vmatprep.subr.mxu0 0.0
  %98 = vmatpush1.msra.mxu0 0.0
  %99 = vmatprep.subr.mxu0 0.0
  %100 = vmatpush1.msra.mxu0 0.0
  %101 = vmatprep.subr.mxu0 0.0
  %102 = vmatpush1.msra.mxu0 0.0
  %103 = vmatprep.subr.mxu0 0.0
  %104 = vmatpush1.msra.mxu0 0.0
  %105 = vmatprep.subr.mxu0 0.0
  %106 = vmatpush1.msra.mxu0 0.0
  %107 = vmatprep.subr.mxu0 0.0
  %108 = vmatpush1.msra.mxu0 0.0
  %109 = vmatprep.mubr.f32.mxu0 0.0
  %110 = vmatmul.mubr.f32.gmra.mrb[0].mxu0 %v43
  %v111 = vpop.f32.mrb[0].mxu0
  %v112 = vadd.f32 0.0, %v111
  %v113 = vpop.f32.mrb[0].mxu0
  %v114 = vadd.f32 0.0, %v113
  %115 = vdwg.mxu0
  %116 = vmatprep.subr.mxu0 %v32
  %117 = vmatpush1.msra.mxu0 %v36
  %118 = vmatprep.subr.mxu0 0.0
  %119 = vmatpush1.msra.mxu0 0.0
  %120 = vmatprep.subr.mxu0 0.0
  %121 = vmatpush1.msra.mxu0 0.0
  %122 = vmatprep.subr.mxu0 0.0
  %123 = vmatpush1.msra.mxu0 0.0
  %124 = vmatprep.subr.mxu0 0.0
  %125 = vmatpush1.msra.mxu0 0.0
  %126 = vmatprep.subr.mxu0 0.0
  %127 = vmatpush1.msra.mxu0 0.0
  %128 = vmatprep.subr.mxu0 0.0
  %129 = vmatpush1.msra.mxu0 0.0
  %130 = vmatprep.subr.mxu0 0.0
  %131 = vmatpush1.msra.mxu0 0.0
  %132 = vmatprep.subr.mxu0 0.0
  %133 = vmatpush1.msra.mxu0 0.0
  %134 = vmatprep.subr.mxu0 0.0
  %135 = vmatpush1.msra.mxu0 0.0
  %136 = vmatprep.subr.mxu0 0.0
  %137 = vmatpush1.msra.mxu0 0.0
  %138 = vmatprep.subr.mxu0 0.0
  %139 = vmatpush1.msra.mxu0 0.0
  %140 = vmatprep.subr.mxu0 0.0
  %141 = vmatpush1.msra.mxu0 0.0
  %142 = vmatprep.subr.mxu0 0.0
  %143 = vmatpush1.msra.mxu0 0.0
  %144 = vmatprep.subr.mxu0 0.0
  %145 = vmatpush1.msra.mxu0 0.0
  %146 = vmatprep.subr.mxu0 0.0
  %147 = vmatpush1.msra.mxu0 0.0
  %148 = vmatprep.subr.mxu0 0.0
  %149 = vmatpush1.msra.mxu0 0.0
  %150 = vmatprep.subr.mxu0 0.0
  %151 = vmatpush1.msra.mxu0 0.0
  %152 = vmatprep.subr.mxu0 0.0
  %153 = vmatpush1.msra.mxu0 0.0
  %154 = vmatprep.subr.mxu0 0.0
  %155 = vmatpush1.msra.mxu0 0.0
  %156 = vmatprep.subr.mxu0 0.0
  %157 = vmatpush1.msra.mxu0 0.0
  %158 = vmatprep.subr.mxu0 0.0
  %159 = vmatpush1.msra.mxu0 0.0
  %160 = vmatprep.subr.mxu0 0.0
  %161 = vmatpush1.msra.mxu0 0.0
  %162 = vmatprep.subr.mxu0 0.0
  %163 = vmatpush1.msra.mxu0 0.0
  %164 = vmatprep.subr.mxu0 0.0
  %165 = vmatpush1.msra.mxu0 0.0
  %166 = vmatprep.subr.mxu0 0.0
  %167 = vmatpush1.msra.mxu0 0.0
  %168 = vmatprep.subr.mxu0 0.0
  %169 = vmatpush1.msra.mxu0 0.0
  %170 = vmatprep.subr.mxu0 0.0
  %171 = vmatpush1.msra.mxu0 0.0
  %172 = vmatprep.subr.mxu0 0.0
  %173 = vmatpush1.msra.mxu0 0.0
  %174 = vmatprep.subr.mxu0 0.0
  %175 = vmatpush1.msra.mxu0 0.0
  %176 = vmatprep.subr.mxu0 0.0
  %177 = vmatpush1.msra.mxu0 0.0
  %178 = vmatprep.subr.mxu0 0.0
  %179 = vmatpush1.msra.mxu0 0.0
  %180 = vmatprep.mubr.f32.mxu0 0.0
  %181 = vmatmul.mubr.f32.gmra.mrb[0].mxu0 %v43
  %v182 = vpop.f32.mrb[0].mxu0
  %v183 = vadd.f32 0.0, %v182
  %v184 = vpop.f32.mrb[0].mxu0
  %v185 = vadd.f32 0.0, %v184
  %186 = vdwg.mxu0
  %v188 = vsel %vm41, %v18, 0
  %190 = vmatprep.subr.mxu0 %v15
  %191 = vmatpush1.msra.mxu0 %v14
  %192 = vmatprep.subr.mxu0 0.0
  %193 = vmatpush1.msra.mxu0 0.0
  %194 = vmatprep.subr.mxu0 0.0
  %195 = vmatpush1.msra.mxu0 0.0
  %196 = vmatprep.subr.mxu0 0.0
  %197 = vmatpush1.msra.mxu0 0.0
  %198 = vmatprep.subr.mxu0 0.0
  %199 = vmatpush1.msra.mxu0 0.0
  %200 = vmatprep.subr.mxu0 0.0
  %201 = vmatpush1.msra.mxu0 0.0
  %202 = vmatprep.subr.mxu0 0.0
  %203 = vmatpush1.msra.mxu0 0.0
  %204 = vmatprep.subr.mxu0 0.0
  %205 = vmatpush1.msra.mxu0 0.0
  %206 = vmatprep.subr.mxu0 0.0
  %207 = vmatpush1.msra.mxu0 0.0
  %208 = vmatprep.subr.mxu0 0.0
  %209 = vmatpush1.msra.mxu0 0.0
  %210 = vmatprep.subr.mxu0 0.0
  %211 = vmatpush1.msra.mxu0 0.0
  %212 = vmatprep.subr.mxu0 0.0
  %213 = vmatpush1.msra.mxu0 0.0
  %214 = vmatprep.subr.mxu0 0.0
  %215 = vmatpush1.msra.mxu0 0.0
  %216 = vmatprep.subr.mxu0 0.0
  %217 = vmatpush1.msra.mxu0 0.0
  %218 = vmatprep.subr.mxu0 0.0
  %219 = vmatpush1.msra.mxu0 0.0
  %220 = vmatprep.subr.mxu0 0.0
  %221 = vmatpush1.msra.mxu0 0.0
  %222 = vmatprep.subr.mxu0 0.0
  %223 = vmatpush1.msra.mxu0 0.0
  %224 = vmatprep.subr.mxu0 0.0
  %225 = vmatpush1.msra.mxu0 0.0
  %226 = vmatprep.subr.mxu0 0.0
  %227 = vmatpush1.msra.mxu0 0.0
  %228 = vmatprep.subr.mxu0 0.0
  %229 = vmatpush1.msra.mxu0 0.0
  %230 = vmatprep.subr.mxu0 0.0
  %231 = vmatpush1.msra.mxu0 0.0
  %232 = vmatprep.subr.mxu0 0.0
  %233 = vmatpush1.msra.mxu0 0.0
  %234 = vmatprep.subr.mxu0 0.0
  %235 = vmatpush1.msra.mxu0 0.0
  %236 = vmatprep.subr.mxu0 0.0
  %237 = vmatpush1.msra.mxu0 0.0
  %238 = vmatprep.subr.mxu0 0.0
  %239 = vmatpush1.msra.mxu0 0.0
  %240 = vmatprep.subr.mxu0 0.0
  %241 = vmatpush1.msra.mxu0 0.0
  %242 = vmatprep.subr.mxu0 0.0
  %243 = vmatpush1.msra.mxu0 0.0
  %244 = vmatprep.subr.mxu0 0.0
  %245 = vmatpush1.msra.mxu0 0.0
  %246 = vmatprep.subr.mxu0 0.0
  %247 = vmatpush1.msra.mxu0 0.0
  %248 = vmatprep.subr.mxu0 0.0
  %249 = vmatpush1.msra.mxu0 0.0
  %250 = vmatprep.subr.mxu0 0.0
  %251 = vmatpush1.msra.mxu0 0.0
  %252 = vmatprep.subr.mxu0 0.0
  %253 = vmatpush1.msra.mxu0 0.0
  %254 = vmatprep.mubr.f32.mxu0 0.0
  %255 = vmatmul.mubr.f32.gmra.mrb[0].mxu0 %v188
  %v256 = vpop.f32.mrb[0].mxu0
  %v257 = vadd.f32 %v112, %v256
  %v258 = vpop.f32.mrb[0].mxu0
  %v259 = vadd.f32 %v114, %v258
  %260 = vdwg.mxu0
  %261 = vmatprep.subr.mxu0 %v17
  %262 = vmatpush1.msra.mxu0 %v16
  %263 = vmatprep.subr.mxu0 0.0
  %264 = vmatpush1.msra.mxu0 0.0
  %265 = vmatprep.subr.mxu0 0.0
  %266 = vmatpush1.msra.mxu0 0.0
  %267 = vmatprep.subr.mxu0 0.0
  %268 = vmatpush1.msra.mxu0 0.0
  %269 = vmatprep.subr.mxu0 0.0
  %270 = vmatpush1.msra.mxu0 0.0
  %271 = vmatprep.subr.mxu0 0.0
  %272 = vmatpush1.msra.mxu0 0.0
  %273 = vmatprep.subr.mxu0 0.0
  %274 = vmatpush1.msra.mxu0 0.0
  %275 = vmatprep.subr.mxu0 0.0
  %276 = vmatpush1.msra.mxu0 0.0
  %277 = vmatprep.subr.mxu0 0.0
  %278 = vmatpush1.msra.mxu0 0.0
  %279 = vmatprep.subr.mxu0 0.0
  %280 = vmatpush1.msra.mxu0 0.0
  %281 = vmatprep.subr.mxu0 0.0
  %282 = vmatpush1.msra.mxu0 0.0
  %283 = vmatprep.subr.mxu0 0.0
  %284 = vmatpush1.msra.mxu0 0.0
  %285 = vmatprep.subr.mxu0 0.0
  %286 = vmatpush1.msra.mxu0 0.0
  %287 = vmatprep.subr.mxu0 0.0
  %288 = vmatpush1.msra.mxu0 0.0
  %289 = vmatprep.subr.mxu0 0.0
  %290 = vmatpush1.msra.mxu0 0.0
  %291 = vmatprep.subr.mxu0 0.0
  %292 = vmatpush1.msra.mxu0 0.0
  %293 = vmatprep.subr.mxu0 0.0
  %294 = vmatpush1.msra.mxu0 0.0
  %295 = vmatprep.subr.mxu0 0.0
  %296 = vmatpush1.msra.mxu0 0.0
  %297 = vmatprep.subr.mxu0 0.0
  %298 = vmatpush1.msra.mxu0 0.0
  %299 = vmatprep.subr.mxu0 0.0
  %300 = vmatpush1.msra.mxu0 0.0
  %301 = vmatprep.subr.mxu0 0.0
  %302 = vmatpush1.msra.mxu0 0.0
  %303 = vmatprep.subr.mxu0 0.0
  %304 = vmatpush1.msra.mxu0 0.0
  %305 = vmatprep.subr.mxu0 0.0
  %306 = vmatpush1.msra.mxu0 0.0
  %307 = vmatprep.subr.mxu0 0.0
  %308 = vmatpush1.msra.mxu0 0.0
  %309 = vmatprep.subr.mxu0 0.0
  %310 = vmatpush1.msra.mxu0 0.0
  %311 = vmatprep.subr.mxu0 0.0
  %312 = vmatpush1.msra.mxu0 0.0
  %313 = vmatprep.subr.mxu0 0.0
  %314 = vmatpush1.msra.mxu0 0.0
  %315 = vmatprep.subr.mxu0 0.0
  %316 = vmatpush1.msra.mxu0 0.0
  %317 = vmatprep.subr.mxu0 0.0
  %318 = vmatpush1.msra.mxu0 0.0
  %319 = vmatprep.subr.mxu0 0.0
  %320 = vmatpush1.msra.mxu0 0.0
  %321 = vmatprep.subr.mxu0 0.0
  %322 = vmatpush1.msra.mxu0 0.0
  %323 = vmatprep.subr.mxu0 0.0
  %324 = vmatpush1.msra.mxu0 0.0
  %325 = vmatprep.mubr.f32.mxu0 0.0
  %326 = vmatmul.mubr.f32.gmra.mrb[0].mxu0 %v188
  %v327 = vpop.f32.mrb[0].mxu0
  %v328 = vadd.f32 %v183, %v327
  %v329 = vpop.f32.mrb[0].mxu0
  %v330 = vadd.f32 %v185, %v329
  %331 = vdwg.mxu0
  %s332 = scalar_lea.vmem %s1, 16
  %v333 = vld [vmem:[%s332] sm:$0xff]
  %334 = vrot.lane.b32.xlu0 %v14, 126
  %v335 = vpop.permute.xlu0 %334
  %336 = vrot.lane.b32.xlu0 %v15, 126
  %v337 = vpop.permute.xlu0 %336
  %338 = vrot.lane.b32.xlu0 %v16, 126
  %v339 = vpop.permute.xlu0 %338
  %340 = vrot.lane.b32.xlu0 %v17, 126
  %v341 = vpop.permute.xlu0 %340
  %vm342 = vcmask 1031168
  %v343 = vsel %vm342, %v335, %v337
  %v344 = vsel %vm342, %v337, %v339
  %v345 = vsel %vm342, %v339, %v341
  %v351 = vsel %vm41, %v333, 0
  %353 = vmatprep.subr.mxu0 %v344
  %354 = vmatpush1.msra.mxu0 %v343
  %355 = vmatprep.subr.mxu0 0.0
  %356 = vmatpush1.msra.mxu0 0.0
  %357 = vmatprep.subr.mxu0 0.0
  %358 = vmatpush1.msra.mxu0 0.0
  %359 = vmatprep.subr.mxu0 0.0
  %360 = vmatpush1.msra.mxu0 0.0
  %361 = vmatprep.subr.mxu0 0.0
  %362 = vmatpush1.msra.mxu0 0.0
  %363 = vmatprep.subr.mxu0 0.0
  %364 = vmatpush1.msra.mxu0 0.0
  %365 = vmatprep.subr.mxu0 0.0
  %366 = vmatpush1.msra.mxu0 0.0
  %367 = vmatprep.subr.mxu0 0.0
  %368 = vmatpush1.msra.mxu0 0.0
  %369 = vmatprep.subr.mxu0 0.0
  %370 = vmatpush1.msra.mxu0 0.0
  %371 = vmatprep.subr.mxu0 0.0
  %372 = vmatpush1.msra.mxu0 0.0
  %373 = vmatprep.subr.mxu0 0.0
  %374 = vmatpush1.msra.mxu0 0.0
  %375 = vmatprep.subr.mxu0 0.0
  %376 = vmatpush1.msra.mxu0 0.0
  %377 = vmatprep.subr.mxu0 0.0
  %378 = vmatpush1.msra.mxu0 0.0
  %379 = vmatprep.subr.mxu0 0.0
  %380 = vmatpush1.msra.mxu0 0.0
  %381 = vmatprep.subr.mxu0 0.0
  %382 = vmatpush1.msra.mxu0 0.0
  %383 = vmatprep.subr.mxu0 0.0
  %384 = vmatpush1.msra.mxu0 0.0
  %385 = vmatprep.subr.mxu0 0.0
  %386 = vmatpush1.msra.mxu0 0.0
  %387 = vmatprep.subr.mxu0 0.0
  %388 = vmatpush1.msra.mxu0 0.0
  %389 = vmatprep.subr.mxu0 0.0
  %390 = vmatpush1.msra.mxu0 0.0
  %391 = vmatprep.subr.mxu0 0.0
  %392 = vmatpush1.msra.mxu0 0.0
  %393 = vmatprep.subr.mxu0 0.0
  %394 = vmatpush1.msra.mxu0 0.0
  %395 = vmatprep.subr.mxu0 0.0
  %396 = vmatpush1.msra.mxu0 0.0
  %397 = vmatprep.subr.mxu0 0.0
  %398 = vmatpush1.msra.mxu0 0.0
  %399 = vmatprep.subr.mxu0 0.0
  %400 = vmatpush1.msra.mxu0 0.0
  %401 = vmatprep.subr.mxu0 0.0
  %402 = vmatpush1.msra.mxu0 0.0
  %403 = vmatprep.subr.mxu0 0.0
  %404 = vmatpush1.msra.mxu0 0.0
  %405 = vmatprep.subr.mxu0 0.0
  %406 = vmatpush1.msra.mxu0 0.0
  %407 = vmatprep.subr.mxu0 0.0
  %408 = vmatpush1.msra.mxu0 0.0
  %409 = vmatprep.subr.mxu0 0.0
  %410 = vmatpush1.msra.mxu0 0.0
  %411 = vmatprep.subr.mxu0 0.0
  %412 = vmatpush1.msra.mxu0 0.0
  %413 = vmatprep.subr.mxu0 0.0
  %414 = vmatpush1.msra.mxu0 0.0
  %415 = vmatprep.subr.mxu0 0.0
  %416 = vmatpush1.msra.mxu0 0.0
  %417 = vmatprep.mubr.f32.mxu0 0.0
  %418 = vmatmul.mubr.f32.gmra.mrb[0].mxu0 %v351
  %v419 = vpop.f32.mrb[0].mxu0
  %v420 = vadd.f32 0.0, %v419
  %v421 = vpop.f32.mrb[0].mxu0
  %v422 = vadd.f32 0.0, %v421
  %423 = vdwg.mxu0
  %424 = vmatprep.subr.mxu0 %v341
  %425 = vmatpush1.msra.mxu0 %v345
  %426 = vmatprep.subr.mxu0 0.0
  %427 = vmatpush1.msra.mxu0 0.0
  %428 = vmatprep.subr.mxu0 0.0
  %429 = vmatpush1.msra.mxu0 0.0
  %430 = vmatprep.subr.mxu0 0.0
  %431 = vmatpush1.msra.mxu0 0.0
  %432 = vmatprep.subr.mxu0 0.0
  %433 = vmatpush1.msra.mxu0 0.0
  %434 = vmatprep.subr.mxu0 0.0
  %435 = vmatpush1.msra.mxu0 0.0
  %436 = vmatprep.subr.mxu0 0.0
  %437 = vmatpush1.msra.mxu0 0.0
  %438 = vmatprep.subr.mxu0 0.0
  %439 = vmatpush1.msra.mxu0 0.0
  %440 = vmatprep.subr.mxu0 0.0
  %441 = vmatpush1.msra.mxu0 0.0
  %442 = vmatprep.subr.mxu0 0.0
  %443 = vmatpush1.msra.mxu0 0.0
  %444 = vmatprep.subr.mxu0 0.0
  %445 = vmatpush1.msra.mxu0 0.0
  %446 = vmatprep.subr.mxu0 0.0
  %447 = vmatpush1.msra.mxu0 0.0
  %448 = vmatprep.subr.mxu0 0.0
  %449 = vmatpush1.msra.mxu0 0.0
  %450 = vmatprep.subr.mxu0 0.0
  %451 = vmatpush1.msra.mxu0 0.0
  %452 = vmatprep.subr.mxu0 0.0
  %453 = vmatpush1.msra.mxu0 0.0
  %454 = vmatprep.subr.mxu0 0.0
  %455 = vmatpush1.msra.mxu0 0.0
  %456 = vmatprep.subr.mxu0 0.0
  %457 = vmatpush1.msra.mxu0 0.0
  %458 = vmatprep.subr.mxu0 0.0
  %459 = vmatpush1.msra.mxu0 0.0
  %460 = vmatprep.subr.mxu0 0.0
  %461 = vmatpush1.msra.mxu0 0.0
  %462 = vmatprep.subr.mxu0 0.0
  %463 = vmatpush1.msra.mxu0 0.0
  %464 = vmatprep.subr.mxu0 0.0
  %465 = vmatpush1.msra.mxu0 0.0
  %466 = vmatprep.subr.mxu0 0.0
  %467 = vmatpush1.msra.mxu0 0.0
  %468 = vmatprep.subr.mxu0 0.0
  %469 = vmatpush1.msra.mxu0 0.0
  %470 = vmatprep.subr.mxu0 0.0
  %471 = vmatpush1.msra.mxu0 0.0
  %472 = vmatprep.subr.mxu0 0.0
  %473 = vmatpush1.msra.mxu0 0.0
  %474 = vmatprep.subr.mxu0 0.0
  %475 = vmatpush1.msra.mxu0 0.0
  %476 = vmatprep.subr.mxu0 0.0
  %477 = vmatpush1.msra.mxu0 0.0
  %478 = vmatprep.subr.mxu0 0.0
  %479 = vmatpush1.msra.mxu0 0.0
  %480 = vmatprep.subr.mxu0 0.0
  %481 = vmatpush1.msra.mxu0 0.0
  %482 = vmatprep.subr.mxu0 0.0
  %483 = vmatpush1.msra.mxu0 0.0
  %484 = vmatprep.subr.mxu0 0.0
  %485 = vmatpush1.msra.mxu0 0.0
  %486 = vmatprep.subr.mxu0 0.0
  %487 = vmatpush1.msra.mxu0 0.0
  %488 = vmatprep.mubr.f32.mxu0 0.0
  %489 = vmatmul.mubr.f32.gmra.mrb[0].mxu0 %v351
  %v490 = vpop.f32.mrb[0].mxu0
  %v491 = vadd.f32 0.0, %v490
  %v492 = vpop.f32.mrb[0].mxu0
  %v493 = vadd.f32 0.0, %v492
  %494 = vdwg.mxu0
  %v495 = vadd.f32 %v257, %v420
  %v496 = vadd.f32 %v259, %v422
  %v497 = vadd.f32 %v328, %v491
  %v498 = vadd.f32 %v330, %v493
  %s499 = scalar_lea.vmem %s1, 24
  %v500 = vld [vmem:[%s499] sm:$0xff]
  %501 = vrot.lane.b32.xlu0 %v14, 125
  %v502 = vpop.permute.xlu0 %501
  %503 = vrot.lane.b32.xlu0 %v15, 125
  %v504 = vpop.permute.xlu0 %503
  %505 = vrot.lane.b32.xlu0 %v16, 125
  %v506 = vpop.permute.xlu0 %505
  %507 = vrot.lane.b32.xlu0 %v17, 125
  %v508 = vpop.permute.xlu0 %507
  %vm509 = vcmask 1022976
  %v510 = vsel %vm509, %v502, %v504
  %v511 = vsel %vm509, %v504, %v506
  %v512 = vsel %vm509, %v506, %v508
  %v518 = vsel %vm41, %v500, 0
  %520 = vmatprep.subr.mxu0 %v511
  %521 = vmatpush1.msra.mxu0 %v510
  %522 = vmatprep.subr.mxu0 0.0
  %523 = vmatpush1.msra.mxu0 0.0
  %524 = vmatprep.subr.mxu0 0.0
  %525 = vmatpush1.msra.mxu0 0.0
  %526 = vmatprep.subr.mxu0 0.0
  %527 = vmatpush1.msra.mxu0 0.0
  %528 = vmatprep.subr.mxu0 0.0
  %529 = vmatpush1.msra.mxu0 0.0
  %530 = vmatprep.subr.mxu0 0.0
  %531 = vmatpush1.msra.mxu0 0.0
  %532 = vmatprep.subr.mxu0 0.0
  %533 = vmatpush1.msra.mxu0 0.0
  %534 = vmatprep.subr.mxu0 0.0
  %535 = vmatpush1.msra.mxu0 0.0
  %536 = vmatprep.subr.mxu0 0.0
  %537 = vmatpush1.msra.mxu0 0.0
  %538 = vmatprep.subr.mxu0 0.0
  %539 = vmatpush1.msra.mxu0 0.0
  %540 = vmatprep.subr.mxu0 0.0
  %541 = vmatpush1.msra.mxu0 0.0
  %542 = vmatprep.subr.mxu0 0.0
  %543 = vmatpush1.msra.mxu0 0.0
  %544 = vmatprep.subr.mxu0 0.0
  %545 = vmatpush1.msra.mxu0 0.0
  %546 = vmatprep.subr.mxu0 0.0
  %547 = vmatpush1.msra.mxu0 0.0
  %548 = vmatprep.subr.mxu0 0.0
  %549 = vmatpush1.msra.mxu0 0.0
  %550 = vmatprep.subr.mxu0 0.0
  %551 = vmatpush1.msra.mxu0 0.0
  %552 = vmatprep.subr.mxu0 0.0
  %553 = vmatpush1.msra.mxu0 0.0
  %554 = vmatprep.subr.mxu0 0.0
  %555 = vmatpush1.msra.mxu0 0.0
  %556 = vmatprep.subr.mxu0 0.0
  %557 = vmatpush1.msra.mxu0 0.0
  %558 = vmatprep.subr.mxu0 0.0
  %559 = vmatpush1.msra.mxu0 0.0
  %560 = vmatprep.subr.mxu0 0.0
  %561 = vmatpush1.msra.mxu0 0.0
  %562 = vmatprep.subr.mxu0 0.0
  %563 = vmatpush1.msra.mxu0 0.0
  %564 = vmatprep.subr.mxu0 0.0
  %565 = vmatpush1.msra.mxu0 0.0
  %566 = vmatprep.subr.mxu0 0.0
  %567 = vmatpush1.msra.mxu0 0.0
  %568 = vmatprep.subr.mxu0 0.0
  %569 = vmatpush1.msra.mxu0 0.0
  %570 = vmatprep.subr.mxu0 0.0
  %571 = vmatpush1.msra.mxu0 0.0
  %572 = vmatprep.subr.mxu0 0.0
  %573 = vmatpush1.msra.mxu0 0.0
  %574 = vmatprep.subr.mxu0 0.0
  %575 = vmatpush1.msra.mxu0 0.0
  %576 = vmatprep.subr.mxu0 0.0
  %577 = vmatpush1.msra.mxu0 0.0
  %578 = vmatprep.subr.mxu0 0.0
  %579 = vmatpush1.msra.mxu0 0.0
  %580 = vmatprep.subr.mxu0 0.0
  %581 = vmatpush1.msra.mxu0 0.0
  %582 = vmatprep.subr.mxu0 0.0
  %583 = vmatpush1.msra.mxu0 0.0
  %584 = vmatprep.mubr.f32.mxu0 0.0
  %585 = vmatmul.mubr.f32.gmra.mrb[0].mxu0 %v518
  %v586 = vpop.f32.mrb[0].mxu0
  %v587 = vadd.f32 0.0, %v586
  %v588 = vpop.f32.mrb[0].mxu0
  %v589 = vadd.f32 0.0, %v588
  %590 = vdwg.mxu0
  %591 = vmatprep.subr.mxu0 %v508
  %592 = vmatpush1.msra.mxu0 %v512
  %593 = vmatprep.subr.mxu0 0.0
  %594 = vmatpush1.msra.mxu0 0.0
  %595 = vmatprep.subr.mxu0 0.0
  %596 = vmatpush1.msra.mxu0 0.0
  %597 = vmatprep.subr.mxu0 0.0
  %598 = vmatpush1.msra.mxu0 0.0
  %599 = vmatprep.subr.mxu0 0.0
  %600 = vmatpush1.msra.mxu0 0.0
  %601 = vmatprep.subr.mxu0 0.0
  %602 = vmatpush1.msra.mxu0 0.0
  %603 = vmatprep.subr.mxu0 0.0
  %604 = vmatpush1.msra.mxu0 0.0
  %605 = vmatprep.subr.mxu0 0.0
  %606 = vmatpush1.msra.mxu0 0.0
  %607 = vmatprep.subr.mxu0 0.0
  %608 = vmatpush1.msra.mxu0 0.0
  %609 = vmatprep.subr.mxu0 0.0
  %610 = vmatpush1.msra.mxu0 0.0
  %611 = vmatprep.subr.mxu0 0.0
  %612 = vmatpush1.msra.mxu0 0.0
  %613 = vmatprep.subr.mxu0 0.0
  %614 = vmatpush1.msra.mxu0 0.0
  %615 = vmatprep.subr.mxu0 0.0
  %616 = vmatpush1.msra.mxu0 0.0
  %617 = vmatprep.subr.mxu0 0.0
  %618 = vmatpush1.msra.mxu0 0.0
  %619 = vmatprep.subr.mxu0 0.0
  %620 = vmatpush1.msra.mxu0 0.0
  %621 = vmatprep.subr.mxu0 0.0
  %622 = vmatpush1.msra.mxu0 0.0
  %623 = vmatprep.subr.mxu0 0.0
  %624 = vmatpush1.msra.mxu0 0.0
  %625 = vmatprep.subr.mxu0 0.0
  %626 = vmatpush1.msra.mxu0 0.0
  %627 = vmatprep.subr.mxu0 0.0
  %628 = vmatpush1.msra.mxu0 0.0
  %629 = vmatprep.subr.mxu0 0.0
  %630 = vmatpush1.msra.mxu0 0.0
  %631 = vmatprep.subr.mxu0 0.0
  %632 = vmatpush1.msra.mxu0 0.0
  %633 = vmatprep.subr.mxu0 0.0
  %634 = vmatpush1.msra.mxu0 0.0
  %635 = vmatprep.subr.mxu0 0.0
  %636 = vmatpush1.msra.mxu0 0.0
  %637 = vmatprep.subr.mxu0 0.0
  %638 = vmatpush1.msra.mxu0 0.0
  %639 = vmatprep.subr.mxu0 0.0
  %640 = vmatpush1.msra.mxu0 0.0
  %641 = vmatprep.subr.mxu0 0.0
  %642 = vmatpush1.msra.mxu0 0.0
  %643 = vmatprep.subr.mxu0 0.0
  %644 = vmatpush1.msra.mxu0 0.0
  %645 = vmatprep.subr.mxu0 0.0
  %646 = vmatpush1.msra.mxu0 0.0
  %647 = vmatprep.subr.mxu0 0.0
  %648 = vmatpush1.msra.mxu0 0.0
  %649 = vmatprep.subr.mxu0 0.0
  %650 = vmatpush1.msra.mxu0 0.0
  %651 = vmatprep.subr.mxu0 0.0
  %652 = vmatpush1.msra.mxu0 0.0
  %653 = vmatprep.subr.mxu0 0.0
  %654 = vmatpush1.msra.mxu0 0.0
  %655 = vmatprep.mubr.f32.mxu0 0.0
  %656 = vmatmul.mubr.f32.gmra.mrb[0].mxu0 %v518
  %v657 = vpop.f32.mrb[0].mxu0
  %v658 = vadd.f32 0.0, %v657
  %v659 = vpop.f32.mrb[0].mxu0
  %v660 = vadd.f32 0.0, %v659
  %661 = vdwg.mxu0
  %v662 = vadd.f32 %v495, %v587
  %v663 = vadd.f32 %v496, %v589
  %v664 = vadd.f32 %v497, %v658
  %v665 = vadd.f32 %v498, %v660
  %s666 = scalar_lea.vmem %s1, 32
  %v667 = vld [vmem:[%s666] sm:$0xff]
  %668 = vrot.lane.b32.xlu0 %v14, 124
  %v669 = vpop.permute.xlu0 %668
  %670 = vrot.lane.b32.xlu0 %v15, 124
  %v671 = vpop.permute.xlu0 %670
  %672 = vrot.lane.b32.xlu0 %v16, 124
  %v673 = vpop.permute.xlu0 %672
  %674 = vrot.lane.b32.xlu0 %v17, 124
  %v675 = vpop.permute.xlu0 %674
  %vm676 = vcmask 1014784
  %v677 = vsel %vm676, %v669, %v671
  %v678 = vsel %vm676, %v671, %v673
  %v679 = vsel %vm676, %v673, %v675
  %v685 = vsel %vm41, %v667, 0
  %687 = vmatprep.subr.mxu0 %v678
  %688 = vmatpush1.msra.mxu0 %v677
  %689 = vmatprep.subr.mxu0 0.0
  %690 = vmatpush1.msra.mxu0 0.0
  %691 = vmatprep.subr.mxu0 0.0
  %692 = vmatpush1.msra.mxu0 0.0
  %693 = vmatprep.subr.mxu0 0.0
  %694 = vmatpush1.msra.mxu0 0.0
  %695 = vmatprep.subr.mxu0 0.0
  %696 = vmatpush1.msra.mxu0 0.0
  %697 = vmatprep.subr.mxu0 0.0
  %698 = vmatpush1.msra.mxu0 0.0
  %699 = vmatprep.subr.mxu0 0.0
  %700 = vmatpush1.msra.mxu0 0.0
  %701 = vmatprep.subr.mxu0 0.0
  %702 = vmatpush1.msra.mxu0 0.0
  %703 = vmatprep.subr.mxu0 0.0
  %704 = vmatpush1.msra.mxu0 0.0
  %705 = vmatprep.subr.mxu0 0.0
  %706 = vmatpush1.msra.mxu0 0.0
  %707 = vmatprep.subr.mxu0 0.0
  %708 = vmatpush1.msra.mxu0 0.0
  %709 = vmatprep.subr.mxu0 0.0
  %710 = vmatpush1.msra.mxu0 0.0
  %711 = vmatprep.subr.mxu0 0.0
  %712 = vmatpush1.msra.mxu0 0.0
  %713 = vmatprep.subr.mxu0 0.0
  %714 = vmatpush1.msra.mxu0 0.0
  %715 = vmatprep.subr.mxu0 0.0
  %716 = vmatpush1.msra.mxu0 0.0
  %717 = vmatprep.subr.mxu0 0.0
  %718 = vmatpush1.msra.mxu0 0.0
  %719 = vmatprep.subr.mxu0 0.0
  %720 = vmatpush1.msra.mxu0 0.0
  %721 = vmatprep.subr.mxu0 0.0
  %722 = vmatpush1.msra.mxu0 0.0
  %723 = vmatprep.subr.mxu0 0.0
  %724 = vmatpush1.msra.mxu0 0.0
  %725 = vmatprep.subr.mxu0 0.0
  %726 = vmatpush1.msra.mxu0 0.0
  %727 = vmatprep.subr.mxu0 0.0
  %728 = vmatpush1.msra.mxu0 0.0
  %729 = vmatprep.subr.mxu0 0.0
  %730 = vmatpush1.msra.mxu0 0.0
  %731 = vmatprep.subr.mxu0 0.0
  %732 = vmatpush1.msra.mxu0 0.0
  %733 = vmatprep.subr.mxu0 0.0
  %734 = vmatpush1.msra.mxu0 0.0
  %735 = vmatprep.subr.mxu0 0.0
  %736 = vmatpush1.msra.mxu0 0.0
  %737 = vmatprep.subr.mxu0 0.0
  %738 = vmatpush1.msra.mxu0 0.0
  %739 = vmatprep.subr.mxu0 0.0
  %740 = vmatpush1.msra.mxu0 0.0
  %741 = vmatprep.subr.mxu0 0.0
  %742 = vmatpush1.msra.mxu0 0.0
  %743 = vmatprep.subr.mxu0 0.0
  %744 = vmatpush1.msra.mxu0 0.0
  %745 = vmatprep.subr.mxu0 0.0
  %746 = vmatpush1.msra.mxu0 0.0
  %747 = vmatprep.subr.mxu0 0.0
  %748 = vmatpush1.msra.mxu0 0.0
  %749 = vmatprep.subr.mxu0 0.0
  %750 = vmatpush1.msra.mxu0 0.0
  %751 = vmatprep.mubr.f32.mxu0 0.0
  %752 = vmatmul.mubr.f32.gmra.mrb[0].mxu0 %v685
  %v753 = vpop.f32.mrb[0].mxu0
  %v754 = vadd.f32 0.0, %v753
  %v755 = vpop.f32.mrb[0].mxu0
  %v756 = vadd.f32 0.0, %v755
  %757 = vdwg.mxu0
  %758 = vmatprep.subr.mxu0 %v675
  %759 = vmatpush1.msra.mxu0 %v679
  %760 = vmatprep.subr.mxu0 0.0
  %761 = vmatpush1.msra.mxu0 0.0
  %762 = vmatprep.subr.mxu0 0.0
  %763 = vmatpush1.msra.mxu0 0.0
  %764 = vmatprep.subr.mxu0 0.0
  %765 = vmatpush1.msra.mxu0 0.0
  %766 = vmatprep.subr.mxu0 0.0
  %767 = vmatpush1.msra.mxu0 0.0
  %768 = vmatprep.subr.mxu0 0.0
  %769 = vmatpush1.msra.mxu0 0.0
  %770 = vmatprep.subr.mxu0 0.0
  %771 = vmatpush1.msra.mxu0 0.0
  %772 = vmatprep.subr.mxu0 0.0
  %773 = vmatpush1.msra.mxu0 0.0
  %774 = vmatprep.subr.mxu0 0.0
  %775 = vmatpush1.msra.mxu0 0.0
  %776 = vmatprep.subr.mxu0 0.0
  %777 = vmatpush1.msra.mxu0 0.0
  %778 = vmatprep.subr.mxu0 0.0
  %779 = vmatpush1.msra.mxu0 0.0
  %780 = vmatprep.subr.mxu0 0.0
  %781 = vmatpush1.msra.mxu0 0.0
  %782 = vmatprep.subr.mxu0 0.0
  %783 = vmatpush1.msra.mxu0 0.0
  %784 = vmatprep.subr.mxu0 0.0
  %785 = vmatpush1.msra.mxu0 0.0
  %786 = vmatprep.subr.mxu0 0.0
  %787 = vmatpush1.msra.mxu0 0.0
  %788 = vmatprep.subr.mxu0 0.0
  %789 = vmatpush1.msra.mxu0 0.0
  %790 = vmatprep.subr.mxu0 0.0
  %791 = vmatpush1.msra.mxu0 0.0
  %792 = vmatprep.subr.mxu0 0.0
  %793 = vmatpush1.msra.mxu0 0.0
  %794 = vmatprep.subr.mxu0 0.0
  %795 = vmatpush1.msra.mxu0 0.0
  %796 = vmatprep.subr.mxu0 0.0
  %797 = vmatpush1.msra.mxu0 0.0
  %798 = vmatprep.subr.mxu0 0.0
  %799 = vmatpush1.msra.mxu0 0.0
  %800 = vmatprep.subr.mxu0 0.0
  %801 = vmatpush1.msra.mxu0 0.0
  %802 = vmatprep.subr.mxu0 0.0
  %803 = vmatpush1.msra.mxu0 0.0
  %804 = vmatprep.subr.mxu0 0.0
  %805 = vmatpush1.msra.mxu0 0.0
  %806 = vmatprep.subr.mxu0 0.0
  %807 = vmatpush1.msra.mxu0 0.0
  %808 = vmatprep.subr.mxu0 0.0
  %809 = vmatpush1.msra.mxu0 0.0
  %810 = vmatprep.subr.mxu0 0.0
  %811 = vmatpush1.msra.mxu0 0.0
  %812 = vmatprep.subr.mxu0 0.0
  %813 = vmatpush1.msra.mxu0 0.0
  %814 = vmatprep.subr.mxu0 0.0
  %815 = vmatpush1.msra.mxu0 0.0
  %816 = vmatprep.subr.mxu0 0.0
  %817 = vmatpush1.msra.mxu0 0.0
  %818 = vmatprep.subr.mxu0 0.0
  %819 = vmatpush1.msra.mxu0 0.0
  %820 = vmatprep.subr.mxu0 0.0
  %821 = vmatpush1.msra.mxu0 0.0
  %822 = vmatprep.mubr.f32.mxu0 0.0
  %823 = vmatmul.mubr.f32.gmra.mrb[0].mxu0 %v685
  %v824 = vpop.f32.mrb[0].mxu0
  %v825 = vadd.f32 0.0, %v824
  %v826 = vpop.f32.mrb[0].mxu0
  %v827 = vadd.f32 0.0, %v826
  %828 = vdwg.mxu0
  %v829 = vadd.f32 %v662, %v754
  %v830 = vadd.f32 %v663, %v756
  %v831 = vadd.f32 %v664, %v825
  %v832 = vadd.f32 %v665, %v827
  %v833 = vld [vmem:[%s0] sm:$0xff]
  %v834 = vld [vmem:[%s0 + $0x8] sm:$0xff]
  %v835 = vld [vmem:[%s0 + $0x10] sm:$0xff]
  %v836 = vld [vmem:[%s0 + $0x18] sm:$0xff]
  %v837 = vld [vmem:[%s0 + $0x20] sm:$0xff]
  %s838 = scalar_lea.vmem %s1, 40
  %v839 = vld [vmem:[%s838] sm:$0xff]
  %845 = vrot.lane.b32.xlu0 %v833, 88
  %v846 = vpop.permute.xlu0 %845
  %847 = vrot.lane.b32.xlu0 %v834, 88
  %v848 = vpop.permute.xlu0 %847
  %849 = vrot.lane.b32.xlu0 %v835, 88
  %v850 = vpop.permute.xlu0 %849
  %851 = vrot.lane.b32.xlu0 %v836, 88
  %v852 = vpop.permute.xlu0 %851
  %853 = vrot.lane.b32.xlu0 %v837, 88
  %v854 = vpop.permute.xlu0 %853
  %vm855 = vcmask 719872
  %v856 = vsel %vm855, %v846, %v848
  %v857 = vsel %vm855, %v848, %v850
  %v858 = vsel %vm855, %v850, %v852
  %v859 = vsel %vm855, %v852, %v854
  %v865 = vsel %vm41, %v839, 0
  %867 = vmatprep.subr.mxu0 %v857
  %868 = vmatpush1.msra.mxu0 %v856
  %869 = vmatprep.subr.mxu0 0.0
  %870 = vmatpush1.msra.mxu0 0.0
  %871 = vmatprep.subr.mxu0 0.0
  %872 = vmatpush1.msra.mxu0 0.0
  %873 = vmatprep.subr.mxu0 0.0
  %874 = vmatpush1.msra.mxu0 0.0
  %875 = vmatprep.subr.mxu0 0.0
  %876 = vmatpush1.msra.mxu0 0.0
  %877 = vmatprep.subr.mxu0 0.0
  %878 = vmatpush1.msra.mxu0 0.0
  %879 = vmatprep.subr.mxu0 0.0
  %880 = vmatpush1.msra.mxu0 0.0
  %881 = vmatprep.subr.mxu0 0.0
  %882 = vmatpush1.msra.mxu0 0.0
  %883 = vmatprep.subr.mxu0 0.0
  %884 = vmatpush1.msra.mxu0 0.0
  %885 = vmatprep.subr.mxu0 0.0
  %886 = vmatpush1.msra.mxu0 0.0
  %887 = vmatprep.subr.mxu0 0.0
  %888 = vmatpush1.msra.mxu0 0.0
  %889 = vmatprep.subr.mxu0 0.0
  %890 = vmatpush1.msra.mxu0 0.0
  %891 = vmatprep.subr.mxu0 0.0
  %892 = vmatpush1.msra.mxu0 0.0
  %893 = vmatprep.subr.mxu0 0.0
  %894 = vmatpush1.msra.mxu0 0.0
  %895 = vmatprep.subr.mxu0 0.0
  %896 = vmatpush1.msra.mxu0 0.0
  %897 = vmatprep.subr.mxu0 0.0
  %898 = vmatpush1.msra.mxu0 0.0
  %899 = vmatprep.subr.mxu0 0.0
  %900 = vmatpush1.msra.mxu0 0.0
  %901 = vmatprep.subr.mxu0 0.0
  %902 = vmatpush1.msra.mxu0 0.0
  %903 = vmatprep.subr.mxu0 0.0
  %904 = vmatpush1.msra.mxu0 0.0
  %905 = vmatprep.subr.mxu0 0.0
  %906 = vmatpush1.msra.mxu0 0.0
  %907 = vmatprep.subr.mxu0 0.0
  %908 = vmatpush1.msra.mxu0 0.0
  %909 = vmatprep.subr.mxu0 0.0
  %910 = vmatpush1.msra.mxu0 0.0
  %911 = vmatprep.subr.mxu0 0.0
  %912 = vmatpush1.msra.mxu0 0.0
  %913 = vmatprep.subr.mxu0 0.0
  %914 = vmatpush1.msra.mxu0 0.0
  %915 = vmatprep.subr.mxu0 0.0
  %916 = vmatpush1.msra.mxu0 0.0
  %917 = vmatprep.subr.mxu0 0.0
  %918 = vmatpush1.msra.mxu0 0.0
  %919 = vmatprep.subr.mxu0 0.0
  %920 = vmatpush1.msra.mxu0 0.0
  %921 = vmatprep.subr.mxu0 0.0
  %922 = vmatpush1.msra.mxu0 0.0
  %923 = vmatprep.subr.mxu0 0.0
  %924 = vmatpush1.msra.mxu0 0.0
  %925 = vmatprep.subr.mxu0 0.0
  %926 = vmatpush1.msra.mxu0 0.0
  %927 = vmatprep.subr.mxu0 0.0
  %928 = vmatpush1.msra.mxu0 0.0
  %929 = vmatprep.subr.mxu0 0.0
  %930 = vmatpush1.msra.mxu0 0.0
  %931 = vmatprep.mubr.f32.mxu0 0.0
  %932 = vmatmul.mubr.f32.gmra.mrb[0].mxu0 %v865
  %v933 = vpop.f32.mrb[0].mxu0
  %v934 = vadd.f32 0.0, %v933
  %v935 = vpop.f32.mrb[0].mxu0
  %v936 = vadd.f32 0.0, %v935
  %937 = vdwg.mxu0
  %938 = vmatprep.subr.mxu0 %v859
  %939 = vmatpush1.msra.mxu0 %v858
  %940 = vmatprep.subr.mxu0 0.0
  %941 = vmatpush1.msra.mxu0 0.0
  %942 = vmatprep.subr.mxu0 0.0
  %943 = vmatpush1.msra.mxu0 0.0
  %944 = vmatprep.subr.mxu0 0.0
  %945 = vmatpush1.msra.mxu0 0.0
  %946 = vmatprep.subr.mxu0 0.0
  %947 = vmatpush1.msra.mxu0 0.0
  %948 = vmatprep.subr.mxu0 0.0
  %949 = vmatpush1.msra.mxu0 0.0
  %950 = vmatprep.subr.mxu0 0.0
  %951 = vmatpush1.msra.mxu0 0.0
  %952 = vmatprep.subr.mxu0 0.0
  %953 = vmatpush1.msra.mxu0 0.0
  %954 = vmatprep.subr.mxu0 0.0
  %955 = vmatpush1.msra.mxu0 0.0
  %956 = vmatprep.subr.mxu0 0.0
  %957 = vmatpush1.msra.mxu0 0.0
  %958 = vmatprep.subr.mxu0 0.0
  %959 = vmatpush1.msra.mxu0 0.0
  %960 = vmatprep.subr.mxu0 0.0
  %961 = vmatpush1.msra.mxu0 0.0
  %962 = vmatprep.subr.mxu0 0.0
  %963 = vmatpush1.msra.mxu0 0.0
  %964 = vmatprep.subr.mxu0 0.0
  %965 = vmatpush1.msra.mxu0 0.0
  %966 = vmatprep.subr.mxu0 0.0
  %967 = vmatpush1.msra.mxu0 0.0
  %968 = vmatprep.subr.mxu0 0.0
  %969 = vmatpush1.msra.mxu0 0.0
  %970 = vmatprep.subr.mxu0 0.0
  %971 = vmatpush1.msra.mxu0 0.0
  %972 = vmatprep.subr.mxu0 0.0
  %973 = vmatpush1.msra.mxu0 0.0
  %974 = vmatprep.subr.mxu0 0.0
  %975 = vmatpush1.msra.mxu0 0.0
  %976 = vmatprep.subr.mxu0 0.0
  %977 = vmatpush1.msra.mxu0 0.0
  %978 = vmatprep.subr.mxu0 0.0
  %979 = vmatpush1.msra.mxu0 0.0
  %980 = vmatprep.subr.mxu0 0.0
  %981 = vmatpush1.msra.mxu0 0.0
  %982 = vmatprep.subr.mxu0 0.0
  %983 = vmatpush1.msra.mxu0 0.0
  %984 = vmatprep.subr.mxu0 0.0
  %985 = vmatpush1.msra.mxu0 0.0
  %986 = vmatprep.subr.mxu0 0.0
  %987 = vmatpush1.msra.mxu0 0.0
  %988 = vmatprep.subr.mxu0 0.0
  %989 = vmatpush1.msra.mxu0 0.0
  %990 = vmatprep.subr.mxu0 0.0
  %991 = vmatpush1.msra.mxu0 0.0
  %992 = vmatprep.subr.mxu0 0.0
  %993 = vmatpush1.msra.mxu0 0.0
  %994 = vmatprep.subr.mxu0 0.0
  %995 = vmatpush1.msra.mxu0 0.0
  %996 = vmatprep.subr.mxu0 0.0
  %997 = vmatpush1.msra.mxu0 0.0
  %998 = vmatprep.subr.mxu0 0.0
  %999 = vmatpush1.msra.mxu0 0.0
  %1000 = vmatprep.subr.mxu0 0.0
  %1001 = vmatpush1.msra.mxu0 0.0
  %1002 = vmatprep.mubr.f32.mxu0 0.0
  %1003 = vmatmul.mubr.f32.gmra.mrb[0].mxu0 %v865
  %v1004 = vpop.f32.mrb[0].mxu0
  %v1005 = vadd.f32 0.0, %v1004
  %v1006 = vpop.f32.mrb[0].mxu0
  %v1007 = vadd.f32 0.0, %v1006
  %1008 = vdwg.mxu0
  %v1009 = vadd.f32 %v829, %v934
  %v1010 = vadd.f32 %v830, %v936
  %v1011 = vadd.f32 %v831, %v1005
  %v1012 = vadd.f32 %v832, %v1007
  %s1013 = scalar_lea.vmem %s1, 48
  %v1014 = vld [vmem:[%s1013] sm:$0xff]
  %1015 = vrot.lane.b32.xlu0 %v833, 87
  %v1016 = vpop.permute.xlu0 %1015
  %1017 = vrot.lane.b32.xlu0 %v834, 87
  %v1018 = vpop.permute.xlu0 %1017
  %1019 = vrot.lane.b32.xlu0 %v835, 87
  %v1020 = vpop.permute.xlu0 %1019
  %1021 = vrot.lane.b32.xlu0 %v836, 87
  %v1022 = vpop.permute.xlu0 %1021
  %1023 = vrot.lane.b32.xlu0 %v837, 87
  %v1024 = vpop.permute.xlu0 %1023
  %vm1025 = vcmask 711680
  %v1026 = vsel %vm1025, %v1016, %v1018
  %v1027 = vsel %vm1025, %v1018, %v1020
  %v1028 = vsel %vm1025, %v1020, %v1022
  %v1029 = vsel %vm1025, %v1022, %v1024
  %v1035 = vsel %vm41, %v1014, 0
  %1037 = vmatprep.subr.mxu0 %v1027
  %1038 = vmatpush1.msra.mxu0 %v1026
  %1039 = vmatprep.subr.mxu0 0.0
  %1040 = vmatpush1.msra.mxu0 0.0
  %1041 = vmatprep.subr.mxu0 0.0
  %1042 = vmatpush1.msra.mxu0 0.0
  %1043 = vmatprep.subr.mxu0 0.0
  %1044 = vmatpush1.msra.mxu0 0.0
  %1045 = vmatprep.subr.mxu0 0.0
  %1046 = vmatpush1.msra.mxu0 0.0
  %1047 = vmatprep.subr.mxu0 0.0
  %1048 = vmatpush1.msra.mxu0 0.0
  %1049 = vmatprep.subr.mxu0 0.0
  %1050 = vmatpush1.msra.mxu0 0.0
  %1051 = vmatprep.subr.mxu0 0.0
  %1052 = vmatpush1.msra.mxu0 0.0
  %1053 = vmatprep.subr.mxu0 0.0
  %1054 = vmatpush1.msra.mxu0 0.0
  %1055 = vmatprep.subr.mxu0 0.0
  %1056 = vmatpush1.msra.mxu0 0.0
  %1057 = vmatprep.subr.mxu0 0.0
  %1058 = vmatpush1.msra.mxu0 0.0
  %1059 = vmatprep.subr.mxu0 0.0
  %1060 = vmatpush1.msra.mxu0 0.0
  %1061 = vmatprep.subr.mxu0 0.0
  %1062 = vmatpush1.msra.mxu0 0.0
  %1063 = vmatprep.subr.mxu0 0.0
  %1064 = vmatpush1.msra.mxu0 0.0
  %1065 = vmatprep.subr.mxu0 0.0
  %1066 = vmatpush1.msra.mxu0 0.0
  %1067 = vmatprep.subr.mxu0 0.0
  %1068 = vmatpush1.msra.mxu0 0.0
  %1069 = vmatprep.subr.mxu0 0.0
  %1070 = vmatpush1.msra.mxu0 0.0
  %1071 = vmatprep.subr.mxu0 0.0
  %1072 = vmatpush1.msra.mxu0 0.0
  %1073 = vmatprep.subr.mxu0 0.0
  %1074 = vmatpush1.msra.mxu0 0.0
  %1075 = vmatprep.subr.mxu0 0.0
  %1076 = vmatpush1.msra.mxu0 0.0
  %1077 = vmatprep.subr.mxu0 0.0
  %1078 = vmatpush1.msra.mxu0 0.0
  %1079 = vmatprep.subr.mxu0 0.0
  %1080 = vmatpush1.msra.mxu0 0.0
  %1081 = vmatprep.subr.mxu0 0.0
  %1082 = vmatpush1.msra.mxu0 0.0
  %1083 = vmatprep.subr.mxu0 0.0
  %1084 = vmatpush1.msra.mxu0 0.0
  %1085 = vmatprep.subr.mxu0 0.0
  %1086 = vmatpush1.msra.mxu0 0.0
  %1087 = vmatprep.subr.mxu0 0.0
  %1088 = vmatpush1.msra.mxu0 0.0
  %1089 = vmatprep.subr.mxu0 0.0
  %1090 = vmatpush1.msra.mxu0 0.0
  %1091 = vmatprep.subr.mxu0 0.0
  %1092 = vmatpush1.msra.mxu0 0.0
  %1093 = vmatprep.subr.mxu0 0.0
  %1094 = vmatpush1.msra.mxu0 0.0
  %1095 = vmatprep.subr.mxu0 0.0
  %1096 = vmatpush1.msra.mxu0 0.0
  %1097 = vmatprep.subr.mxu0 0.0
  %1098 = vmatpush1.msra.mxu0 0.0
  %1099 = vmatprep.subr.mxu0 0.0
  %1100 = vmatpush1.msra.mxu0 0.0
  %1101 = vmatprep.mubr.f32.mxu0 0.0
  %1102 = vmatmul.mubr.f32.gmra.mrb[0].mxu0 %v1035
  %v1103 = vpop.f32.mrb[0].mxu0
  %v1104 = vadd.f32 0.0, %v1103
  %v1105 = vpop.f32.mrb[0].mxu0
  %v1106 = vadd.f32 0.0, %v1105
  %1107 = vdwg.mxu0
  %1108 = vmatprep.subr.mxu0 %v1029
  %1109 = vmatpush1.msra.mxu0 %v1028
  %1110 = vmatprep.subr.mxu0 0.0
  %1111 = vmatpush1.msra.mxu0 0.0
  %1112 = vmatprep.subr.mxu0 0.0
  %1113 = vmatpush1.msra.mxu0 0.0
  %1114 = vmatprep.subr.mxu0 0.0
  %1115 = vmatpush1.msra.mxu0 0.0
  %1116 = vmatprep.subr.mxu0 0.0
  %1117 = vmatpush1.msra.mxu0 0.0
  %1118 = vmatprep.subr.mxu0 0.0
  %1119 = vmatpush1.msra.mxu0 0.0
  %1120 = vmatprep.subr.mxu0 0.0
  %1121 = vmatpush1.msra.mxu0 0.0
  %1122 = vmatprep.subr.mxu0 0.0
  %1123 = vmatpush1.msra.mxu0 0.0
  %1124 = vmatprep.subr.mxu0 0.0
  %1125 = vmatpush1.msra.mxu0 0.0
  %1126 = vmatprep.subr.mxu0 0.0
  %1127 = vmatpush1.msra.mxu0 0.0
  %1128 = vmatprep.subr.mxu0 0.0
  %1129 = vmatpush1.msra.mxu0 0.0
  %1130 = vmatprep.subr.mxu0 0.0
  %1131 = vmatpush1.msra.mxu0 0.0
  %1132 = vmatprep.subr.mxu0 0.0
  %1133 = vmatpush1.msra.mxu0 0.0
  %1134 = vmatprep.subr.mxu0 0.0
  %1135 = vmatpush1.msra.mxu0 0.0
  %1136 = vmatprep.subr.mxu0 0.0
  %1137 = vmatpush1.msra.mxu0 0.0
  %1138 = vmatprep.subr.mxu0 0.0
  %1139 = vmatpush1.msra.mxu0 0.0
  %1140 = vmatprep.subr.mxu0 0.0
  %1141 = vmatpush1.msra.mxu0 0.0
  %1142 = vmatprep.subr.mxu0 0.0
  %1143 = vmatpush1.msra.mxu0 0.0
  %1144 = vmatprep.subr.mxu0 0.0
  %1145 = vmatpush1.msra.mxu0 0.0
  %1146 = vmatprep.subr.mxu0 0.0
  %1147 = vmatpush1.msra.mxu0 0.0
  %1148 = vmatprep.subr.mxu0 0.0
  %1149 = vmatpush1.msra.mxu0 0.0
  %1150 = vmatprep.subr.mxu0 0.0
  %1151 = vmatpush1.msra.mxu0 0.0
  %1152 = vmatprep.subr.mxu0 0.0
  %1153 = vmatpush1.msra.mxu0 0.0
  %1154 = vmatprep.subr.mxu0 0.0
  %1155 = vmatpush1.msra.mxu0 0.0
  %1156 = vmatprep.subr.mxu0 0.0
  %1157 = vmatpush1.msra.mxu0 0.0
  %1158 = vmatprep.subr.mxu0 0.0
  %1159 = vmatpush1.msra.mxu0 0.0
  %1160 = vmatprep.subr.mxu0 0.0
  %1161 = vmatpush1.msra.mxu0 0.0
  %1162 = vmatprep.subr.mxu0 0.0
  %1163 = vmatpush1.msra.mxu0 0.0
  %1164 = vmatprep.subr.mxu0 0.0
  %1165 = vmatpush1.msra.mxu0 0.0
  %1166 = vmatprep.subr.mxu0 0.0
  %1167 = vmatpush1.msra.mxu0 0.0
  %1168 = vmatprep.subr.mxu0 0.0
  %1169 = vmatpush1.msra.mxu0 0.0
  %1170 = vmatprep.subr.mxu0 0.0
  %1171 = vmatpush1.msra.mxu0 0.0
  %1172 = vmatprep.mubr.f32.mxu0 0.0
  %1173 = vmatmul.mubr.f32.gmra.mrb[0].mxu0 %v1035
  %v1174 = vpop.f32.mrb[0].mxu0
  %v1175 = vadd.f32 0.0, %v1174
  %v1176 = vpop.f32.mrb[0].mxu0
  %v1177 = vadd.f32 0.0, %v1176
  %1178 = vdwg.mxu0
  %v1179 = vadd.f32 %v1009, %v1104
  %v1180 = vadd.f32 %v1010, %v1106
  %v1181 = vadd.f32 %v1011, %v1175
  %v1182 = vadd.f32 %v1012, %v1177
  %s1183 = scalar_lea.vmem %s1, 56
  %v1184 = vld [vmem:[%s1183] sm:$0xff]
  %1185 = vrot.lane.b32.xlu0 %v833, 86
  %v1186 = vpop.permute.xlu0 %1185
  %1187 = vrot.lane.b32.xlu0 %v834, 86
  %v1188 = vpop.permute.xlu0 %1187
  %1189 = vrot.lane.b32.xlu0 %v835, 86
  %v1190 = vpop.permute.xlu0 %1189
  %1191 = vrot.lane.b32.xlu0 %v836, 86
  %v1192 = vpop.permute.xlu0 %1191
  %1193 = vrot.lane.b32.xlu0 %v837, 86
  %v1194 = vpop.permute.xlu0 %1193
  %vm1195 = vcmask 703488
  %v1196 = vsel %vm1195, %v1186, %v1188
  %v1197 = vsel %vm1195, %v1188, %v1190
  %v1198 = vsel %vm1195, %v1190, %v1192
  %v1199 = vsel %vm1195, %v1192, %v1194
  %v1205 = vsel %vm41, %v1184, 0
  %1207 = vmatprep.subr.mxu0 %v1197
  %1208 = vmatpush1.msra.mxu0 %v1196
  %1209 = vmatprep.subr.mxu0 0.0
  %1210 = vmatpush1.msra.mxu0 0.0
  %1211 = vmatprep.subr.mxu0 0.0
  %1212 = vmatpush1.msra.mxu0 0.0
  %1213 = vmatprep.subr.mxu0 0.0
  %1214 = vmatpush1.msra.mxu0 0.0
  %1215 = vmatprep.subr.mxu0 0.0
  %1216 = vmatpush1.msra.mxu0 0.0
  %1217 = vmatprep.subr.mxu0 0.0
  %1218 = vmatpush1.msra.mxu0 0.0
  %1219 = vmatprep.subr.mxu0 0.0
  %1220 = vmatpush1.msra.mxu0 0.0
  %1221 = vmatprep.subr.mxu0 0.0
  %1222 = vmatpush1.msra.mxu0 0.0
  %1223 = vmatprep.subr.mxu0 0.0
  %1224 = vmatpush1.msra.mxu0 0.0
  %1225 = vmatprep.subr.mxu0 0.0
  %1226 = vmatpush1.msra.mxu0 0.0
  %1227 = vmatprep.subr.mxu0 0.0
  %1228 = vmatpush1.msra.mxu0 0.0
  %1229 = vmatprep.subr.mxu0 0.0
  %1230 = vmatpush1.msra.mxu0 0.0
  %1231 = vmatprep.subr.mxu0 0.0
  %1232 = vmatpush1.msra.mxu0 0.0
  %1233 = vmatprep.subr.mxu0 0.0
  %1234 = vmatpush1.msra.mxu0 0.0
  %1235 = vmatprep.subr.mxu0 0.0
  %1236 = vmatpush1.msra.mxu0 0.0
  %1237 = vmatprep.subr.mxu0 0.0
  %1238 = vmatpush1.msra.mxu0 0.0
  %1239 = vmatprep.subr.mxu0 0.0
  %1240 = vmatpush1.msra.mxu0 0.0
  %1241 = vmatprep.subr.mxu0 0.0
  %1242 = vmatpush1.msra.mxu0 0.0
  %1243 = vmatprep.subr.mxu0 0.0
  %1244 = vmatpush1.msra.mxu0 0.0
  %1245 = vmatprep.subr.mxu0 0.0
  %1246 = vmatpush1.msra.mxu0 0.0
  %1247 = vmatprep.subr.mxu0 0.0
  %1248 = vmatpush1.msra.mxu0 0.0
  %1249 = vmatprep.subr.mxu0 0.0
  %1250 = vmatpush1.msra.mxu0 0.0
  %1251 = vmatprep.subr.mxu0 0.0
  %1252 = vmatpush1.msra.mxu0 0.0
  %1253 = vmatprep.subr.mxu0 0.0
  %1254 = vmatpush1.msra.mxu0 0.0
  %1255 = vmatprep.subr.mxu0 0.0
  %1256 = vmatpush1.msra.mxu0 0.0
  %1257 = vmatprep.subr.mxu0 0.0
  %1258 = vmatpush1.msra.mxu0 0.0
  %1259 = vmatprep.subr.mxu0 0.0
  %1260 = vmatpush1.msra.mxu0 0.0
  %1261 = vmatprep.subr.mxu0 0.0
  %1262 = vmatpush1.msra.mxu0 0.0
  %1263 = vmatprep.subr.mxu0 0.0
  %1264 = vmatpush1.msra.mxu0 0.0
  %1265 = vmatprep.subr.mxu0 0.0
  %1266 = vmatpush1.msra.mxu0 0.0
  %1267 = vmatprep.subr.mxu0 0.0
  %1268 = vmatpush1.msra.mxu0 0.0
  %1269 = vmatprep.subr.mxu0 0.0
  %1270 = vmatpush1.msra.mxu0 0.0
  %1271 = vmatprep.mubr.f32.mxu0 0.0
  %1272 = vmatmul.mubr.f32.gmra.mrb[0].mxu0 %v1205
  %v1273 = vpop.f32.mrb[0].mxu0
  %v1274 = vadd.f32 0.0, %v1273
  %v1275 = vpop.f32.mrb[0].mxu0
  %v1276 = vadd.f32 0.0, %v1275
  %1277 = vdwg.mxu0
  %1278 = vmatprep.subr.mxu0 %v1199
  %1279 = vmatpush1.msra.mxu0 %v1198
  %1280 = vmatprep.subr.mxu0 0.0
  %1281 = vmatpush1.msra.mxu0 0.0
  %1282 = vmatprep.subr.mxu0 0.0
  %1283 = vmatpush1.msra.mxu0 0.0
  %1284 = vmatprep.subr.mxu0 0.0
  %1285 = vmatpush1.msra.mxu0 0.0
  %1286 = vmatprep.subr.mxu0 0.0
  %1287 = vmatpush1.msra.mxu0 0.0
  %1288 = vmatprep.subr.mxu0 0.0
  %1289 = vmatpush1.msra.mxu0 0.0
  %1290 = vmatprep.subr.mxu0 0.0
  %1291 = vmatpush1.msra.mxu0 0.0
  %1292 = vmatprep.subr.mxu0 0.0
  %1293 = vmatpush1.msra.mxu0 0.0
  %1294 = vmatprep.subr.mxu0 0.0
  %1295 = vmatpush1.msra.mxu0 0.0
  %1296 = vmatprep.subr.mxu0 0.0
  %1297 = vmatpush1.msra.mxu0 0.0
  %1298 = vmatprep.subr.mxu0 0.0
  %1299 = vmatpush1.msra.mxu0 0.0
  %1300 = vmatprep.subr.mxu0 0.0
  %1301 = vmatpush1.msra.mxu0 0.0
  %1302 = vmatprep.subr.mxu0 0.0
  %1303 = vmatpush1.msra.mxu0 0.0
  %1304 = vmatprep.subr.mxu0 0.0
  %1305 = vmatpush1.msra.mxu0 0.0
  %1306 = vmatprep.subr.mxu0 0.0
  %1307 = vmatpush1.msra.mxu0 0.0
  %1308 = vmatprep.subr.mxu0 0.0
  %1309 = vmatpush1.msra.mxu0 0.0
  %1310 = vmatprep.subr.mxu0 0.0
  %1311 = vmatpush1.msra.mxu0 0.0
  %1312 = vmatprep.subr.mxu0 0.0
  %1313 = vmatpush1.msra.mxu0 0.0
  %1314 = vmatprep.subr.mxu0 0.0
  %1315 = vmatpush1.msra.mxu0 0.0
  %1316 = vmatprep.subr.mxu0 0.0
  %1317 = vmatpush1.msra.mxu0 0.0
  %1318 = vmatprep.subr.mxu0 0.0
  %1319 = vmatpush1.msra.mxu0 0.0
  %1320 = vmatprep.subr.mxu0 0.0
  %1321 = vmatpush1.msra.mxu0 0.0
  %1322 = vmatprep.subr.mxu0 0.0
  %1323 = vmatpush1.msra.mxu0 0.0
  %1324 = vmatprep.subr.mxu0 0.0
  %1325 = vmatpush1.msra.mxu0 0.0
  %1326 = vmatprep.subr.mxu0 0.0
  %1327 = vmatpush1.msra.mxu0 0.0
  %1328 = vmatprep.subr.mxu0 0.0
  %1329 = vmatpush1.msra.mxu0 0.0
  %1330 = vmatprep.subr.mxu0 0.0
  %1331 = vmatpush1.msra.mxu0 0.0
  %1332 = vmatprep.subr.mxu0 0.0
  %1333 = vmatpush1.msra.mxu0 0.0
  %1334 = vmatprep.subr.mxu0 0.0
  %1335 = vmatpush1.msra.mxu0 0.0
  %1336 = vmatprep.subr.mxu0 0.0
  %1337 = vmatpush1.msra.mxu0 0.0
  %1338 = vmatprep.subr.mxu0 0.0
  %1339 = vmatpush1.msra.mxu0 0.0
  %1340 = vmatprep.subr.mxu0 0.0
  %1341 = vmatpush1.msra.mxu0 0.0
  %1342 = vmatprep.mubr.f32.mxu0 0.0
  %1343 = vmatmul.mubr.f32.gmra.mrb[0].mxu0 %v1205
  %v1344 = vpop.f32.mrb[0].mxu0
  %v1345 = vadd.f32 0.0, %v1344
  %v1346 = vpop.f32.mrb[0].mxu0
  %v1347 = vadd.f32 0.0, %v1346
  %1348 = vdwg.mxu0
  %v1349 = vadd.f32 %v1179, %v1274
  %v1350 = vadd.f32 %v1180, %v1276
  %v1351 = vadd.f32 %v1181, %v1345
  %v1352 = vadd.f32 %v1182, %v1347
  %s1353 = scalar_lea.vmem %s1, 64
  %v1354 = vld [vmem:[%s1353] sm:$0xff]
  %1355 = vrot.lane.b32.xlu0 %v833, 85
  %v1356 = vpop.permute.xlu0 %1355
  %1357 = vrot.lane.b32.xlu0 %v834, 85
  %v1358 = vpop.permute.xlu0 %1357
  %1359 = vrot.lane.b32.xlu0 %v835, 85
  %v1360 = vpop.permute.xlu0 %1359
  %1361 = vrot.lane.b32.xlu0 %v836, 85
  %v1362 = vpop.permute.xlu0 %1361
  %1363 = vrot.lane.b32.xlu0 %v837, 85
  %v1364 = vpop.permute.xlu0 %1363
  %vm1365 = vcmask 695296
  %v1366 = vsel %vm1365, %v1356, %v1358
  %v1367 = vsel %vm1365, %v1358, %v1360
  %v1368 = vsel %vm1365, %v1360, %v1362
  %v1369 = vsel %vm1365, %v1362, %v1364
  %v1375 = vsel %vm41, %v1354, 0
  %1377 = vmatprep.subr.mxu0 %v1367
  %1378 = vmatpush1.msra.mxu0 %v1366
  %1379 = vmatprep.subr.mxu0 0.0
  %1380 = vmatpush1.msra.mxu0 0.0
  %1381 = vmatprep.subr.mxu0 0.0
  %1382 = vmatpush1.msra.mxu0 0.0
  %1383 = vmatprep.subr.mxu0 0.0
  %1384 = vmatpush1.msra.mxu0 0.0
  %1385 = vmatprep.subr.mxu0 0.0
  %1386 = vmatpush1.msra.mxu0 0.0
  %1387 = vmatprep.subr.mxu0 0.0
  %1388 = vmatpush1.msra.mxu0 0.0
  %1389 = vmatprep.subr.mxu0 0.0
  %1390 = vmatpush1.msra.mxu0 0.0
  %1391 = vmatprep.subr.mxu0 0.0
  %1392 = vmatpush1.msra.mxu0 0.0
  %1393 = vmatprep.subr.mxu0 0.0
  %1394 = vmatpush1.msra.mxu0 0.0
  %1395 = vmatprep.subr.mxu0 0.0
  %1396 = vmatpush1.msra.mxu0 0.0
  %1397 = vmatprep.subr.mxu0 0.0
  %1398 = vmatpush1.msra.mxu0 0.0
  %1399 = vmatprep.subr.mxu0 0.0
  %1400 = vmatpush1.msra.mxu0 0.0
  %1401 = vmatprep.subr.mxu0 0.0
  %1402 = vmatpush1.msra.mxu0 0.0
  %1403 = vmatprep.subr.mxu0 0.0
  %1404 = vmatpush1.msra.mxu0 0.0
  %1405 = vmatprep.subr.mxu0 0.0
  %1406 = vmatpush1.msra.mxu0 0.0
  %1407 = vmatprep.subr.mxu0 0.0
  %1408 = vmatpush1.msra.mxu0 0.0
  %1409 = vmatprep.subr.mxu0 0.0
  %1410 = vmatpush1.msra.mxu0 0.0
  %1411 = vmatprep.subr.mxu0 0.0
  %1412 = vmatpush1.msra.mxu0 0.0
  %1413 = vmatprep.subr.mxu0 0.0
  %1414 = vmatpush1.msra.mxu0 0.0
  %1415 = vmatprep.subr.mxu0 0.0
  %1416 = vmatpush1.msra.mxu0 0.0
  %1417 = vmatprep.subr.mxu0 0.0
  %1418 = vmatpush1.msra.mxu0 0.0
  %1419 = vmatprep.subr.mxu0 0.0
  %1420 = vmatpush1.msra.mxu0 0.0
  %1421 = vmatprep.subr.mxu0 0.0
  %1422 = vmatpush1.msra.mxu0 0.0
  %1423 = vmatprep.subr.mxu0 0.0
  %1424 = vmatpush1.msra.mxu0 0.0
  %1425 = vmatprep.subr.mxu0 0.0
  %1426 = vmatpush1.msra.mxu0 0.0
  %1427 = vmatprep.subr.mxu0 0.0
  %1428 = vmatpush1.msra.mxu0 0.0
  %1429 = vmatprep.subr.mxu0 0.0
  %1430 = vmatpush1.msra.mxu0 0.0
  %1431 = vmatprep.subr.mxu0 0.0
  %1432 = vmatpush1.msra.mxu0 0.0
  %1433 = vmatprep.subr.mxu0 0.0
  %1434 = vmatpush1.msra.mxu0 0.0
  %1435 = vmatprep.subr.mxu0 0.0
  %1436 = vmatpush1.msra.mxu0 0.0
  %1437 = vmatprep.subr.mxu0 0.0
  %1438 = vmatpush1.msra.mxu0 0.0
  %1439 = vmatprep.subr.mxu0 0.0
  %1440 = vmatpush1.msra.mxu0 0.0
  %1441 = vmatprep.mubr.f32.mxu0 0.0
  %1442 = vmatmul.mubr.f32.gmra.mrb[0].mxu0 %v1375
  %v1443 = vpop.f32.mrb[0].mxu0
  %v1444 = vadd.f32 0.0, %v1443
  %v1445 = vpop.f32.mrb[0].mxu0
  %v1446 = vadd.f32 0.0, %v1445
  %1447 = vdwg.mxu0
  %1448 = vmatprep.subr.mxu0 %v1369
  %1449 = vmatpush1.msra.mxu0 %v1368
  %1450 = vmatprep.subr.mxu0 0.0
  %1451 = vmatpush1.msra.mxu0 0.0
  %1452 = vmatprep.subr.mxu0 0.0
  %1453 = vmatpush1.msra.mxu0 0.0
  %1454 = vmatprep.subr.mxu0 0.0
  %1455 = vmatpush1.msra.mxu0 0.0
  %1456 = vmatprep.subr.mxu0 0.0
  %1457 = vmatpush1.msra.mxu0 0.0
  %1458 = vmatprep.subr.mxu0 0.0
  %1459 = vmatpush1.msra.mxu0 0.0
  %1460 = vmatprep.subr.mxu0 0.0
  %1461 = vmatpush1.msra.mxu0 0.0
  %1462 = vmatprep.subr.mxu0 0.0
  %1463 = vmatpush1.msra.mxu0 0.0
  %1464 = vmatprep.subr.mxu0 0.0
  %1465 = vmatpush1.msra.mxu0 0.0
  %1466 = vmatprep.subr.mxu0 0.0
  %1467 = vmatpush1.msra.mxu0 0.0
  %1468 = vmatprep.subr.mxu0 0.0
  %1469 = vmatpush1.msra.mxu0 0.0
  %1470 = vmatprep.subr.mxu0 0.0
  %1471 = vmatpush1.msra.mxu0 0.0
  %1472 = vmatprep.subr.mxu0 0.0
  %1473 = vmatpush1.msra.mxu0 0.0
  %1474 = vmatprep.subr.mxu0 0.0
  %1475 = vmatpush1.msra.mxu0 0.0
  %1476 = vmatprep.subr.mxu0 0.0
  %1477 = vmatpush1.msra.mxu0 0.0
  %1478 = vmatprep.subr.mxu0 0.0
  %1479 = vmatpush1.msra.mxu0 0.0
  %1480 = vmatprep.subr.mxu0 0.0
  %1481 = vmatpush1.msra.mxu0 0.0
  %1482 = vmatprep.subr.mxu0 0.0
  %1483 = vmatpush1.msra.mxu0 0.0
  %1484 = vmatprep.subr.mxu0 0.0
  %1485 = vmatpush1.msra.mxu0 0.0
  %1486 = vmatprep.subr.mxu0 0.0
  %1487 = vmatpush1.msra.mxu0 0.0
  %1488 = vmatprep.subr.mxu0 0.0
  %1489 = vmatpush1.msra.mxu0 0.0
  %1490 = vmatprep.subr.mxu0 0.0
  %1491 = vmatpush1.msra.mxu0 0.0
  %1492 = vmatprep.subr.mxu0 0.0
  %1493 = vmatpush1.msra.mxu0 0.0
  %1494 = vmatprep.subr.mxu0 0.0
  %1495 = vmatpush1.msra.mxu0 0.0
  %1496 = vmatprep.subr.mxu0 0.0
  %1497 = vmatpush1.msra.mxu0 0.0
  %1498 = vmatprep.subr.mxu0 0.0
  %1499 = vmatpush1.msra.mxu0 0.0
  %1500 = vmatprep.subr.mxu0 0.0
  %1501 = vmatpush1.msra.mxu0 0.0
  %1502 = vmatprep.subr.mxu0 0.0
  %1503 = vmatpush1.msra.mxu0 0.0
  %1504 = vmatprep.subr.mxu0 0.0
  %1505 = vmatpush1.msra.mxu0 0.0
  %1506 = vmatprep.subr.mxu0 0.0
  %1507 = vmatpush1.msra.mxu0 0.0
  %1508 = vmatprep.subr.mxu0 0.0
  %1509 = vmatpush1.msra.mxu0 0.0
  %1510 = vmatprep.subr.mxu0 0.0
  %1511 = vmatpush1.msra.mxu0 0.0
  %1512 = vmatprep.mubr.f32.mxu0 0.0
  %1513 = vmatmul.mubr.f32.gmra.mrb[0].mxu0 %v1375
  %v1514 = vpop.f32.mrb[0].mxu0
  %v1515 = vadd.f32 0.0, %v1514
  %v1516 = vpop.f32.mrb[0].mxu0
  %v1517 = vadd.f32 0.0, %v1516
  %1518 = vdwg.mxu0
  %v1519 = vadd.f32 %v1349, %v1444
  %v1520 = vadd.f32 %v1350, %v1446
  %v1521 = vadd.f32 %v1351, %v1515
  %v1522 = vadd.f32 %v1352, %v1517
  %s1523 = scalar_lea.vmem %s1, 72
  %v1524 = vld [vmem:[%s1523] sm:$0xff]
  %1525 = vrot.lane.b32.xlu0 %v833, 84
  %v1526 = vpop.permute.xlu0 %1525
  %1527 = vrot.lane.b32.xlu0 %v834, 84
  %v1528 = vpop.permute.xlu0 %1527
  %1529 = vrot.lane.b32.xlu0 %v835, 84
  %v1530 = vpop.permute.xlu0 %1529
  %1531 = vrot.lane.b32.xlu0 %v836, 84
  %v1532 = vpop.permute.xlu0 %1531
  %1533 = vrot.lane.b32.xlu0 %v837, 84
  %v1534 = vpop.permute.xlu0 %1533
  %vm1535 = vcmask 687104
  %v1536 = vsel %vm1535, %v1526, %v1528
  %v1537 = vsel %vm1535, %v1528, %v1530
  %v1538 = vsel %vm1535, %v1530, %v1532
  %v1539 = vsel %vm1535, %v1532, %v1534
  %v1545 = vsel %vm41, %v1524, 0
  %1547 = vmatprep.subr.mxu0 %v1537
  %1548 = vmatpush1.msra.mxu0 %v1536
  %1549 = vmatprep.subr.mxu0 0.0
  %1550 = vmatpush1.msra.mxu0 0.0
  %1551 = vmatprep.subr.mxu0 0.0
  %1552 = vmatpush1.msra.mxu0 0.0
  %1553 = vmatprep.subr.mxu0 0.0
  %1554 = vmatpush1.msra.mxu0 0.0
  %1555 = vmatprep.subr.mxu0 0.0
  %1556 = vmatpush1.msra.mxu0 0.0
  %1557 = vmatprep.subr.mxu0 0.0
  %1558 = vmatpush1.msra.mxu0 0.0
  %1559 = vmatprep.subr.mxu0 0.0
  %1560 = vmatpush1.msra.mxu0 0.0
  %1561 = vmatprep.subr.mxu0 0.0
  %1562 = vmatpush1.msra.mxu0 0.0
  %1563 = vmatprep.subr.mxu0 0.0
  %1564 = vmatpush1.msra.mxu0 0.0
  %1565 = vmatprep.subr.mxu0 0.0
  %1566 = vmatpush1.msra.mxu0 0.0
  %1567 = vmatprep.subr.mxu0 0.0
  %1568 = vmatpush1.msra.mxu0 0.0
  %1569 = vmatprep.subr.mxu0 0.0
  %1570 = vmatpush1.msra.mxu0 0.0
  %1571 = vmatprep.subr.mxu0 0.0
  %1572 = vmatpush1.msra.mxu0 0.0
  %1573 = vmatprep.subr.mxu0 0.0
  %1574 = vmatpush1.msra.mxu0 0.0
  %1575 = vmatprep.subr.mxu0 0.0
  %1576 = vmatpush1.msra.mxu0 0.0
  %1577 = vmatprep.subr.mxu0 0.0
  %1578 = vmatpush1.msra.mxu0 0.0
  %1579 = vmatprep.subr.mxu0 0.0
  %1580 = vmatpush1.msra.mxu0 0.0
  %1581 = vmatprep.subr.mxu0 0.0
  %1582 = vmatpush1.msra.mxu0 0.0
  %1583 = vmatprep.subr.mxu0 0.0
  %1584 = vmatpush1.msra.mxu0 0.0
  %1585 = vmatprep.subr.mxu0 0.0
  %1586 = vmatpush1.msra.mxu0 0.0
  %1587 = vmatprep.subr.mxu0 0.0
  %1588 = vmatpush1.msra.mxu0 0.0
  %1589 = vmatprep.subr.mxu0 0.0
  %1590 = vmatpush1.msra.mxu0 0.0
  %1591 = vmatprep.subr.mxu0 0.0
  %1592 = vmatpush1.msra.mxu0 0.0
  %1593 = vmatprep.subr.mxu0 0.0
  %1594 = vmatpush1.msra.mxu0 0.0
  %1595 = vmatprep.subr.mxu0 0.0
  %1596 = vmatpush1.msra.mxu0 0.0
  %1597 = vmatprep.subr.mxu0 0.0
  %1598 = vmatpush1.msra.mxu0 0.0
  %1599 = vmatprep.subr.mxu0 0.0
  %1600 = vmatpush1.msra.mxu0 0.0
  %1601 = vmatprep.subr.mxu0 0.0
  %1602 = vmatpush1.msra.mxu0 0.0
  %1603 = vmatprep.subr.mxu0 0.0
  %1604 = vmatpush1.msra.mxu0 0.0
  %1605 = vmatprep.subr.mxu0 0.0
  %1606 = vmatpush1.msra.mxu0 0.0
  %1607 = vmatprep.subr.mxu0 0.0
  %1608 = vmatpush1.msra.mxu0 0.0
  %1609 = vmatprep.subr.mxu0 0.0
  %1610 = vmatpush1.msra.mxu0 0.0
  %1611 = vmatprep.mubr.f32.mxu0 0.0
  %1612 = vmatmul.mubr.f32.gmra.mrb[0].mxu0 %v1545
  %v1613 = vpop.f32.mrb[0].mxu0
  %v1614 = vadd.f32 0.0, %v1613
  %v1615 = vpop.f32.mrb[0].mxu0
  %v1616 = vadd.f32 0.0, %v1615
  %1617 = vdwg.mxu0
  %1618 = vmatprep.subr.mxu0 %v1539
  %1619 = vmatpush1.msra.mxu0 %v1538
  %1620 = vmatprep.subr.mxu0 0.0
  %1621 = vmatpush1.msra.mxu0 0.0
  %1622 = vmatprep.subr.mxu0 0.0
  %1623 = vmatpush1.msra.mxu0 0.0
  %1624 = vmatprep.subr.mxu0 0.0
  %1625 = vmatpush1.msra.mxu0 0.0
  %1626 = vmatprep.subr.mxu0 0.0
  %1627 = vmatpush1.msra.mxu0 0.0
  %1628 = vmatprep.subr.mxu0 0.0
  %1629 = vmatpush1.msra.mxu0 0.0
  %1630 = vmatprep.subr.mxu0 0.0
  %1631 = vmatpush1.msra.mxu0 0.0
  %1632 = vmatprep.subr.mxu0 0.0
  %1633 = vmatpush1.msra.mxu0 0.0
  %1634 = vmatprep.subr.mxu0 0.0
  %1635 = vmatpush1.msra.mxu0 0.0
  %1636 = vmatprep.subr.mxu0 0.0
  %1637 = vmatpush1.msra.mxu0 0.0
  %1638 = vmatprep.subr.mxu0 0.0
  %1639 = vmatpush1.msra.mxu0 0.0
  %1640 = vmatprep.subr.mxu0 0.0
  %1641 = vmatpush1.msra.mxu0 0.0
  %1642 = vmatprep.subr.mxu0 0.0
  %1643 = vmatpush1.msra.mxu0 0.0
  %1644 = vmatprep.subr.mxu0 0.0
  %1645 = vmatpush1.msra.mxu0 0.0
  %1646 = vmatprep.subr.mxu0 0.0
  %1647 = vmatpush1.msra.mxu0 0.0
  %1648 = vmatprep.subr.mxu0 0.0
  %1649 = vmatpush1.msra.mxu0 0.0
  %1650 = vmatprep.subr.mxu0 0.0
  %1651 = vmatpush1.msra.mxu0 0.0
  %1652 = vmatprep.subr.mxu0 0.0
  %1653 = vmatpush1.msra.mxu0 0.0
  %1654 = vmatprep.subr.mxu0 0.0
  %1655 = vmatpush1.msra.mxu0 0.0
  %1656 = vmatprep.subr.mxu0 0.0
  %1657 = vmatpush1.msra.mxu0 0.0
  %1658 = vmatprep.subr.mxu0 0.0
  %1659 = vmatpush1.msra.mxu0 0.0
  %1660 = vmatprep.subr.mxu0 0.0
  %1661 = vmatpush1.msra.mxu0 0.0
  %1662 = vmatprep.subr.mxu0 0.0
  %1663 = vmatpush1.msra.mxu0 0.0
  %1664 = vmatprep.subr.mxu0 0.0
  %1665 = vmatpush1.msra.mxu0 0.0
  %1666 = vmatprep.subr.mxu0 0.0
  %1667 = vmatpush1.msra.mxu0 0.0
  %1668 = vmatprep.subr.mxu0 0.0
  %1669 = vmatpush1.msra.mxu0 0.0
  %1670 = vmatprep.subr.mxu0 0.0
  %1671 = vmatpush1.msra.mxu0 0.0
  %1672 = vmatprep.subr.mxu0 0.0
  %1673 = vmatpush1.msra.mxu0 0.0
  %1674 = vmatprep.subr.mxu0 0.0
  %1675 = vmatpush1.msra.mxu0 0.0
  %1676 = vmatprep.subr.mxu0 0.0
  %1677 = vmatpush1.msra.mxu0 0.0
  %1678 = vmatprep.subr.mxu0 0.0
  %1679 = vmatpush1.msra.mxu0 0.0
  %1680 = vmatprep.subr.mxu0 0.0
  %1681 = vmatpush1.msra.mxu0 0.0
  %1682 = vmatprep.mubr.f32.mxu0 0.0
  %1683 = vmatmul.mubr.f32.gmra.mrb[0].mxu0 %v1545
  %v1684 = vpop.f32.mrb[0].mxu0
  %v1685 = vadd.f32 0.0, %v1684
  %v1686 = vpop.f32.mrb[0].mxu0
  %v1687 = vadd.f32 0.0, %v1686
  %1688 = vdwg.mxu0
  %v1689 = vadd.f32 %v1519, %v1614
  %v1690 = vadd.f32 %v1520, %v1616
  %v1691 = vadd.f32 %v1521, %v1685
  %v1692 = vadd.f32 %v1522, %v1687
  %s1693 = scalar_lea.vmem %s1, 80
  %v1694 = vld [vmem:[%s1693] sm:$0xff]
  %1695 = vrot.lane.b32.xlu0 %v833, 48
  %v1696 = vpop.permute.xlu0 %1695
  %1697 = vrot.lane.b32.xlu0 %v834, 48
  %v1698 = vpop.permute.xlu0 %1697
  %1699 = vrot.lane.b32.xlu0 %v835, 48
  %v1700 = vpop.permute.xlu0 %1699
  %1701 = vrot.lane.b32.xlu0 %v836, 48
  %v1702 = vpop.permute.xlu0 %1701
  %1703 = vrot.lane.b32.xlu0 %v837, 48
  %v1704 = vpop.permute.xlu0 %1703
  %vm1705 = vcmask 392192
  %v1706 = vsel %vm1705, %v1696, %v1698
  %v1707 = vsel %vm1705, %v1698, %v1700
  %v1708 = vsel %vm1705, %v1700, %v1702
  %v1709 = vsel %vm1705, %v1702, %v1704
  %v1715 = vsel %vm41, %v1694, 0
  %1717 = vmatprep.subr.mxu0 %v1707
  %1718 = vmatpush1.msra.mxu0 %v1706
  %1719 = vmatprep.subr.mxu0 0.0
  %1720 = vmatpush1.msra.mxu0 0.0
  %1721 = vmatprep.subr.mxu0 0.0
  %1722 = vmatpush1.msra.mxu0 0.0
  %1723 = vmatprep.subr.mxu0 0.0
  %1724 = vmatpush1.msra.mxu0 0.0
  %1725 = vmatprep.subr.mxu0 0.0
  %1726 = vmatpush1.msra.mxu0 0.0
  %1727 = vmatprep.subr.mxu0 0.0
  %1728 = vmatpush1.msra.mxu0 0.0
  %1729 = vmatprep.subr.mxu0 0.0
  %1730 = vmatpush1.msra.mxu0 0.0
  %1731 = vmatprep.subr.mxu0 0.0
  %1732 = vmatpush1.msra.mxu0 0.0
  %1733 = vmatprep.subr.mxu0 0.0
  %1734 = vmatpush1.msra.mxu0 0.0
  %1735 = vmatprep.subr.mxu0 0.0
  %1736 = vmatpush1.msra.mxu0 0.0
  %1737 = vmatprep.subr.mxu0 0.0
  %1738 = vmatpush1.msra.mxu0 0.0
  %1739 = vmatprep.subr.mxu0 0.0
  %1740 = vmatpush1.msra.mxu0 0.0
  %1741 = vmatprep.subr.mxu0 0.0
  %1742 = vmatpush1.msra.mxu0 0.0
  %1743 = vmatprep.subr.mxu0 0.0
  %1744 = vmatpush1.msra.mxu0 0.0
  %1745 = vmatprep.subr.mxu0 0.0
  %1746 = vmatpush1.msra.mxu0 0.0
  %1747 = vmatprep.subr.mxu0 0.0
  %1748 = vmatpush1.msra.mxu0 0.0
  %1749 = vmatprep.subr.mxu0 0.0
  %1750 = vmatpush1.msra.mxu0 0.0
  %1751 = vmatprep.subr.mxu0 0.0
  %1752 = vmatpush1.msra.mxu0 0.0
  %1753 = vmatprep.subr.mxu0 0.0
  %1754 = vmatpush1.msra.mxu0 0.0
  %1755 = vmatprep.subr.mxu0 0.0
  %1756 = vmatpush1.msra.mxu0 0.0
  %1757 = vmatprep.subr.mxu0 0.0
  %1758 = vmatpush1.msra.mxu0 0.0
  %1759 = vmatprep.subr.mxu0 0.0
  %1760 = vmatpush1.msra.mxu0 0.0
  %1761 = vmatprep.subr.mxu0 0.0
  %1762 = vmatpush1.msra.mxu0 0.0
  %1763 = vmatprep.subr.mxu0 0.0
  %1764 = vmatpush1.msra.mxu0 0.0
  %1765 = vmatprep.subr.mxu0 0.0
  %1766 = vmatpush1.msra.mxu0 0.0
  %1767 = vmatprep.subr.mxu0 0.0
  %1768 = vmatpush1.msra.mxu0 0.0
  %1769 = vmatprep.subr.mxu0 0.0
  %1770 = vmatpush1.msra.mxu0 0.0
  %1771 = vmatprep.subr.mxu0 0.0
  %1772 = vmatpush1.msra.mxu0 0.0
  %1773 = vmatprep.subr.mxu0 0.0
  %1774 = vmatpush1.msra.mxu0 0.0
  %1775 = vmatprep.subr.mxu0 0.0
  %1776 = vmatpush1.msra.mxu0 0.0
  %1777 = vmatprep.subr.mxu0 0.0
  %1778 = vmatpush1.msra.mxu0 0.0
  %1779 = vmatprep.subr.mxu0 0.0
  %1780 = vmatpush1.msra.mxu0 0.0
  %1781 = vmatprep.mubr.f32.mxu0 0.0
  %1782 = vmatmul.mubr.f32.gmra.mrb[0].mxu0 %v1715
  %v1783 = vpop.f32.mrb[0].mxu0
  %v1784 = vadd.f32 0.0, %v1783
  %v1785 = vpop.f32.mrb[0].mxu0
  %v1786 = vadd.f32 0.0, %v1785
  %1787 = vdwg.mxu0
  %1788 = vmatprep.subr.mxu0 %v1709
  %1789 = vmatpush1.msra.mxu0 %v1708
  %1790 = vmatprep.subr.mxu0 0.0
  %1791 = vmatpush1.msra.mxu0 0.0
  %1792 = vmatprep.subr.mxu0 0.0
  %1793 = vmatpush1.msra.mxu0 0.0
  %1794 = vmatprep.subr.mxu0 0.0
  %1795 = vmatpush1.msra.mxu0 0.0
  %1796 = vmatprep.subr.mxu0 0.0
  %1797 = vmatpush1.msra.mxu0 0.0
  %1798 = vmatprep.subr.mxu0 0.0
  %1799 = vmatpush1.msra.mxu0 0.0
  %1800 = vmatprep.subr.mxu0 0.0
  %1801 = vmatpush1.msra.mxu0 0.0
  %1802 = vmatprep.subr.mxu0 0.0
  %1803 = vmatpush1.msra.mxu0 0.0
  %1804 = vmatprep.subr.mxu0 0.0
  %1805 = vmatpush1.msra.mxu0 0.0
  %1806 = vmatprep.subr.mxu0 0.0
  %1807 = vmatpush1.msra.mxu0 0.0
  %1808 = vmatprep.subr.mxu0 0.0
  %1809 = vmatpush1.msra.mxu0 0.0
  %1810 = vmatprep.subr.mxu0 0.0
  %1811 = vmatpush1.msra.mxu0 0.0
  %1812 = vmatprep.subr.mxu0 0.0
  %1813 = vmatpush1.msra.mxu0 0.0
  %1814 = vmatprep.subr.mxu0 0.0
  %1815 = vmatpush1.msra.mxu0 0.0
  %1816 = vmatprep.subr.mxu0 0.0
  %1817 = vmatpush1.msra.mxu0 0.0
  %1818 = vmatprep.subr.mxu0 0.0
  %1819 = vmatpush1.msra.mxu0 0.0
  %1820 = vmatprep.subr.mxu0 0.0
  %1821 = vmatpush1.msra.mxu0 0.0
  %1822 = vmatprep.subr.mxu0 0.0
  %1823 = vmatpush1.msra.mxu0 0.0
  %1824 = vmatprep.subr.mxu0 0.0
  %1825 = vmatpush1.msra.mxu0 0.0
  %1826 = vmatprep.subr.mxu0 0.0
  %1827 = vmatpush1.msra.mxu0 0.0
  %1828 = vmatprep.subr.mxu0 0.0
  %1829 = vmatpush1.msra.mxu0 0.0
  %1830 = vmatprep.subr.mxu0 0.0
  %1831 = vmatpush1.msra.mxu0 0.0
  %1832 = vmatprep.subr.mxu0 0.0
  %1833 = vmatpush1.msra.mxu0 0.0
  %1834 = vmatprep.subr.mxu0 0.0
  %1835 = vmatpush1.msra.mxu0 0.0
  %1836 = vmatprep.subr.mxu0 0.0
  %1837 = vmatpush1.msra.mxu0 0.0
  %1838 = vmatprep.subr.mxu0 0.0
  %1839 = vmatpush1.msra.mxu0 0.0
  %1840 = vmatprep.subr.mxu0 0.0
  %1841 = vmatpush1.msra.mxu0 0.0
  %1842 = vmatprep.subr.mxu0 0.0
  %1843 = vmatpush1.msra.mxu0 0.0
  %1844 = vmatprep.subr.mxu0 0.0
  %1845 = vmatpush1.msra.mxu0 0.0
  %1846 = vmatprep.subr.mxu0 0.0
  %1847 = vmatpush1.msra.mxu0 0.0
  %1848 = vmatprep.subr.mxu0 0.0
  %1849 = vmatpush1.msra.mxu0 0.0
  %1850 = vmatprep.subr.mxu0 0.0
  %1851 = vmatpush1.msra.mxu0 0.0
  %1852 = vmatprep.mubr.f32.mxu0 0.0
  %1853 = vmatmul.mubr.f32.gmra.mrb[0].mxu0 %v1715
  %v1854 = vpop.f32.mrb[0].mxu0
  %v1855 = vadd.f32 0.0, %v1854
  %v1856 = vpop.f32.mrb[0].mxu0
  %v1857 = vadd.f32 0.0, %v1856
  %1858 = vdwg.mxu0
  %v1859 = vadd.f32 %v1689, %v1784
  %v1860 = vadd.f32 %v1690, %v1786
  %v1861 = vadd.f32 %v1691, %v1855
  %v1862 = vadd.f32 %v1692, %v1857
  %s1863 = scalar_lea.vmem %s1, 88
  %v1864 = vld [vmem:[%s1863] sm:$0xff]
  %1865 = vrot.lane.b32.xlu0 %v833, 47
  %v1866 = vpop.permute.xlu0 %1865
  %1867 = vrot.lane.b32.xlu0 %v834, 47
  %v1868 = vpop.permute.xlu0 %1867
  %1869 = vrot.lane.b32.xlu0 %v835, 47
  %v1870 = vpop.permute.xlu0 %1869
  %1871 = vrot.lane.b32.xlu0 %v836, 47
  %v1872 = vpop.permute.xlu0 %1871
  %1873 = vrot.lane.b32.xlu0 %v837, 47
  %v1874 = vpop.permute.xlu0 %1873
  %vm1875 = vcmask 384000
  %v1876 = vsel %vm1875, %v1866, %v1868
  %v1877 = vsel %vm1875, %v1868, %v1870
  %v1878 = vsel %vm1875, %v1870, %v1872
  %v1879 = vsel %vm1875, %v1872, %v1874
  %v1885 = vsel %vm41, %v1864, 0
  %1887 = vmatprep.subr.mxu0 %v1877
  %1888 = vmatpush1.msra.mxu0 %v1876
  %1889 = vmatprep.subr.mxu0 0.0
  %1890 = vmatpush1.msra.mxu0 0.0
  %1891 = vmatprep.subr.mxu0 0.0
  %1892 = vmatpush1.msra.mxu0 0.0
  %1893 = vmatprep.subr.mxu0 0.0
  %1894 = vmatpush1.msra.mxu0 0.0
  %1895 = vmatprep.subr.mxu0 0.0
  %1896 = vmatpush1.msra.mxu0 0.0
  %1897 = vmatprep.subr.mxu0 0.0
  %1898 = vmatpush1.msra.mxu0 0.0
  %1899 = vmatprep.subr.mxu0 0.0
  %1900 = vmatpush1.msra.mxu0 0.0
  %1901 = vmatprep.subr.mxu0 0.0
  %1902 = vmatpush1.msra.mxu0 0.0
  %1903 = vmatprep.subr.mxu0 0.0
  %1904 = vmatpush1.msra.mxu0 0.0
  %1905 = vmatprep.subr.mxu0 0.0
  %1906 = vmatpush1.msra.mxu0 0.0
  %1907 = vmatprep.subr.mxu0 0.0
  %1908 = vmatpush1.msra.mxu0 0.0
  %1909 = vmatprep.subr.mxu0 0.0
  %1910 = vmatpush1.msra.mxu0 0.0
  %1911 = vmatprep.subr.mxu0 0.0
  %1912 = vmatpush1.msra.mxu0 0.0
  %1913 = vmatprep.subr.mxu0 0.0
  %1914 = vmatpush1.msra.mxu0 0.0
  %1915 = vmatprep.subr.mxu0 0.0
  %1916 = vmatpush1.msra.mxu0 0.0
  %1917 = vmatprep.subr.mxu0 0.0
  %1918 = vmatpush1.msra.mxu0 0.0
  %1919 = vmatprep.subr.mxu0 0.0
  %1920 = vmatpush1.msra.mxu0 0.0
  %1921 = vmatprep.subr.mxu0 0.0
  %1922 = vmatpush1.msra.mxu0 0.0
  %1923 = vmatprep.subr.mxu0 0.0
  %1924 = vmatpush1.msra.mxu0 0.0
  %1925 = vmatprep.subr.mxu0 0.0
  %1926 = vmatpush1.msra.mxu0 0.0
  %1927 = vmatprep.subr.mxu0 0.0
  %1928 = vmatpush1.msra.mxu0 0.0
  %1929 = vmatprep.subr.mxu0 0.0
  %1930 = vmatpush1.msra.mxu0 0.0
  %1931 = vmatprep.subr.mxu0 0.0
  %1932 = vmatpush1.msra.mxu0 0.0
  %1933 = vmatprep.subr.mxu0 0.0
  %1934 = vmatpush1.msra.mxu0 0.0
  %1935 = vmatprep.subr.mxu0 0.0
  %1936 = vmatpush1.msra.mxu0 0.0
  %1937 = vmatprep.subr.mxu0 0.0
  %1938 = vmatpush1.msra.mxu0 0.0
  %1939 = vmatprep.subr.mxu0 0.0
  %1940 = vmatpush1.msra.mxu0 0.0
  %1941 = vmatprep.subr.mxu0 0.0
  %1942 = vmatpush1.msra.mxu0 0.0
  %1943 = vmatprep.subr.mxu0 0.0
  %1944 = vmatpush1.msra.mxu0 0.0
  %1945 = vmatprep.subr.mxu0 0.0
  %1946 = vmatpush1.msra.mxu0 0.0
  %1947 = vmatprep.subr.mxu0 0.0
  %1948 = vmatpush1.msra.mxu0 0.0
  %1949 = vmatprep.subr.mxu0 0.0
  %1950 = vmatpush1.msra.mxu0 0.0
  %1951 = vmatprep.mubr.f32.mxu0 0.0
  %1952 = vmatmul.mubr.f32.gmra.mrb[0].mxu0 %v1885
  %v1953 = vpop.f32.mrb[0].mxu0
  %v1954 = vadd.f32 0.0, %v1953
  %v1955 = vpop.f32.mrb[0].mxu0
  %v1956 = vadd.f32 0.0, %v1955
  %1957 = vdwg.mxu0
  %1958 = vmatprep.subr.mxu0 %v1879
  %1959 = vmatpush1.msra.mxu0 %v1878
  %1960 = vmatprep.subr.mxu0 0.0
  %1961 = vmatpush1.msra.mxu0 0.0
  %1962 = vmatprep.subr.mxu0 0.0
  %1963 = vmatpush1.msra.mxu0 0.0
  %1964 = vmatprep.subr.mxu0 0.0
  %1965 = vmatpush1.msra.mxu0 0.0
  %1966 = vmatprep.subr.mxu0 0.0
  %1967 = vmatpush1.msra.mxu0 0.0
  %1968 = vmatprep.subr.mxu0 0.0
  %1969 = vmatpush1.msra.mxu0 0.0
  %1970 = vmatprep.subr.mxu0 0.0
  %1971 = vmatpush1.msra.mxu0 0.0
  %1972 = vmatprep.subr.mxu0 0.0
  %1973 = vmatpush1.msra.mxu0 0.0
  %1974 = vmatprep.subr.mxu0 0.0
  %1975 = vmatpush1.msra.mxu0 0.0
  %1976 = vmatprep.subr.mxu0 0.0
  %1977 = vmatpush1.msra.mxu0 0.0
  %1978 = vmatprep.subr.mxu0 0.0
  %1979 = vmatpush1.msra.mxu0 0.0
  %1980 = vmatprep.subr.mxu0 0.0
  %1981 = vmatpush1.msra.mxu0 0.0
  %1982 = vmatprep.subr.mxu0 0.0
  %1983 = vmatpush1.msra.mxu0 0.0
  %1984 = vmatprep.subr.mxu0 0.0
  %1985 = vmatpush1.msra.mxu0 0.0
  %1986 = vmatprep.subr.mxu0 0.0
  %1987 = vmatpush1.msra.mxu0 0.0
  %1988 = vmatprep.subr.mxu0 0.0
  %1989 = vmatpush1.msra.mxu0 0.0
  %1990 = vmatprep.subr.mxu0 0.0
  %1991 = vmatpush1.msra.mxu0 0.0
  %1992 = vmatprep.subr.mxu0 0.0
  %1993 = vmatpush1.msra.mxu0 0.0
  %1994 = vmatprep.subr.mxu0 0.0
  %1995 = vmatpush1.msra.mxu0 0.0
  %1996 = vmatprep.subr.mxu0 0.0
  %1997 = vmatpush1.msra.mxu0 0.0
  %1998 = vmatprep.subr.mxu0 0.0
  %1999 = vmatpush1.msra.mxu0 0.0
  %2000 = vmatprep.subr.mxu0 0.0
  %2001 = vmatpush1.msra.mxu0 0.0
  %2002 = vmatprep.subr.mxu0 0.0
  %2003 = vmatpush1.msra.mxu0 0.0
  %2004 = vmatprep.subr.mxu0 0.0
  %2005 = vmatpush1.msra.mxu0 0.0
  %2006 = vmatprep.subr.mxu0 0.0
  %2007 = vmatpush1.msra.mxu0 0.0
  %2008 = vmatprep.subr.mxu0 0.0
  %2009 = vmatpush1.msra.mxu0 0.0
  %2010 = vmatprep.subr.mxu0 0.0
  %2011 = vmatpush1.msra.mxu0 0.0
  %2012 = vmatprep.subr.mxu0 0.0
  %2013 = vmatpush1.msra.mxu0 0.0
  %2014 = vmatprep.subr.mxu0 0.0
  %2015 = vmatpush1.msra.mxu0 0.0
  %2016 = vmatprep.subr.mxu0 0.0
  %2017 = vmatpush1.msra.mxu0 0.0
  %2018 = vmatprep.subr.mxu0 0.0
  %2019 = vmatpush1.msra.mxu0 0.0
  %2020 = vmatprep.subr.mxu0 0.0
  %2021 = vmatpush1.msra.mxu0 0.0
  %2022 = vmatprep.mubr.f32.mxu0 0.0
  %2023 = vmatmul.mubr.f32.gmra.mrb[0].mxu0 %v1885
  %v2024 = vpop.f32.mrb[0].mxu0
  %v2025 = vadd.f32 0.0, %v2024
  %v2026 = vpop.f32.mrb[0].mxu0
  %v2027 = vadd.f32 0.0, %v2026
  %2028 = vdwg.mxu0
  %v2029 = vadd.f32 %v1859, %v1954
  %v2030 = vadd.f32 %v1860, %v1956
  %v2031 = vadd.f32 %v1861, %v2025
  %v2032 = vadd.f32 %v1862, %v2027
  %s2033 = scalar_lea.vmem %s1, 96
  %v2034 = vld [vmem:[%s2033] sm:$0xff]
  %2035 = vrot.lane.b32.xlu0 %v833, 46
  %v2036 = vpop.permute.xlu0 %2035
  %2037 = vrot.lane.b32.xlu0 %v834, 46
  %v2038 = vpop.permute.xlu0 %2037
  %2039 = vrot.lane.b32.xlu0 %v835, 46
  %v2040 = vpop.permute.xlu0 %2039
  %2041 = vrot.lane.b32.xlu0 %v836, 46
  %v2042 = vpop.permute.xlu0 %2041
  %2043 = vrot.lane.b32.xlu0 %v837, 46
  %v2044 = vpop.permute.xlu0 %2043
  %vm2045 = vcmask 375808
  %v2046 = vsel %vm2045, %v2036, %v2038
  %v2047 = vsel %vm2045, %v2038, %v2040
  %v2048 = vsel %vm2045, %v2040, %v2042
  %v2049 = vsel %vm2045, %v2042, %v2044
  %v2055 = vsel %vm41, %v2034, 0
  %2057 = vmatprep.subr.mxu0 %v2047
  %2058 = vmatpush1.msra.mxu0 %v2046
  %2059 = vmatprep.subr.mxu0 0.0
  %2060 = vmatpush1.msra.mxu0 0.0
  %2061 = vmatprep.subr.mxu0 0.0
  %2062 = vmatpush1.msra.mxu0 0.0
  %2063 = vmatprep.subr.mxu0 0.0
  %2064 = vmatpush1.msra.mxu0 0.0
  %2065 = vmatprep.subr.mxu0 0.0
  %2066 = vmatpush1.msra.mxu0 0.0
  %2067 = vmatprep.subr.mxu0 0.0
  %2068 = vmatpush1.msra.mxu0 0.0
  %2069 = vmatprep.subr.mxu0 0.0
  %2070 = vmatpush1.msra.mxu0 0.0
  %2071 = vmatprep.subr.mxu0 0.0
  %2072 = vmatpush1.msra.mxu0 0.0
  %2073 = vmatprep.subr.mxu0 0.0
  %2074 = vmatpush1.msra.mxu0 0.0
  %2075 = vmatprep.subr.mxu0 0.0
  %2076 = vmatpush1.msra.mxu0 0.0
  %2077 = vmatprep.subr.mxu0 0.0
  %2078 = vmatpush1.msra.mxu0 0.0
  %2079 = vmatprep.subr.mxu0 0.0
  %2080 = vmatpush1.msra.mxu0 0.0
  %2081 = vmatprep.subr.mxu0 0.0
  %2082 = vmatpush1.msra.mxu0 0.0
  %2083 = vmatprep.subr.mxu0 0.0
  %2084 = vmatpush1.msra.mxu0 0.0
  %2085 = vmatprep.subr.mxu0 0.0
  %2086 = vmatpush1.msra.mxu0 0.0
  %2087 = vmatprep.subr.mxu0 0.0
  %2088 = vmatpush1.msra.mxu0 0.0
  %2089 = vmatprep.subr.mxu0 0.0
  %2090 = vmatpush1.msra.mxu0 0.0
  %2091 = vmatprep.subr.mxu0 0.0
  %2092 = vmatpush1.msra.mxu0 0.0
  %2093 = vmatprep.subr.mxu0 0.0
  %2094 = vmatpush1.msra.mxu0 0.0
  %2095 = vmatprep.subr.mxu0 0.0
  %2096 = vmatpush1.msra.mxu0 0.0
  %2097 = vmatprep.subr.mxu0 0.0
  %2098 = vmatpush1.msra.mxu0 0.0
  %2099 = vmatprep.subr.mxu0 0.0
  %2100 = vmatpush1.msra.mxu0 0.0
  %2101 = vmatprep.subr.mxu0 0.0
  %2102 = vmatpush1.msra.mxu0 0.0
  %2103 = vmatprep.subr.mxu0 0.0
  %2104 = vmatpush1.msra.mxu0 0.0
  %2105 = vmatprep.subr.mxu0 0.0
  %2106 = vmatpush1.msra.mxu0 0.0
  %2107 = vmatprep.subr.mxu0 0.0
  %2108 = vmatpush1.msra.mxu0 0.0
  %2109 = vmatprep.subr.mxu0 0.0
  %2110 = vmatpush1.msra.mxu0 0.0
  %2111 = vmatprep.subr.mxu0 0.0
  %2112 = vmatpush1.msra.mxu0 0.0
  %2113 = vmatprep.subr.mxu0 0.0
  %2114 = vmatpush1.msra.mxu0 0.0
  %2115 = vmatprep.subr.mxu0 0.0
  %2116 = vmatpush1.msra.mxu0 0.0
  %2117 = vmatprep.subr.mxu0 0.0
  %2118 = vmatpush1.msra.mxu0 0.0
  %2119 = vmatprep.subr.mxu0 0.0
  %2120 = vmatpush1.msra.mxu0 0.0
  %2121 = vmatprep.mubr.f32.mxu0 0.0
  %2122 = vmatmul.mubr.f32.gmra.mrb[0].mxu0 %v2055
  %v2123 = vpop.f32.mrb[0].mxu0
  %v2124 = vadd.f32 0.0, %v2123
  %v2125 = vpop.f32.mrb[0].mxu0
  %v2126 = vadd.f32 0.0, %v2125
  %2127 = vdwg.mxu0
  %2128 = vmatprep.subr.mxu0 %v2049
  %2129 = vmatpush1.msra.mxu0 %v2048
  %2130 = vmatprep.subr.mxu0 0.0
  %2131 = vmatpush1.msra.mxu0 0.0
  %2132 = vmatprep.subr.mxu0 0.0
  %2133 = vmatpush1.msra.mxu0 0.0
  %2134 = vmatprep.subr.mxu0 0.0
  %2135 = vmatpush1.msra.mxu0 0.0
  %2136 = vmatprep.subr.mxu0 0.0
  %2137 = vmatpush1.msra.mxu0 0.0
  %2138 = vmatprep.subr.mxu0 0.0
  %2139 = vmatpush1.msra.mxu0 0.0
  %2140 = vmatprep.subr.mxu0 0.0
  %2141 = vmatpush1.msra.mxu0 0.0
  %2142 = vmatprep.subr.mxu0 0.0
  %2143 = vmatpush1.msra.mxu0 0.0
  %2144 = vmatprep.subr.mxu0 0.0
  %2145 = vmatpush1.msra.mxu0 0.0
  %2146 = vmatprep.subr.mxu0 0.0
  %2147 = vmatpush1.msra.mxu0 0.0
  %2148 = vmatprep.subr.mxu0 0.0
  %2149 = vmatpush1.msra.mxu0 0.0
  %2150 = vmatprep.subr.mxu0 0.0
  %2151 = vmatpush1.msra.mxu0 0.0
  %2152 = vmatprep.subr.mxu0 0.0
  %2153 = vmatpush1.msra.mxu0 0.0
  %2154 = vmatprep.subr.mxu0 0.0
  %2155 = vmatpush1.msra.mxu0 0.0
  %2156 = vmatprep.subr.mxu0 0.0
  %2157 = vmatpush1.msra.mxu0 0.0
  %2158 = vmatprep.subr.mxu0 0.0
  %2159 = vmatpush1.msra.mxu0 0.0
  %2160 = vmatprep.subr.mxu0 0.0
  %2161 = vmatpush1.msra.mxu0 0.0
  %2162 = vmatprep.subr.mxu0 0.0
  %2163 = vmatpush1.msra.mxu0 0.0
  %2164 = vmatprep.subr.mxu0 0.0
  %2165 = vmatpush1.msra.mxu0 0.0
  %2166 = vmatprep.subr.mxu0 0.0
  %2167 = vmatpush1.msra.mxu0 0.0
  %2168 = vmatprep.subr.mxu0 0.0
  %2169 = vmatpush1.msra.mxu0 0.0
  %2170 = vmatprep.subr.mxu0 0.0
  %2171 = vmatpush1.msra.mxu0 0.0
  %2172 = vmatprep.subr.mxu0 0.0
  %2173 = vmatpush1.msra.mxu0 0.0
  %2174 = vmatprep.subr.mxu0 0.0
  %2175 = vmatpush1.msra.mxu0 0.0
  %2176 = vmatprep.subr.mxu0 0.0
  %2177 = vmatpush1.msra.mxu0 0.0
  %2178 = vmatprep.subr.mxu0 0.0
  %2179 = vmatpush1.msra.mxu0 0.0
  %2180 = vmatprep.subr.mxu0 0.0
  %2181 = vmatpush1.msra.mxu0 0.0
  %2182 = vmatprep.subr.mxu0 0.0
  %2183 = vmatpush1.msra.mxu0 0.0
  %2184 = vmatprep.subr.mxu0 0.0
  %2185 = vmatpush1.msra.mxu0 0.0
  %2186 = vmatprep.subr.mxu0 0.0
  %2187 = vmatpush1.msra.mxu0 0.0
  %2188 = vmatprep.subr.mxu0 0.0
  %2189 = vmatpush1.msra.mxu0 0.0
  %2190 = vmatprep.subr.mxu0 0.0
  %2191 = vmatpush1.msra.mxu0 0.0
  %2192 = vmatprep.mubr.f32.mxu0 0.0
  %2193 = vmatmul.mubr.f32.gmra.mrb[0].mxu0 %v2055
  %v2194 = vpop.f32.mrb[0].mxu0
  %v2195 = vadd.f32 0.0, %v2194
  %v2196 = vpop.f32.mrb[0].mxu0
  %v2197 = vadd.f32 0.0, %v2196
  %2198 = vdwg.mxu0
  %v2199 = vadd.f32 %v2029, %v2124
  %v2200 = vadd.f32 %v2030, %v2126
  %v2201 = vadd.f32 %v2031, %v2195
  %v2202 = vadd.f32 %v2032, %v2197
  %s2203 = scalar_lea.vmem %s1, 104
  %v2204 = vld [vmem:[%s2203] sm:$0xff]
  %2205 = vrot.lane.b32.xlu0 %v833, 45
  %v2206 = vpop.permute.xlu0 %2205
  %2207 = vrot.lane.b32.xlu0 %v834, 45
  %v2208 = vpop.permute.xlu0 %2207
  %2209 = vrot.lane.b32.xlu0 %v835, 45
  %v2210 = vpop.permute.xlu0 %2209
  %2211 = vrot.lane.b32.xlu0 %v836, 45
  %v2212 = vpop.permute.xlu0 %2211
  %2213 = vrot.lane.b32.xlu0 %v837, 45
  %v2214 = vpop.permute.xlu0 %2213
  %vm2215 = vcmask 367616
  %v2216 = vsel %vm2215, %v2206, %v2208
  %v2217 = vsel %vm2215, %v2208, %v2210
  %v2218 = vsel %vm2215, %v2210, %v2212
  %v2219 = vsel %vm2215, %v2212, %v2214
  %v2225 = vsel %vm41, %v2204, 0
  %2227 = vmatprep.subr.mxu0 %v2217
  %2228 = vmatpush1.msra.mxu0 %v2216
  %2229 = vmatprep.subr.mxu0 0.0
  %2230 = vmatpush1.msra.mxu0 0.0
  %2231 = vmatprep.subr.mxu0 0.0
  %2232 = vmatpush1.msra.mxu0 0.0
  %2233 = vmatprep.subr.mxu0 0.0
  %2234 = vmatpush1.msra.mxu0 0.0
  %2235 = vmatprep.subr.mxu0 0.0
  %2236 = vmatpush1.msra.mxu0 0.0
  %2237 = vmatprep.subr.mxu0 0.0
  %2238 = vmatpush1.msra.mxu0 0.0
  %2239 = vmatprep.subr.mxu0 0.0
  %2240 = vmatpush1.msra.mxu0 0.0
  %2241 = vmatprep.subr.mxu0 0.0
  %2242 = vmatpush1.msra.mxu0 0.0
  %2243 = vmatprep.subr.mxu0 0.0
  %2244 = vmatpush1.msra.mxu0 0.0
  %2245 = vmatprep.subr.mxu0 0.0
  %2246 = vmatpush1.msra.mxu0 0.0
  %2247 = vmatprep.subr.mxu0 0.0
  %2248 = vmatpush1.msra.mxu0 0.0
  %2249 = vmatprep.subr.mxu0 0.0
  %2250 = vmatpush1.msra.mxu0 0.0
  %2251 = vmatprep.subr.mxu0 0.0
  %2252 = vmatpush1.msra.mxu0 0.0
  %2253 = vmatprep.subr.mxu0 0.0
  %2254 = vmatpush1.msra.mxu0 0.0
  %2255 = vmatprep.subr.mxu0 0.0
  %2256 = vmatpush1.msra.mxu0 0.0
  %2257 = vmatprep.subr.mxu0 0.0
  %2258 = vmatpush1.msra.mxu0 0.0
  %2259 = vmatprep.subr.mxu0 0.0
  %2260 = vmatpush1.msra.mxu0 0.0
  %2261 = vmatprep.subr.mxu0 0.0
  %2262 = vmatpush1.msra.mxu0 0.0
  %2263 = vmatprep.subr.mxu0 0.0
  %2264 = vmatpush1.msra.mxu0 0.0
  %2265 = vmatprep.subr.mxu0 0.0
  %2266 = vmatpush1.msra.mxu0 0.0
  %2267 = vmatprep.subr.mxu0 0.0
  %2268 = vmatpush1.msra.mxu0 0.0
  %2269 = vmatprep.subr.mxu0 0.0
  %2270 = vmatpush1.msra.mxu0 0.0
  %2271 = vmatprep.subr.mxu0 0.0
  %2272 = vmatpush1.msra.mxu0 0.0
  %2273 = vmatprep.subr.mxu0 0.0
  %2274 = vmatpush1.msra.mxu0 0.0
  %2275 = vmatprep.subr.mxu0 0.0
  %2276 = vmatpush1.msra.mxu0 0.0
  %2277 = vmatprep.subr.mxu0 0.0
  %2278 = vmatpush1.msra.mxu0 0.0
  %2279 = vmatprep.subr.mxu0 0.0
  %2280 = vmatpush1.msra.mxu0 0.0
  %2281 = vmatprep.subr.mxu0 0.0
  %2282 = vmatpush1.msra.mxu0 0.0
  %2283 = vmatprep.subr.mxu0 0.0
  %2284 = vmatpush1.msra.mxu0 0.0
  %2285 = vmatprep.subr.mxu0 0.0
  %2286 = vmatpush1.msra.mxu0 0.0
  %2287 = vmatprep.subr.mxu0 0.0
  %2288 = vmatpush1.msra.mxu0 0.0
  %2289 = vmatprep.subr.mxu0 0.0
  %2290 = vmatpush1.msra.mxu0 0.0
  %2291 = vmatprep.mubr.f32.mxu0 0.0
  %2292 = vmatmul.mubr.f32.gmra.mrb[0].mxu0 %v2225
  %v2293 = vpop.f32.mrb[0].mxu0
  %v2294 = vadd.f32 0.0, %v2293
  %v2295 = vpop.f32.mrb[0].mxu0
  %v2296 = vadd.f32 0.0, %v2295
  %2297 = vdwg.mxu0
  %2298 = vmatprep.subr.mxu0 %v2219
  %2299 = vmatpush1.msra.mxu0 %v2218
  %2300 = vmatprep.subr.mxu0 0.0
  %2301 = vmatpush1.msra.mxu0 0.0
  %2302 = vmatprep.subr.mxu0 0.0
  %2303 = vmatpush1.msra.mxu0 0.0
  %2304 = vmatprep.subr.mxu0 0.0
  %2305 = vmatpush1.msra.mxu0 0.0
  %2306 = vmatprep.subr.mxu0 0.0
  %2307 = vmatpush1.msra.mxu0 0.0
  %2308 = vmatprep.subr.mxu0 0.0
  %2309 = vmatpush1.msra.mxu0 0.0
  %2310 = vmatprep.subr.mxu0 0.0
  %2311 = vmatpush1.msra.mxu0 0.0
  %2312 = vmatprep.subr.mxu0 0.0
  %2313 = vmatpush1.msra.mxu0 0.0
  %2314 = vmatprep.subr.mxu0 0.0
  %2315 = vmatpush1.msra.mxu0 0.0
  %2316 = vmatprep.subr.mxu0 0.0
  %2317 = vmatpush1.msra.mxu0 0.0
  %2318 = vmatprep.subr.mxu0 0.0
  %2319 = vmatpush1.msra.mxu0 0.0
  %2320 = vmatprep.subr.mxu0 0.0
  %2321 = vmatpush1.msra.mxu0 0.0
  %2322 = vmatprep.subr.mxu0 0.0
  %2323 = vmatpush1.msra.mxu0 0.0
  %2324 = vmatprep.subr.mxu0 0.0
  %2325 = vmatpush1.msra.mxu0 0.0
  %2326 = vmatprep.subr.mxu0 0.0
  %2327 = vmatpush1.msra.mxu0 0.0
  %2328 = vmatprep.subr.mxu0 0.0
  %2329 = vmatpush1.msra.mxu0 0.0
  %2330 = vmatprep.subr.mxu0 0.0
  %2331 = vmatpush1.msra.mxu0 0.0
  %2332 = vmatprep.subr.mxu0 0.0
  %2333 = vmatpush1.msra.mxu0 0.0
  %2334 = vmatprep.subr.mxu0 0.0
  %2335 = vmatpush1.msra.mxu0 0.0
  %2336 = vmatprep.subr.mxu0 0.0
  %2337 = vmatpush1.msra.mxu0 0.0
  %2338 = vmatprep.subr.mxu0 0.0
  %2339 = vmatpush1.msra.mxu0 0.0
  %2340 = vmatprep.subr.mxu0 0.0
  %2341 = vmatpush1.msra.mxu0 0.0
  %2342 = vmatprep.subr.mxu0 0.0
  %2343 = vmatpush1.msra.mxu0 0.0
  %2344 = vmatprep.subr.mxu0 0.0
  %2345 = vmatpush1.msra.mxu0 0.0
  %2346 = vmatprep.subr.mxu0 0.0
  %2347 = vmatpush1.msra.mxu0 0.0
  %2348 = vmatprep.subr.mxu0 0.0
  %2349 = vmatpush1.msra.mxu0 0.0
  %2350 = vmatprep.subr.mxu0 0.0
  %2351 = vmatpush1.msra.mxu0 0.0
  %2352 = vmatprep.subr.mxu0 0.0
  %2353 = vmatpush1.msra.mxu0 0.0
  %2354 = vmatprep.subr.mxu0 0.0
  %2355 = vmatpush1.msra.mxu0 0.0
  %2356 = vmatprep.subr.mxu0 0.0
  %2357 = vmatpush1.msra.mxu0 0.0
  %2358 = vmatprep.subr.mxu0 0.0
  %2359 = vmatpush1.msra.mxu0 0.0
  %2360 = vmatprep.subr.mxu0 0.0
  %2361 = vmatpush1.msra.mxu0 0.0
  %2362 = vmatprep.mubr.f32.mxu0 0.0
  %2363 = vmatmul.mubr.f32.gmra.mrb[0].mxu0 %v2225
  %v2364 = vpop.f32.mrb[0].mxu0
  %v2365 = vadd.f32 0.0, %v2364
  %v2366 = vpop.f32.mrb[0].mxu0
  %v2367 = vadd.f32 0.0, %v2366
  %2368 = vdwg.mxu0
  %v2369 = vadd.f32 %v2199, %v2294
  %v2370 = vadd.f32 %v2200, %v2296
  %v2371 = vadd.f32 %v2201, %v2365
  %v2372 = vadd.f32 %v2202, %v2367
  %s2373 = scalar_lea.vmem %s1, 112
  %v2374 = vld [vmem:[%s2373] sm:$0xff]
  %2375 = vrot.lane.b32.xlu0 %v833, 44
  %v2376 = vpop.permute.xlu0 %2375
  %2377 = vrot.lane.b32.xlu0 %v834, 44
  %v2378 = vpop.permute.xlu0 %2377
  %2379 = vrot.lane.b32.xlu0 %v835, 44
  %v2380 = vpop.permute.xlu0 %2379
  %2381 = vrot.lane.b32.xlu0 %v836, 44
  %v2382 = vpop.permute.xlu0 %2381
  %2383 = vrot.lane.b32.xlu0 %v837, 44
  %v2384 = vpop.permute.xlu0 %2383
  %vm2385 = vcmask 359424
  %v2386 = vsel %vm2385, %v2376, %v2378
  %v2387 = vsel %vm2385, %v2378, %v2380
  %v2388 = vsel %vm2385, %v2380, %v2382
  %v2389 = vsel %vm2385, %v2382, %v2384
  %v2395 = vsel %vm41, %v2374, 0
  %2397 = vmatprep.subr.mxu0 %v2387
  %2398 = vmatpush1.msra.mxu0 %v2386
  %2399 = vmatprep.subr.mxu0 0.0
  %2400 = vmatpush1.msra.mxu0 0.0
  %2401 = vmatprep.subr.mxu0 0.0
  %2402 = vmatpush1.msra.mxu0 0.0
  %2403 = vmatprep.subr.mxu0 0.0
  %2404 = vmatpush1.msra.mxu0 0.0
  %2405 = vmatprep.subr.mxu0 0.0
  %2406 = vmatpush1.msra.mxu0 0.0
  %2407 = vmatprep.subr.mxu0 0.0
  %2408 = vmatpush1.msra.mxu0 0.0
  %2409 = vmatprep.subr.mxu0 0.0
  %2410 = vmatpush1.msra.mxu0 0.0
  %2411 = vmatprep.subr.mxu0 0.0
  %2412 = vmatpush1.msra.mxu0 0.0
  %2413 = vmatprep.subr.mxu0 0.0
  %2414 = vmatpush1.msra.mxu0 0.0
  %2415 = vmatprep.subr.mxu0 0.0
  %2416 = vmatpush1.msra.mxu0 0.0
  %2417 = vmatprep.subr.mxu0 0.0
  %2418 = vmatpush1.msra.mxu0 0.0
  %2419 = vmatprep.subr.mxu0 0.0
  %2420 = vmatpush1.msra.mxu0 0.0
  %2421 = vmatprep.subr.mxu0 0.0
  %2422 = vmatpush1.msra.mxu0 0.0
  %2423 = vmatprep.subr.mxu0 0.0
  %2424 = vmatpush1.msra.mxu0 0.0
  %2425 = vmatprep.subr.mxu0 0.0
  %2426 = vmatpush1.msra.mxu0 0.0
  %2427 = vmatprep.subr.mxu0 0.0
  %2428 = vmatpush1.msra.mxu0 0.0
  %2429 = vmatprep.subr.mxu0 0.0
  %2430 = vmatpush1.msra.mxu0 0.0
  %2431 = vmatprep.subr.mxu0 0.0
  %2432 = vmatpush1.msra.mxu0 0.0
  %2433 = vmatprep.subr.mxu0 0.0
  %2434 = vmatpush1.msra.mxu0 0.0
  %2435 = vmatprep.subr.mxu0 0.0
  %2436 = vmatpush1.msra.mxu0 0.0
  %2437 = vmatprep.subr.mxu0 0.0
  %2438 = vmatpush1.msra.mxu0 0.0
  %2439 = vmatprep.subr.mxu0 0.0
  %2440 = vmatpush1.msra.mxu0 0.0
  %2441 = vmatprep.subr.mxu0 0.0
  %2442 = vmatpush1.msra.mxu0 0.0
  %2443 = vmatprep.subr.mxu0 0.0
  %2444 = vmatpush1.msra.mxu0 0.0
  %2445 = vmatprep.subr.mxu0 0.0
  %2446 = vmatpush1.msra.mxu0 0.0
  %2447 = vmatprep.subr.mxu0 0.0
  %2448 = vmatpush1.msra.mxu0 0.0
  %2449 = vmatprep.subr.mxu0 0.0
  %2450 = vmatpush1.msra.mxu0 0.0
  %2451 = vmatprep.subr.mxu0 0.0
  %2452 = vmatpush1.msra.mxu0 0.0
  %2453 = vmatprep.subr.mxu0 0.0
  %2454 = vmatpush1.msra.mxu0 0.0
  %2455 = vmatprep.subr.mxu0 0.0
  %2456 = vmatpush1.msra.mxu0 0.0
  %2457 = vmatprep.subr.mxu0 0.0
  %2458 = vmatpush1.msra.mxu0 0.0
  %2459 = vmatprep.subr.mxu0 0.0
  %2460 = vmatpush1.msra.mxu0 0.0
  %2461 = vmatprep.mubr.f32.mxu0 0.0
  %2462 = vmatmul.mubr.f32.gmra.mrb[0].mxu0 %v2395
  %v2463 = vpop.f32.mrb[0].mxu0
  %v2464 = vadd.f32 0.0, %v2463
  %v2465 = vpop.f32.mrb[0].mxu0
  %v2466 = vadd.f32 0.0, %v2465
  %2467 = vdwg.mxu0
  %2468 = vmatprep.subr.mxu0 %v2389
  %2469 = vmatpush1.msra.mxu0 %v2388
  %2470 = vmatprep.subr.mxu0 0.0
  %2471 = vmatpush1.msra.mxu0 0.0
  %2472 = vmatprep.subr.mxu0 0.0
  %2473 = vmatpush1.msra.mxu0 0.0
  %2474 = vmatprep.subr.mxu0 0.0
  %2475 = vmatpush1.msra.mxu0 0.0
  %2476 = vmatprep.subr.mxu0 0.0
  %2477 = vmatpush1.msra.mxu0 0.0
  %2478 = vmatprep.subr.mxu0 0.0
  %2479 = vmatpush1.msra.mxu0 0.0
  %2480 = vmatprep.subr.mxu0 0.0
  %2481 = vmatpush1.msra.mxu0 0.0
  %2482 = vmatprep.subr.mxu0 0.0
  %2483 = vmatpush1.msra.mxu0 0.0
  %2484 = vmatprep.subr.mxu0 0.0
  %2485 = vmatpush1.msra.mxu0 0.0
  %2486 = vmatprep.subr.mxu0 0.0
  %2487 = vmatpush1.msra.mxu0 0.0
  %2488 = vmatprep.subr.mxu0 0.0
  %2489 = vmatpush1.msra.mxu0 0.0
  %2490 = vmatprep.subr.mxu0 0.0
  %2491 = vmatpush1.msra.mxu0 0.0
  %2492 = vmatprep.subr.mxu0 0.0
  %2493 = vmatpush1.msra.mxu0 0.0
  %2494 = vmatprep.subr.mxu0 0.0
  %2495 = vmatpush1.msra.mxu0 0.0
  %2496 = vmatprep.subr.mxu0 0.0
  %2497 = vmatpush1.msra.mxu0 0.0
  %2498 = vmatprep.subr.mxu0 0.0
  %2499 = vmatpush1.msra.mxu0 0.0
  %2500 = vmatprep.subr.mxu0 0.0
  %2501 = vmatpush1.msra.mxu0 0.0
  %2502 = vmatprep.subr.mxu0 0.0
  %2503 = vmatpush1.msra.mxu0 0.0
  %2504 = vmatprep.subr.mxu0 0.0
  %2505 = vmatpush1.msra.mxu0 0.0
  %2506 = vmatprep.subr.mxu0 0.0
  %2507 = vmatpush1.msra.mxu0 0.0
  %2508 = vmatprep.subr.mxu0 0.0
  %2509 = vmatpush1.msra.mxu0 0.0
  %2510 = vmatprep.subr.mxu0 0.0
  %2511 = vmatpush1.msra.mxu0 0.0
  %2512 = vmatprep.subr.mxu0 0.0
  %2513 = vmatpush1.msra.mxu0 0.0
  %2514 = vmatprep.subr.mxu0 0.0
  %2515 = vmatpush1.msra.mxu0 0.0
  %2516 = vmatprep.subr.mxu0 0.0
  %2517 = vmatpush1.msra.mxu0 0.0
  %2518 = vmatprep.subr.mxu0 0.0
  %2519 = vmatpush1.msra.mxu0 0.0
  %2520 = vmatprep.subr.mxu0 0.0
  %2521 = vmatpush1.msra.mxu0 0.0
  %2522 = vmatprep.subr.mxu0 0.0
  %2523 = vmatpush1.msra.mxu0 0.0
  %2524 = vmatprep.subr.mxu0 0.0
  %2525 = vmatpush1.msra.mxu0 0.0
  %2526 = vmatprep.subr.mxu0 0.0
  %2527 = vmatpush1.msra.mxu0 0.0
  %2528 = vmatprep.subr.mxu0 0.0
  %2529 = vmatpush1.msra.mxu0 0.0
  %2530 = vmatprep.subr.mxu0 0.0
  %2531 = vmatpush1.msra.mxu0 0.0
  %2532 = vmatprep.mubr.f32.mxu0 0.0
  %2533 = vmatmul.mubr.f32.gmra.mrb[0].mxu0 %v2395
  %v2534 = vpop.f32.mrb[0].mxu0
  %v2535 = vadd.f32 0.0, %v2534
  %v2536 = vpop.f32.mrb[0].mxu0
  %v2537 = vadd.f32 0.0, %v2536
  %2538 = vdwg.mxu0
  %v2539 = vadd.f32 %v2369, %v2464
  %v2540 = vadd.f32 %v2370, %v2466
  %v2541 = vadd.f32 %v2371, %v2535
  %v2542 = vadd.f32 %v2372, %v2537
  %s2543 = scalar_lea.vmem %s1, 120
  %v2544 = vld [vmem:[%s2543] sm:$0xff]
  %2545 = vrot.lane.b32.xlu0 %v833, 8
  %v2546 = vpop.permute.xlu0 %2545
  %2547 = vrot.lane.b32.xlu0 %v834, 8
  %v2548 = vpop.permute.xlu0 %2547
  %2549 = vrot.lane.b32.xlu0 %v835, 8
  %v2550 = vpop.permute.xlu0 %2549
  %2551 = vrot.lane.b32.xlu0 %v836, 8
  %v2552 = vpop.permute.xlu0 %2551
  %2553 = vrot.lane.b32.xlu0 %v837, 8
  %v2554 = vpop.permute.xlu0 %2553
  %v2555 = vsel %vm41, %v2546, %v2548
  %v2556 = vsel %vm41, %v2548, %v2550
  %v2557 = vsel %vm41, %v2550, %v2552
  %v2558 = vsel %vm41, %v2552, %v2554
  %v2564 = vsel %vm41, %v2544, 0
  %2566 = vmatprep.subr.mxu0 %v2556
  %2567 = vmatpush1.msra.mxu0 %v2555
  %2568 = vmatprep.subr.mxu0 0.0
  %2569 = vmatpush1.msra.mxu0 0.0
  %2570 = vmatprep.subr.mxu0 0.0
  %2571 = vmatpush1.msra.mxu0 0.0
  %2572 = vmatprep.subr.mxu0 0.0
  %2573 = vmatpush1.msra.mxu0 0.0
  %2574 = vmatprep.subr.mxu0 0.0
  %2575 = vmatpush1.msra.mxu0 0.0
  %2576 = vmatprep.subr.mxu0 0.0
  %2577 = vmatpush1.msra.mxu0 0.0
  %2578 = vmatprep.subr.mxu0 0.0
  %2579 = vmatpush1.msra.mxu0 0.0
  %2580 = vmatprep.subr.mxu0 0.0
  %2581 = vmatpush1.msra.mxu0 0.0
  %2582 = vmatprep.subr.mxu0 0.0
  %2583 = vmatpush1.msra.mxu0 0.0
  %2584 = vmatprep.subr.mxu0 0.0
  %2585 = vmatpush1.msra.mxu0 0.0
  %2586 = vmatprep.subr.mxu0 0.0
  %2587 = vmatpush1.msra.mxu0 0.0
  %2588 = vmatprep.subr.mxu0 0.0
  %2589 = vmatpush1.msra.mxu0 0.0
  %2590 = vmatprep.subr.mxu0 0.0
  %2591 = vmatpush1.msra.mxu0 0.0
  %2592 = vmatprep.subr.mxu0 0.0
  %2593 = vmatpush1.msra.mxu0 0.0
  %2594 = vmatprep.subr.mxu0 0.0
  %2595 = vmatpush1.msra.mxu0 0.0
  %2596 = vmatprep.subr.mxu0 0.0
  %2597 = vmatpush1.msra.mxu0 0.0
  %2598 = vmatprep.subr.mxu0 0.0
  %2599 = vmatpush1.msra.mxu0 0.0
  %2600 = vmatprep.subr.mxu0 0.0
  %2601 = vmatpush1.msra.mxu0 0.0
  %2602 = vmatprep.subr.mxu0 0.0
  %2603 = vmatpush1.msra.mxu0 0.0
  %2604 = vmatprep.subr.mxu0 0.0
  %2605 = vmatpush1.msra.mxu0 0.0
  %2606 = vmatprep.subr.mxu0 0.0
  %2607 = vmatpush1.msra.mxu0 0.0
  %2608 = vmatprep.subr.mxu0 0.0
  %2609 = vmatpush1.msra.mxu0 0.0
  %2610 = vmatprep.subr.mxu0 0.0
  %2611 = vmatpush1.msra.mxu0 0.0
  %2612 = vmatprep.subr.mxu0 0.0
  %2613 = vmatpush1.msra.mxu0 0.0
  %2614 = vmatprep.subr.mxu0 0.0
  %2615 = vmatpush1.msra.mxu0 0.0
  %2616 = vmatprep.subr.mxu0 0.0
  %2617 = vmatpush1.msra.mxu0 0.0
  %2618 = vmatprep.subr.mxu0 0.0
  %2619 = vmatpush1.msra.mxu0 0.0
  %2620 = vmatprep.subr.mxu0 0.0
  %2621 = vmatpush1.msra.mxu0 0.0
  %2622 = vmatprep.subr.mxu0 0.0
  %2623 = vmatpush1.msra.mxu0 0.0
  %2624 = vmatprep.subr.mxu0 0.0
  %2625 = vmatpush1.msra.mxu0 0.0
  %2626 = vmatprep.subr.mxu0 0.0
  %2627 = vmatpush1.msra.mxu0 0.0
  %2628 = vmatprep.subr.mxu0 0.0
  %2629 = vmatpush1.msra.mxu0 0.0
  %2630 = vmatprep.mubr.f32.mxu0 0.0
  %2631 = vmatmul.mubr.f32.gmra.mrb[0].mxu0 %v2564
  %v2632 = vpop.f32.mrb[0].mxu0
  %v2633 = vadd.f32 0.0, %v2632
  %v2634 = vpop.f32.mrb[0].mxu0
  %v2635 = vadd.f32 0.0, %v2634
  %2636 = vdwg.mxu0
  %2637 = vmatprep.subr.mxu0 %v2558
  %2638 = vmatpush1.msra.mxu0 %v2557
  %2639 = vmatprep.subr.mxu0 0.0
  %2640 = vmatpush1.msra.mxu0 0.0
  %2641 = vmatprep.subr.mxu0 0.0
  %2642 = vmatpush1.msra.mxu0 0.0
  %2643 = vmatprep.subr.mxu0 0.0
  %2644 = vmatpush1.msra.mxu0 0.0
  %2645 = vmatprep.subr.mxu0 0.0
  %2646 = vmatpush1.msra.mxu0 0.0
  %2647 = vmatprep.subr.mxu0 0.0
  %2648 = vmatpush1.msra.mxu0 0.0
  %2649 = vmatprep.subr.mxu0 0.0
  %2650 = vmatpush1.msra.mxu0 0.0
  %2651 = vmatprep.subr.mxu0 0.0
  %2652 = vmatpush1.msra.mxu0 0.0
  %2653 = vmatprep.subr.mxu0 0.0
  %2654 = vmatpush1.msra.mxu0 0.0
  %2655 = vmatprep.subr.mxu0 0.0
  %2656 = vmatpush1.msra.mxu0 0.0
  %2657 = vmatprep.subr.mxu0 0.0
  %2658 = vmatpush1.msra.mxu0 0.0
  %2659 = vmatprep.subr.mxu0 0.0
  %2660 = vmatpush1.msra.mxu0 0.0
  %2661 = vmatprep.subr.mxu0 0.0
  %2662 = vmatpush1.msra.mxu0 0.0
  %2663 = vmatprep.subr.mxu0 0.0
  %2664 = vmatpush1.msra.mxu0 0.0
  %2665 = vmatprep.subr.mxu0 0.0
  %2666 = vmatpush1.msra.mxu0 0.0
  %2667 = vmatprep.subr.mxu0 0.0
  %2668 = vmatpush1.msra.mxu0 0.0
  %2669 = vmatprep.subr.mxu0 0.0
  %2670 = vmatpush1.msra.mxu0 0.0
  %2671 = vmatprep.subr.mxu0 0.0
  %2672 = vmatpush1.msra.mxu0 0.0
  %2673 = vmatprep.subr.mxu0 0.0
  %2674 = vmatpush1.msra.mxu0 0.0
  %2675 = vmatprep.subr.mxu0 0.0
  %2676 = vmatpush1.msra.mxu0 0.0
  %2677 = vmatprep.subr.mxu0 0.0
  %2678 = vmatpush1.msra.mxu0 0.0
  %2679 = vmatprep.subr.mxu0 0.0
  %2680 = vmatpush1.msra.mxu0 0.0
  %2681 = vmatprep.subr.mxu0 0.0
  %2682 = vmatpush1.msra.mxu0 0.0
  %2683 = vmatprep.subr.mxu0 0.0
  %2684 = vmatpush1.msra.mxu0 0.0
  %2685 = vmatprep.subr.mxu0 0.0
  %2686 = vmatpush1.msra.mxu0 0.0
  %2687 = vmatprep.subr.mxu0 0.0
  %2688 = vmatpush1.msra.mxu0 0.0
  %2689 = vmatprep.subr.mxu0 0.0
  %2690 = vmatpush1.msra.mxu0 0.0
  %2691 = vmatprep.subr.mxu0 0.0
  %2692 = vmatpush1.msra.mxu0 0.0
  %2693 = vmatprep.subr.mxu0 0.0
  %2694 = vmatpush1.msra.mxu0 0.0
  %2695 = vmatprep.subr.mxu0 0.0
  %2696 = vmatpush1.msra.mxu0 0.0
  %2697 = vmatprep.subr.mxu0 0.0
  %2698 = vmatpush1.msra.mxu0 0.0
  %2699 = vmatprep.subr.mxu0 0.0
  %2700 = vmatpush1.msra.mxu0 0.0
  %2701 = vmatprep.mubr.f32.mxu0 0.0
  %2702 = vmatmul.mubr.f32.gmra.mrb[0].mxu0 %v2564
  %v2703 = vpop.f32.mrb[0].mxu0
  %v2704 = vadd.f32 0.0, %v2703
  %v2705 = vpop.f32.mrb[0].mxu0
  %v2706 = vadd.f32 0.0, %v2705
  %2707 = vdwg.mxu0
  %v2708 = vadd.f32 %v2539, %v2633
  %v2709 = vadd.f32 %v2540, %v2635
  %v2710 = vadd.f32 %v2541, %v2704
  %v2711 = vadd.f32 %v2542, %v2706
  %s2712 = scalar_lea.vmem %s1, 128
  %v2713 = vld [vmem:[%s2712] sm:$0xff]
  %2714 = vrot.lane.b32.xlu0 %v833, 7
  %v2715 = vpop.permute.xlu0 %2714
  %2716 = vrot.lane.b32.xlu0 %v834, 7
  %v2717 = vpop.permute.xlu0 %2716
  %2718 = vrot.lane.b32.xlu0 %v835, 7
  %v2719 = vpop.permute.xlu0 %2718
  %2720 = vrot.lane.b32.xlu0 %v836, 7
  %v2721 = vpop.permute.xlu0 %2720
  %2722 = vrot.lane.b32.xlu0 %v837, 7
  %v2723 = vpop.permute.xlu0 %2722
  %vm2724 = vcmask 56320
  %v2725 = vsel %vm2724, %v2715, %v2717
  %v2726 = vsel %vm2724, %v2717, %v2719
  %v2727 = vsel %vm2724, %v2719, %v2721
  %v2728 = vsel %vm2724, %v2721, %v2723
  %v2734 = vsel %vm41, %v2713, 0
  %2736 = vmatprep.subr.mxu0 %v2726
  %2737 = vmatpush1.msra.mxu0 %v2725
  %2738 = vmatprep.subr.mxu0 0.0
  %2739 = vmatpush1.msra.mxu0 0.0
  %2740 = vmatprep.subr.mxu0 0.0
  %2741 = vmatpush1.msra.mxu0 0.0
  %2742 = vmatprep.subr.mxu0 0.0
  %2743 = vmatpush1.msra.mxu0 0.0
  %2744 = vmatprep.subr.mxu0 0.0
  %2745 = vmatpush1.msra.mxu0 0.0
  %2746 = vmatprep.subr.mxu0 0.0
  %2747 = vmatpush1.msra.mxu0 0.0
  %2748 = vmatprep.subr.mxu0 0.0
  %2749 = vmatpush1.msra.mxu0 0.0
  %2750 = vmatprep.subr.mxu0 0.0
  %2751 = vmatpush1.msra.mxu0 0.0
  %2752 = vmatprep.subr.mxu0 0.0
  %2753 = vmatpush1.msra.mxu0 0.0
  %2754 = vmatprep.subr.mxu0 0.0
  %2755 = vmatpush1.msra.mxu0 0.0
  %2756 = vmatprep.subr.mxu0 0.0
  %2757 = vmatpush1.msra.mxu0 0.0
  %2758 = vmatprep.subr.mxu0 0.0
  %2759 = vmatpush1.msra.mxu0 0.0
  %2760 = vmatprep.subr.mxu0 0.0
  %2761 = vmatpush1.msra.mxu0 0.0
  %2762 = vmatprep.subr.mxu0 0.0
  %2763 = vmatpush1.msra.mxu0 0.0
  %2764 = vmatprep.subr.mxu0 0.0
  %2765 = vmatpush1.msra.mxu0 0.0
  %2766 = vmatprep.subr.mxu0 0.0
  %2767 = vmatpush1.msra.mxu0 0.0
  %2768 = vmatprep.subr.mxu0 0.0
  %2769 = vmatpush1.msra.mxu0 0.0
  %2770 = vmatprep.subr.mxu0 0.0
  %2771 = vmatpush1.msra.mxu0 0.0
  %2772 = vmatprep.subr.mxu0 0.0
  %2773 = vmatpush1.msra.mxu0 0.0
  %2774 = vmatprep.subr.mxu0 0.0
  %2775 = vmatpush1.msra.mxu0 0.0
  %2776 = vmatprep.subr.mxu0 0.0
  %2777 = vmatpush1.msra.mxu0 0.0
  %2778 = vmatprep.subr.mxu0 0.0
  %2779 = vmatpush1.msra.mxu0 0.0
  %2780 = vmatprep.subr.mxu0 0.0
  %2781 = vmatpush1.msra.mxu0 0.0
  %2782 = vmatprep.subr.mxu0 0.0
  %2783 = vmatpush1.msra.mxu0 0.0
  %2784 = vmatprep.subr.mxu0 0.0
  %2785 = vmatpush1.msra.mxu0 0.0
  %2786 = vmatprep.subr.mxu0 0.0
  %2787 = vmatpush1.msra.mxu0 0.0
  %2788 = vmatprep.subr.mxu0 0.0
  %2789 = vmatpush1.msra.mxu0 0.0
  %2790 = vmatprep.subr.mxu0 0.0
  %2791 = vmatpush1.msra.mxu0 0.0
  %2792 = vmatprep.subr.mxu0 0.0
  %2793 = vmatpush1.msra.mxu0 0.0
  %2794 = vmatprep.subr.mxu0 0.0
  %2795 = vmatpush1.msra.mxu0 0.0
  %2796 = vmatprep.subr.mxu0 0.0
  %2797 = vmatpush1.msra.mxu0 0.0
  %2798 = vmatprep.subr.mxu0 0.0
  %2799 = vmatpush1.msra.mxu0 0.0
  %2800 = vmatprep.mubr.f32.mxu0 0.0
  %2801 = vmatmul.mubr.f32.gmra.mrb[0].mxu0 %v2734
  %v2802 = vpop.f32.mrb[0].mxu0
  %v2803 = vadd.f32 0.0, %v2802
  %v2804 = vpop.f32.mrb[0].mxu0
  %v2805 = vadd.f32 0.0, %v2804
  %2806 = vdwg.mxu0
  %2807 = vmatprep.subr.mxu0 %v2728
  %2808 = vmatpush1.msra.mxu0 %v2727
  %2809 = vmatprep.subr.mxu0 0.0
  %2810 = vmatpush1.msra.mxu0 0.0
  %2811 = vmatprep.subr.mxu0 0.0
  %2812 = vmatpush1.msra.mxu0 0.0
  %2813 = vmatprep.subr.mxu0 0.0
  %2814 = vmatpush1.msra.mxu0 0.0
  %2815 = vmatprep.subr.mxu0 0.0
  %2816 = vmatpush1.msra.mxu0 0.0
  %2817 = vmatprep.subr.mxu0 0.0
  %2818 = vmatpush1.msra.mxu0 0.0
  %2819 = vmatprep.subr.mxu0 0.0
  %2820 = vmatpush1.msra.mxu0 0.0
  %2821 = vmatprep.subr.mxu0 0.0
  %2822 = vmatpush1.msra.mxu0 0.0
  %2823 = vmatprep.subr.mxu0 0.0
  %2824 = vmatpush1.msra.mxu0 0.0
  %2825 = vmatprep.subr.mxu0 0.0
  %2826 = vmatpush1.msra.mxu0 0.0
  %2827 = vmatprep.subr.mxu0 0.0
  %2828 = vmatpush1.msra.mxu0 0.0
  %2829 = vmatprep.subr.mxu0 0.0
  %2830 = vmatpush1.msra.mxu0 0.0
  %2831 = vmatprep.subr.mxu0 0.0
  %2832 = vmatpush1.msra.mxu0 0.0
  %2833 = vmatprep.subr.mxu0 0.0
  %2834 = vmatpush1.msra.mxu0 0.0
  %2835 = vmatprep.subr.mxu0 0.0
  %2836 = vmatpush1.msra.mxu0 0.0
  %2837 = vmatprep.subr.mxu0 0.0
  %2838 = vmatpush1.msra.mxu0 0.0
  %2839 = vmatprep.subr.mxu0 0.0
  %2840 = vmatpush1.msra.mxu0 0.0
  %2841 = vmatprep.subr.mxu0 0.0
  %2842 = vmatpush1.msra.mxu0 0.0
  %2843 = vmatprep.subr.mxu0 0.0
  %2844 = vmatpush1.msra.mxu0 0.0
  %2845 = vmatprep.subr.mxu0 0.0
  %2846 = vmatpush1.msra.mxu0 0.0
  %2847 = vmatprep.subr.mxu0 0.0
  %2848 = vmatpush1.msra.mxu0 0.0
  %2849 = vmatprep.subr.mxu0 0.0
  %2850 = vmatpush1.msra.mxu0 0.0
  %2851 = vmatprep.subr.mxu0 0.0
  %2852 = vmatpush1.msra.mxu0 0.0
  %2853 = vmatprep.subr.mxu0 0.0
  %2854 = vmatpush1.msra.mxu0 0.0
  %2855 = vmatprep.subr.mxu0 0.0
  %2856 = vmatpush1.msra.mxu0 0.0
  %2857 = vmatprep.subr.mxu0 0.0
  %2858 = vmatpush1.msra.mxu0 0.0
  %2859 = vmatprep.subr.mxu0 0.0
  %2860 = vmatpush1.msra.mxu0 0.0
  %2861 = vmatprep.subr.mxu0 0.0
  %2862 = vmatpush1.msra.mxu0 0.0
  %2863 = vmatprep.subr.mxu0 0.0
  %2864 = vmatpush1.msra.mxu0 0.0
  %2865 = vmatprep.subr.mxu0 0.0
  %2866 = vmatpush1.msra.mxu0 0.0
  %2867 = vmatprep.subr.mxu0 0.0
  %2868 = vmatpush1.msra.mxu0 0.0
  %2869 = vmatprep.subr.mxu0 0.0
  %2870 = vmatpush1.msra.mxu0 0.0
  %2871 = vmatprep.mubr.f32.mxu0 0.0
  %2872 = vmatmul.mubr.f32.gmra.mrb[0].mxu0 %v2734
  %v2873 = vpop.f32.mrb[0].mxu0
  %v2874 = vadd.f32 0.0, %v2873
  %v2875 = vpop.f32.mrb[0].mxu0
  %v2876 = vadd.f32 0.0, %v2875
  %2877 = vdwg.mxu0
  %v2878 = vadd.f32 %v2708, %v2803
  %v2879 = vadd.f32 %v2709, %v2805
  %v2880 = vadd.f32 %v2710, %v2874
  %v2881 = vadd.f32 %v2711, %v2876
  %s2882 = scalar_lea.vmem %s1, 136
  %v2883 = vld [vmem:[%s2882] sm:$0xff]
  %2884 = vrot.lane.b32.xlu0 %v833, 6
  %v2885 = vpop.permute.xlu0 %2884
  %2886 = vrot.lane.b32.xlu0 %v834, 6
  %v2887 = vpop.permute.xlu0 %2886
  %2888 = vrot.lane.b32.xlu0 %v835, 6
  %v2889 = vpop.permute.xlu0 %2888
  %2890 = vrot.lane.b32.xlu0 %v836, 6
  %v2891 = vpop.permute.xlu0 %2890
  %2892 = vrot.lane.b32.xlu0 %v837, 6
  %v2893 = vpop.permute.xlu0 %2892
  %vm2894 = vcmask 48128
  %v2895 = vsel %vm2894, %v2885, %v2887
  %v2896 = vsel %vm2894, %v2887, %v2889
  %v2897 = vsel %vm2894, %v2889, %v2891
  %v2898 = vsel %vm2894, %v2891, %v2893
  %v2904 = vsel %vm41, %v2883, 0
  %2906 = vmatprep.subr.mxu0 %v2896
  %2907 = vmatpush1.msra.mxu0 %v2895
  %2908 = vmatprep.subr.mxu0 0.0
  %2909 = vmatpush1.msra.mxu0 0.0
  %2910 = vmatprep.subr.mxu0 0.0
  %2911 = vmatpush1.msra.mxu0 0.0
  %2912 = vmatprep.subr.mxu0 0.0
  %2913 = vmatpush1.msra.mxu0 0.0
  %2914 = vmatprep.subr.mxu0 0.0
  %2915 = vmatpush1.msra.mxu0 0.0
  %2916 = vmatprep.subr.mxu0 0.0
  %2917 = vmatpush1.msra.mxu0 0.0
  %2918 = vmatprep.subr.mxu0 0.0
  %2919 = vmatpush1.msra.mxu0 0.0
  %2920 = vmatprep.subr.mxu0 0.0
  %2921 = vmatpush1.msra.mxu0 0.0
  %2922 = vmatprep.subr.mxu0 0.0
  %2923 = vmatpush1.msra.mxu0 0.0
  %2924 = vmatprep.subr.mxu0 0.0
  %2925 = vmatpush1.msra.mxu0 0.0
  %2926 = vmatprep.subr.mxu0 0.0
  %2927 = vmatpush1.msra.mxu0 0.0
  %2928 = vmatprep.subr.mxu0 0.0
  %2929 = vmatpush1.msra.mxu0 0.0
  %2930 = vmatprep.subr.mxu0 0.0
  %2931 = vmatpush1.msra.mxu0 0.0
  %2932 = vmatprep.subr.mxu0 0.0
  %2933 = vmatpush1.msra.mxu0 0.0
  %2934 = vmatprep.subr.mxu0 0.0
  %2935 = vmatpush1.msra.mxu0 0.0
  %2936 = vmatprep.subr.mxu0 0.0
  %2937 = vmatpush1.msra.mxu0 0.0
  %2938 = vmatprep.subr.mxu0 0.0
  %2939 = vmatpush1.msra.mxu0 0.0
  %2940 = vmatprep.subr.mxu0 0.0
  %2941 = vmatpush1.msra.mxu0 0.0
  %2942 = vmatprep.subr.mxu0 0.0
  %2943 = vmatpush1.msra.mxu0 0.0
  %2944 = vmatprep.subr.mxu0 0.0
  %2945 = vmatpush1.msra.mxu0 0.0
  %2946 = vmatprep.subr.mxu0 0.0
  %2947 = vmatpush1.msra.mxu0 0.0
  %2948 = vmatprep.subr.mxu0 0.0
  %2949 = vmatpush1.msra.mxu0 0.0
  %2950 = vmatprep.subr.mxu0 0.0
  %2951 = vmatpush1.msra.mxu0 0.0
  %2952 = vmatprep.subr.mxu0 0.0
  %2953 = vmatpush1.msra.mxu0 0.0
  %2954 = vmatprep.subr.mxu0 0.0
  %2955 = vmatpush1.msra.mxu0 0.0
  %2956 = vmatprep.subr.mxu0 0.0
  %2957 = vmatpush1.msra.mxu0 0.0
  %2958 = vmatprep.subr.mxu0 0.0
  %2959 = vmatpush1.msra.mxu0 0.0
  %2960 = vmatprep.subr.mxu0 0.0
  %2961 = vmatpush1.msra.mxu0 0.0
  %2962 = vmatprep.subr.mxu0 0.0
  %2963 = vmatpush1.msra.mxu0 0.0
  %2964 = vmatprep.subr.mxu0 0.0
  %2965 = vmatpush1.msra.mxu0 0.0
  %2966 = vmatprep.subr.mxu0 0.0
  %2967 = vmatpush1.msra.mxu0 0.0
  %2968 = vmatprep.subr.mxu0 0.0
  %2969 = vmatpush1.msra.mxu0 0.0
  %2970 = vmatprep.mubr.f32.mxu0 0.0
  %2971 = vmatmul.mubr.f32.gmra.mrb[0].mxu0 %v2904
  %v2972 = vpop.f32.mrb[0].mxu0
  %v2973 = vadd.f32 0.0, %v2972
  %v2974 = vpop.f32.mrb[0].mxu0
  %v2975 = vadd.f32 0.0, %v2974
  %2976 = vdwg.mxu0
  %2977 = vmatprep.subr.mxu0 %v2898
  %2978 = vmatpush1.msra.mxu0 %v2897
  %2979 = vmatprep.subr.mxu0 0.0
  %2980 = vmatpush1.msra.mxu0 0.0
  %2981 = vmatprep.subr.mxu0 0.0
  %2982 = vmatpush1.msra.mxu0 0.0
  %2983 = vmatprep.subr.mxu0 0.0
  %2984 = vmatpush1.msra.mxu0 0.0
  %2985 = vmatprep.subr.mxu0 0.0
  %2986 = vmatpush1.msra.mxu0 0.0
  %2987 = vmatprep.subr.mxu0 0.0
  %2988 = vmatpush1.msra.mxu0 0.0
  %2989 = vmatprep.subr.mxu0 0.0
  %2990 = vmatpush1.msra.mxu0 0.0
  %2991 = vmatprep.subr.mxu0 0.0
  %2992 = vmatpush1.msra.mxu0 0.0
  %2993 = vmatprep.subr.mxu0 0.0
  %2994 = vmatpush1.msra.mxu0 0.0
  %2995 = vmatprep.subr.mxu0 0.0
  %2996 = vmatpush1.msra.mxu0 0.0
  %2997 = vmatprep.subr.mxu0 0.0
  %2998 = vmatpush1.msra.mxu0 0.0
  %2999 = vmatprep.subr.mxu0 0.0
  %3000 = vmatpush1.msra.mxu0 0.0
  %3001 = vmatprep.subr.mxu0 0.0
  %3002 = vmatpush1.msra.mxu0 0.0
  %3003 = vmatprep.subr.mxu0 0.0
  %3004 = vmatpush1.msra.mxu0 0.0
  %3005 = vmatprep.subr.mxu0 0.0
  %3006 = vmatpush1.msra.mxu0 0.0
  %3007 = vmatprep.subr.mxu0 0.0
  %3008 = vmatpush1.msra.mxu0 0.0
  %3009 = vmatprep.subr.mxu0 0.0
  %3010 = vmatpush1.msra.mxu0 0.0
  %3011 = vmatprep.subr.mxu0 0.0
  %3012 = vmatpush1.msra.mxu0 0.0
  %3013 = vmatprep.subr.mxu0 0.0
  %3014 = vmatpush1.msra.mxu0 0.0
  %3015 = vmatprep.subr.mxu0 0.0
  %3016 = vmatpush1.msra.mxu0 0.0
  %3017 = vmatprep.subr.mxu0 0.0
  %3018 = vmatpush1.msra.mxu0 0.0
  %3019 = vmatprep.subr.mxu0 0.0
  %3020 = vmatpush1.msra.mxu0 0.0
  %3021 = vmatprep.subr.mxu0 0.0
  %3022 = vmatpush1.msra.mxu0 0.0
  %3023 = vmatprep.subr.mxu0 0.0
  %3024 = vmatpush1.msra.mxu0 0.0
  %3025 = vmatprep.subr.mxu0 0.0
  %3026 = vmatpush1.msra.mxu0 0.0
  %3027 = vmatprep.subr.mxu0 0.0
  %3028 = vmatpush1.msra.mxu0 0.0
  %3029 = vmatprep.subr.mxu0 0.0
  %3030 = vmatpush1.msra.mxu0 0.0
  %3031 = vmatprep.subr.mxu0 0.0
  %3032 = vmatpush1.msra.mxu0 0.0
  %3033 = vmatprep.subr.mxu0 0.0
  %3034 = vmatpush1.msra.mxu0 0.0
  %3035 = vmatprep.subr.mxu0 0.0
  %3036 = vmatpush1.msra.mxu0 0.0
  %3037 = vmatprep.subr.mxu0 0.0
  %3038 = vmatpush1.msra.mxu0 0.0
  %3039 = vmatprep.subr.mxu0 0.0
  %3040 = vmatpush1.msra.mxu0 0.0
  %3041 = vmatprep.mubr.f32.mxu0 0.0
  %3042 = vmatmul.mubr.f32.gmra.mrb[0].mxu0 %v2904
  %v3043 = vpop.f32.mrb[0].mxu0
  %v3044 = vadd.f32 0.0, %v3043
  %v3045 = vpop.f32.mrb[0].mxu0
  %v3046 = vadd.f32 0.0, %v3045
  %3047 = vdwg.mxu0
  %v3048 = vadd.f32 %v2878, %v2973
  %v3049 = vadd.f32 %v2879, %v2975
  %v3050 = vadd.f32 %v2880, %v3044
  %v3051 = vadd.f32 %v2881, %v3046
  %s3052 = scalar_lea.vmem %s1, 144
  %v3053 = vld [vmem:[%s3052] sm:$0xff]
  %3054 = vrot.lane.b32.xlu0 %v833, 5
  %v3055 = vpop.permute.xlu0 %3054
  %3056 = vrot.lane.b32.xlu0 %v834, 5
  %v3057 = vpop.permute.xlu0 %3056
  %3058 = vrot.lane.b32.xlu0 %v835, 5
  %v3059 = vpop.permute.xlu0 %3058
  %3060 = vrot.lane.b32.xlu0 %v836, 5
  %v3061 = vpop.permute.xlu0 %3060
  %3062 = vrot.lane.b32.xlu0 %v837, 5
  %v3063 = vpop.permute.xlu0 %3062
  %vm3064 = vcmask 39936
  %v3065 = vsel %vm3064, %v3055, %v3057
  %v3066 = vsel %vm3064, %v3057, %v3059
  %v3067 = vsel %vm3064, %v3059, %v3061
  %v3068 = vsel %vm3064, %v3061, %v3063
  %v3074 = vsel %vm41, %v3053, 0
  %3076 = vmatprep.subr.mxu0 %v3066
  %3077 = vmatpush1.msra.mxu0 %v3065
  %3078 = vmatprep.subr.mxu0 0.0
  %3079 = vmatpush1.msra.mxu0 0.0
  %3080 = vmatprep.subr.mxu0 0.0
  %3081 = vmatpush1.msra.mxu0 0.0
  %3082 = vmatprep.subr.mxu0 0.0
  %3083 = vmatpush1.msra.mxu0 0.0
  %3084 = vmatprep.subr.mxu0 0.0
  %3085 = vmatpush1.msra.mxu0 0.0
  %3086 = vmatprep.subr.mxu0 0.0
  %3087 = vmatpush1.msra.mxu0 0.0
  %3088 = vmatprep.subr.mxu0 0.0
  %3089 = vmatpush1.msra.mxu0 0.0
  %3090 = vmatprep.subr.mxu0 0.0
  %3091 = vmatpush1.msra.mxu0 0.0
  %3092 = vmatprep.subr.mxu0 0.0
  %3093 = vmatpush1.msra.mxu0 0.0
  %3094 = vmatprep.subr.mxu0 0.0
  %3095 = vmatpush1.msra.mxu0 0.0
  %3096 = vmatprep.subr.mxu0 0.0
  %3097 = vmatpush1.msra.mxu0 0.0
  %3098 = vmatprep.subr.mxu0 0.0
  %3099 = vmatpush1.msra.mxu0 0.0
  %3100 = vmatprep.subr.mxu0 0.0
  %3101 = vmatpush1.msra.mxu0 0.0
  %3102 = vmatprep.subr.mxu0 0.0
  %3103 = vmatpush1.msra.mxu0 0.0
  %3104 = vmatprep.subr.mxu0 0.0
  %3105 = vmatpush1.msra.mxu0 0.0
  %3106 = vmatprep.subr.mxu0 0.0
  %3107 = vmatpush1.msra.mxu0 0.0
  %3108 = vmatprep.subr.mxu0 0.0
  %3109 = vmatpush1.msra.mxu0 0.0
  %3110 = vmatprep.subr.mxu0 0.0
  %3111 = vmatpush1.msra.mxu0 0.0
  %3112 = vmatprep.subr.mxu0 0.0
  %3113 = vmatpush1.msra.mxu0 0.0
  %3114 = vmatprep.subr.mxu0 0.0
  %3115 = vmatpush1.msra.mxu0 0.0
  %3116 = vmatprep.subr.mxu0 0.0
  %3117 = vmatpush1.msra.mxu0 0.0
  %3118 = vmatprep.subr.mxu0 0.0
  %3119 = vmatpush1.msra.mxu0 0.0
  %3120 = vmatprep.subr.mxu0 0.0
  %3121 = vmatpush1.msra.mxu0 0.0
  %3122 = vmatprep.subr.mxu0 0.0
  %3123 = vmatpush1.msra.mxu0 0.0
  %3124 = vmatprep.subr.mxu0 0.0
  %3125 = vmatpush1.msra.mxu0 0.0
  %3126 = vmatprep.subr.mxu0 0.0
  %3127 = vmatpush1.msra.mxu0 0.0
  %3128 = vmatprep.subr.mxu0 0.0
  %3129 = vmatpush1.msra.mxu0 0.0
  %3130 = vmatprep.subr.mxu0 0.0
  %3131 = vmatpush1.msra.mxu0 0.0
  %3132 = vmatprep.subr.mxu0 0.0
  %3133 = vmatpush1.msra.mxu0 0.0
  %3134 = vmatprep.subr.mxu0 0.0
  %3135 = vmatpush1.msra.mxu0 0.0
  %3136 = vmatprep.subr.mxu0 0.0
  %3137 = vmatpush1.msra.mxu0 0.0
  %3138 = vmatprep.subr.mxu0 0.0
  %3139 = vmatpush1.msra.mxu0 0.0
  %3140 = vmatprep.mubr.f32.mxu0 0.0
  %3141 = vmatmul.mubr.f32.gmra.mrb[0].mxu0 %v3074
  %v3142 = vpop.f32.mrb[0].mxu0
  %v3143 = vadd.f32 0.0, %v3142
  %v3144 = vpop.f32.mrb[0].mxu0
  %v3145 = vadd.f32 0.0, %v3144
  %3146 = vdwg.mxu0
  %3147 = vmatprep.subr.mxu0 %v3068
  %3148 = vmatpush1.msra.mxu0 %v3067
  %3149 = vmatprep.subr.mxu0 0.0
  %3150 = vmatpush1.msra.mxu0 0.0
  %3151 = vmatprep.subr.mxu0 0.0
  %3152 = vmatpush1.msra.mxu0 0.0
  %3153 = vmatprep.subr.mxu0 0.0
  %3154 = vmatpush1.msra.mxu0 0.0
  %3155 = vmatprep.subr.mxu0 0.0
  %3156 = vmatpush1.msra.mxu0 0.0
  %3157 = vmatprep.subr.mxu0 0.0
  %3158 = vmatpush1.msra.mxu0 0.0
  %3159 = vmatprep.subr.mxu0 0.0
  %3160 = vmatpush1.msra.mxu0 0.0
  %3161 = vmatprep.subr.mxu0 0.0
  %3162 = vmatpush1.msra.mxu0 0.0
  %3163 = vmatprep.subr.mxu0 0.0
  %3164 = vmatpush1.msra.mxu0 0.0
  %3165 = vmatprep.subr.mxu0 0.0
  %3166 = vmatpush1.msra.mxu0 0.0
  %3167 = vmatprep.subr.mxu0 0.0
  %3168 = vmatpush1.msra.mxu0 0.0
  %3169 = vmatprep.subr.mxu0 0.0
  %3170 = vmatpush1.msra.mxu0 0.0
  %3171 = vmatprep.subr.mxu0 0.0
  %3172 = vmatpush1.msra.mxu0 0.0
  %3173 = vmatprep.subr.mxu0 0.0
  %3174 = vmatpush1.msra.mxu0 0.0
  %3175 = vmatprep.subr.mxu0 0.0
  %3176 = vmatpush1.msra.mxu0 0.0
  %3177 = vmatprep.subr.mxu0 0.0
  %3178 = vmatpush1.msra.mxu0 0.0
  %3179 = vmatprep.subr.mxu0 0.0
  %3180 = vmatpush1.msra.mxu0 0.0
  %3181 = vmatprep.subr.mxu0 0.0
  %3182 = vmatpush1.msra.mxu0 0.0
  %3183 = vmatprep.subr.mxu0 0.0
  %3184 = vmatpush1.msra.mxu0 0.0
  %3185 = vmatprep.subr.mxu0 0.0
  %3186 = vmatpush1.msra.mxu0 0.0
  %3187 = vmatprep.subr.mxu0 0.0
  %3188 = vmatpush1.msra.mxu0 0.0
  %3189 = vmatprep.subr.mxu0 0.0
  %3190 = vmatpush1.msra.mxu0 0.0
  %3191 = vmatprep.subr.mxu0 0.0
  %3192 = vmatpush1.msra.mxu0 0.0
  %3193 = vmatprep.subr.mxu0 0.0
  %3194 = vmatpush1.msra.mxu0 0.0
  %3195 = vmatprep.subr.mxu0 0.0
  %3196 = vmatpush1.msra.mxu0 0.0
  %3197 = vmatprep.subr.mxu0 0.0
  %3198 = vmatpush1.msra.mxu0 0.0
  %3199 = vmatprep.subr.mxu0 0.0
  %3200 = vmatpush1.msra.mxu0 0.0
  %3201 = vmatprep.subr.mxu0 0.0
  %3202 = vmatpush1.msra.mxu0 0.0
  %3203 = vmatprep.subr.mxu0 0.0
  %3204 = vmatpush1.msra.mxu0 0.0
  %3205 = vmatprep.subr.mxu0 0.0
  %3206 = vmatpush1.msra.mxu0 0.0
  %3207 = vmatprep.subr.mxu0 0.0
  %3208 = vmatpush1.msra.mxu0 0.0
  %3209 = vmatprep.subr.mxu0 0.0
  %3210 = vmatpush1.msra.mxu0 0.0
  %3211 = vmatprep.mubr.f32.mxu0 0.0
  %3212 = vmatmul.mubr.f32.gmra.mrb[0].mxu0 %v3074
  %v3213 = vpop.f32.mrb[0].mxu0
  %v3214 = vadd.f32 0.0, %v3213
  %v3215 = vpop.f32.mrb[0].mxu0
  %v3216 = vadd.f32 0.0, %v3215
  %3217 = vdwg.mxu0
  %v3218 = vadd.f32 %v3048, %v3143
  %v3219 = vadd.f32 %v3049, %v3145
  %v3220 = vadd.f32 %v3050, %v3214
  %v3221 = vadd.f32 %v3051, %v3216
  %s3222 = scalar_lea.vmem %s1, 152
  %v3223 = vld [vmem:[%s3222] sm:$0xff]
  %3224 = vrot.lane.b32.xlu0 %v833, 4
  %v3225 = vpop.permute.xlu0 %3224
  %3226 = vrot.lane.b32.xlu0 %v834, 4
  %v3227 = vpop.permute.xlu0 %3226
  %3228 = vrot.lane.b32.xlu0 %v835, 4
  %v3229 = vpop.permute.xlu0 %3228
  %3230 = vrot.lane.b32.xlu0 %v836, 4
  %v3231 = vpop.permute.xlu0 %3230
  %3232 = vrot.lane.b32.xlu0 %v837, 4
  %v3233 = vpop.permute.xlu0 %3232
  %vm3234 = vcmask 31744
  %v3235 = vsel %vm3234, %v3225, %v3227
  %v3236 = vsel %vm3234, %v3227, %v3229
  %v3237 = vsel %vm3234, %v3229, %v3231
  %v3238 = vsel %vm3234, %v3231, %v3233
  %v3244 = vsel %vm41, %v3223, 0
  %3246 = vmatprep.subr.mxu0 %v3236
  %3247 = vmatpush1.msra.mxu0 %v3235
  %3248 = vmatprep.subr.mxu0 0.0
  %3249 = vmatpush1.msra.mxu0 0.0
  %3250 = vmatprep.subr.mxu0 0.0
  %3251 = vmatpush1.msra.mxu0 0.0
  %3252 = vmatprep.subr.mxu0 0.0
  %3253 = vmatpush1.msra.mxu0 0.0
  %3254 = vmatprep.subr.mxu0 0.0
  %3255 = vmatpush1.msra.mxu0 0.0
  %3256 = vmatprep.subr.mxu0 0.0
  %3257 = vmatpush1.msra.mxu0 0.0
  %3258 = vmatprep.subr.mxu0 0.0
  %3259 = vmatpush1.msra.mxu0 0.0
  %3260 = vmatprep.subr.mxu0 0.0
  %3261 = vmatpush1.msra.mxu0 0.0
  %3262 = vmatprep.subr.mxu0 0.0
  %3263 = vmatpush1.msra.mxu0 0.0
  %3264 = vmatprep.subr.mxu0 0.0
  %3265 = vmatpush1.msra.mxu0 0.0
  %3266 = vmatprep.subr.mxu0 0.0
  %3267 = vmatpush1.msra.mxu0 0.0
  %3268 = vmatprep.subr.mxu0 0.0
  %3269 = vmatpush1.msra.mxu0 0.0
  %3270 = vmatprep.subr.mxu0 0.0
  %3271 = vmatpush1.msra.mxu0 0.0
  %3272 = vmatprep.subr.mxu0 0.0
  %3273 = vmatpush1.msra.mxu0 0.0
  %3274 = vmatprep.subr.mxu0 0.0
  %3275 = vmatpush1.msra.mxu0 0.0
  %3276 = vmatprep.subr.mxu0 0.0
  %3277 = vmatpush1.msra.mxu0 0.0
  %3278 = vmatprep.subr.mxu0 0.0
  %3279 = vmatpush1.msra.mxu0 0.0
  %3280 = vmatprep.subr.mxu0 0.0
  %3281 = vmatpush1.msra.mxu0 0.0
  %3282 = vmatprep.subr.mxu0 0.0
  %3283 = vmatpush1.msra.mxu0 0.0
  %3284 = vmatprep.subr.mxu0 0.0
  %3285 = vmatpush1.msra.mxu0 0.0
  %3286 = vmatprep.subr.mxu0 0.0
  %3287 = vmatpush1.msra.mxu0 0.0
  %3288 = vmatprep.subr.mxu0 0.0
  %3289 = vmatpush1.msra.mxu0 0.0
  %3290 = vmatprep.subr.mxu0 0.0
  %3291 = vmatpush1.msra.mxu0 0.0
  %3292 = vmatprep.subr.mxu0 0.0
  %3293 = vmatpush1.msra.mxu0 0.0
  %3294 = vmatprep.subr.mxu0 0.0
  %3295 = vmatpush1.msra.mxu0 0.0
  %3296 = vmatprep.subr.mxu0 0.0
  %3297 = vmatpush1.msra.mxu0 0.0
  %3298 = vmatprep.subr.mxu0 0.0
  %3299 = vmatpush1.msra.mxu0 0.0
  %3300 = vmatprep.subr.mxu0 0.0
  %3301 = vmatpush1.msra.mxu0 0.0
  %3302 = vmatprep.subr.mxu0 0.0
  %3303 = vmatpush1.msra.mxu0 0.0
  %3304 = vmatprep.subr.mxu0 0.0
  %3305 = vmatpush1.msra.mxu0 0.0
  %3306 = vmatprep.subr.mxu0 0.0
  %3307 = vmatpush1.msra.mxu0 0.0
  %3308 = vmatprep.subr.mxu0 0.0
  %3309 = vmatpush1.msra.mxu0 0.0
  %3310 = vmatprep.mubr.f32.mxu0 0.0
  %3311 = vmatmul.mubr.f32.gmra.mrb[0].mxu0 %v3244
  %v3312 = vpop.f32.mrb[0].mxu0
  %v3313 = vadd.f32 0.0, %v3312
  %v3314 = vpop.f32.mrb[0].mxu0
  %v3315 = vadd.f32 0.0, %v3314
  %3316 = vdwg.mxu0
  %3317 = vmatprep.subr.mxu0 %v3238
  %3318 = vmatpush1.msra.mxu0 %v3237
  %3319 = vmatprep.subr.mxu0 0.0
  %3320 = vmatpush1.msra.mxu0 0.0
  %3321 = vmatprep.subr.mxu0 0.0
  %3322 = vmatpush1.msra.mxu0 0.0
  %3323 = vmatprep.subr.mxu0 0.0
  %3324 = vmatpush1.msra.mxu0 0.0
  %3325 = vmatprep.subr.mxu0 0.0
  %3326 = vmatpush1.msra.mxu0 0.0
  %3327 = vmatprep.subr.mxu0 0.0
  %3328 = vmatpush1.msra.mxu0 0.0
  %3329 = vmatprep.subr.mxu0 0.0
  %3330 = vmatpush1.msra.mxu0 0.0
  %3331 = vmatprep.subr.mxu0 0.0
  %3332 = vmatpush1.msra.mxu0 0.0
  %3333 = vmatprep.subr.mxu0 0.0
  %3334 = vmatpush1.msra.mxu0 0.0
  %3335 = vmatprep.subr.mxu0 0.0
  %3336 = vmatpush1.msra.mxu0 0.0
  %3337 = vmatprep.subr.mxu0 0.0
  %3338 = vmatpush1.msra.mxu0 0.0
  %3339 = vmatprep.subr.mxu0 0.0
  %3340 = vmatpush1.msra.mxu0 0.0
  %3341 = vmatprep.subr.mxu0 0.0
  %3342 = vmatpush1.msra.mxu0 0.0
  %3343 = vmatprep.subr.mxu0 0.0
  %3344 = vmatpush1.msra.mxu0 0.0
  %3345 = vmatprep.subr.mxu0 0.0
  %3346 = vmatpush1.msra.mxu0 0.0
  %3347 = vmatprep.subr.mxu0 0.0
  %3348 = vmatpush1.msra.mxu0 0.0
  %3349 = vmatprep.subr.mxu0 0.0
  %3350 = vmatpush1.msra.mxu0 0.0
  %3351 = vmatprep.subr.mxu0 0.0
  %3352 = vmatpush1.msra.mxu0 0.0
  %3353 = vmatprep.subr.mxu0 0.0
  %3354 = vmatpush1.msra.mxu0 0.0
  %3355 = vmatprep.subr.mxu0 0.0
  %3356 = vmatpush1.msra.mxu0 0.0
  %3357 = vmatprep.subr.mxu0 0.0
  %3358 = vmatpush1.msra.mxu0 0.0
  %3359 = vmatprep.subr.mxu0 0.0
  %3360 = vmatpush1.msra.mxu0 0.0
  %3361 = vmatprep.subr.mxu0 0.0
  %3362 = vmatpush1.msra.mxu0 0.0
  %3363 = vmatprep.subr.mxu0 0.0
  %3364 = vmatpush1.msra.mxu0 0.0
  %3365 = vmatprep.subr.mxu0 0.0
  %3366 = vmatpush1.msra.mxu0 0.0
  %3367 = vmatprep.subr.mxu0 0.0
  %3368 = vmatpush1.msra.mxu0 0.0
  %3369 = vmatprep.subr.mxu0 0.0
  %3370 = vmatpush1.msra.mxu0 0.0
  %3371 = vmatprep.subr.mxu0 0.0
  %3372 = vmatpush1.msra.mxu0 0.0
  %3373 = vmatprep.subr.mxu0 0.0
  %3374 = vmatpush1.msra.mxu0 0.0
  %3375 = vmatprep.subr.mxu0 0.0
  %3376 = vmatpush1.msra.mxu0 0.0
  %3377 = vmatprep.subr.mxu0 0.0
  %3378 = vmatpush1.msra.mxu0 0.0
  %3379 = vmatprep.subr.mxu0 0.0
  %3380 = vmatpush1.msra.mxu0 0.0
  %3381 = vmatprep.mubr.f32.mxu0 0.0
  %3382 = vmatmul.mubr.f32.gmra.mrb[0].mxu0 %v3244
  %v3383 = vpop.f32.mrb[0].mxu0
  %v3384 = vadd.f32 0.0, %v3383
  %v3385 = vpop.f32.mrb[0].mxu0
  %v3386 = vadd.f32 0.0, %v3385
  %3387 = vdwg.mxu0
  %v3388 = vadd.f32 %v3218, %v3313
  %v3389 = vadd.f32 %v3219, %v3315
  %v3390 = vadd.f32 %v3220, %v3384
  %v3391 = vadd.f32 %v3221, %v3386
  %s3392 = scalar_lea.vmem %s1, 160
  %v3393 = vld [vmem:[%s3392] sm:$0xff]
  %3394 = vrot.lane.b32.xlu0 %v834, 96
  %v3395 = vpop.permute.xlu0 %3394
  %3396 = vrot.lane.b32.xlu0 %v835, 96
  %v3397 = vpop.permute.xlu0 %3396
  %3398 = vrot.lane.b32.xlu0 %v836, 96
  %v3399 = vpop.permute.xlu0 %3398
  %3400 = vrot.lane.b32.xlu0 %v837, 96
  %v3401 = vpop.permute.xlu0 %3400
  %vm3402 = vcmask 785408
  %v3403 = vsel %vm3402, %v3395, %v3397
  %v3404 = vsel %vm3402, %v3397, %v3399
  %v3405 = vsel %vm3402, %v3399, %v3401
  %v3411 = vsel %vm41, %v3393, 0
  %3413 = vmatprep.subr.mxu0 %v3404
  %3414 = vmatpush1.msra.mxu0 %v3403
  %3415 = vmatprep.subr.mxu0 0.0
  %3416 = vmatpush1.msra.mxu0 0.0
  %3417 = vmatprep.subr.mxu0 0.0
  %3418 = vmatpush1.msra.mxu0 0.0
  %3419 = vmatprep.subr.mxu0 0.0
  %3420 = vmatpush1.msra.mxu0 0.0
  %3421 = vmatprep.subr.mxu0 0.0
  %3422 = vmatpush1.msra.mxu0 0.0
  %3423 = vmatprep.subr.mxu0 0.0
  %3424 = vmatpush1.msra.mxu0 0.0
  %3425 = vmatprep.subr.mxu0 0.0
  %3426 = vmatpush1.msra.mxu0 0.0
  %3427 = vmatprep.subr.mxu0 0.0
  %3428 = vmatpush1.msra.mxu0 0.0
  %3429 = vmatprep.subr.mxu0 0.0
  %3430 = vmatpush1.msra.mxu0 0.0
  %3431 = vmatprep.subr.mxu0 0.0
  %3432 = vmatpush1.msra.mxu0 0.0
  %3433 = vmatprep.subr.mxu0 0.0
  %3434 = vmatpush1.msra.mxu0 0.0
  %3435 = vmatprep.subr.mxu0 0.0
  %3436 = vmatpush1.msra.mxu0 0.0
  %3437 = vmatprep.subr.mxu0 0.0
  %3438 = vmatpush1.msra.mxu0 0.0
  %3439 = vmatprep.subr.mxu0 0.0
  %3440 = vmatpush1.msra.mxu0 0.0
  %3441 = vmatprep.subr.mxu0 0.0
  %3442 = vmatpush1.msra.mxu0 0.0
  %3443 = vmatprep.subr.mxu0 0.0
  %3444 = vmatpush1.msra.mxu0 0.0
  %3445 = vmatprep.subr.mxu0 0.0
  %3446 = vmatpush1.msra.mxu0 0.0
  %3447 = vmatprep.subr.mxu0 0.0
  %3448 = vmatpush1.msra.mxu0 0.0
  %3449 = vmatprep.subr.mxu0 0.0
  %3450 = vmatpush1.msra.mxu0 0.0
  %3451 = vmatprep.subr.mxu0 0.0
  %3452 = vmatpush1.msra.mxu0 0.0
  %3453 = vmatprep.subr.mxu0 0.0
  %3454 = vmatpush1.msra.mxu0 0.0
  %3455 = vmatprep.subr.mxu0 0.0
  %3456 = vmatpush1.msra.mxu0 0.0
  %3457 = vmatprep.subr.mxu0 0.0
  %3458 = vmatpush1.msra.mxu0 0.0
  %3459 = vmatprep.subr.mxu0 0.0
  %3460 = vmatpush1.msra.mxu0 0.0
  %3461 = vmatprep.subr.mxu0 0.0
  %3462 = vmatpush1.msra.mxu0 0.0
  %3463 = vmatprep.subr.mxu0 0.0
  %3464 = vmatpush1.msra.mxu0 0.0
  %3465 = vmatprep.subr.mxu0 0.0
  %3466 = vmatpush1.msra.mxu0 0.0
  %3467 = vmatprep.subr.mxu0 0.0
  %3468 = vmatpush1.msra.mxu0 0.0
  %3469 = vmatprep.subr.mxu0 0.0
  %3470 = vmatpush1.msra.mxu0 0.0
  %3471 = vmatprep.subr.mxu0 0.0
  %3472 = vmatpush1.msra.mxu0 0.0
  %3473 = vmatprep.subr.mxu0 0.0
  %3474 = vmatpush1.msra.mxu0 0.0
  %3475 = vmatprep.subr.mxu0 0.0
  %3476 = vmatpush1.msra.mxu0 0.0
  %3477 = vmatprep.mubr.f32.mxu0 0.0
  %3478 = vmatmul.mubr.f32.gmra.mrb[0].mxu0 %v3411
  %v3479 = vpop.f32.mrb[0].mxu0
  %v3480 = vadd.f32 0.0, %v3479
  %v3481 = vpop.f32.mrb[0].mxu0
  %v3482 = vadd.f32 0.0, %v3481
  %3483 = vdwg.mxu0
  %3484 = vmatprep.subr.mxu0 %v3401
  %3485 = vmatpush1.msra.mxu0 %v3405
  %3486 = vmatprep.subr.mxu0 0.0
  %3487 = vmatpush1.msra.mxu0 0.0
  %3488 = vmatprep.subr.mxu0 0.0
  %3489 = vmatpush1.msra.mxu0 0.0
  %3490 = vmatprep.subr.mxu0 0.0
  %3491 = vmatpush1.msra.mxu0 0.0
  %3492 = vmatprep.subr.mxu0 0.0
  %3493 = vmatpush1.msra.mxu0 0.0
  %3494 = vmatprep.subr.mxu0 0.0
  %3495 = vmatpush1.msra.mxu0 0.0
  %3496 = vmatprep.subr.mxu0 0.0
  %3497 = vmatpush1.msra.mxu0 0.0
  %3498 = vmatprep.subr.mxu0 0.0
  %3499 = vmatpush1.msra.mxu0 0.0
  %3500 = vmatprep.subr.mxu0 0.0
  %3501 = vmatpush1.msra.mxu0 0.0
  %3502 = vmatprep.subr.mxu0 0.0
  %3503 = vmatpush1.msra.mxu0 0.0
  %3504 = vmatprep.subr.mxu0 0.0
  %3505 = vmatpush1.msra.mxu0 0.0
  %3506 = vmatprep.subr.mxu0 0.0
  %3507 = vmatpush1.msra.mxu0 0.0
  %3508 = vmatprep.subr.mxu0 0.0
  %3509 = vmatpush1.msra.mxu0 0.0
  %3510 = vmatprep.subr.mxu0 0.0
  %3511 = vmatpush1.msra.mxu0 0.0
  %3512 = vmatprep.subr.mxu0 0.0
  %3513 = vmatpush1.msra.mxu0 0.0
  %3514 = vmatprep.subr.mxu0 0.0
  %3515 = vmatpush1.msra.mxu0 0.0
  %3516 = vmatprep.subr.mxu0 0.0
  %3517 = vmatpush1.msra.mxu0 0.0
  %3518 = vmatprep.subr.mxu0 0.0
  %3519 = vmatpush1.msra.mxu0 0.0
  %3520 = vmatprep.subr.mxu0 0.0
  %3521 = vmatpush1.msra.mxu0 0.0
  %3522 = vmatprep.subr.mxu0 0.0
  %3523 = vmatpush1.msra.mxu0 0.0
  %3524 = vmatprep.subr.mxu0 0.0
  %3525 = vmatpush1.msra.mxu0 0.0
  %3526 = vmatprep.subr.mxu0 0.0
  %3527 = vmatpush1.msra.mxu0 0.0
  %3528 = vmatprep.subr.mxu0 0.0
  %3529 = vmatpush1.msra.mxu0 0.0
  %3530 = vmatprep.subr.mxu0 0.0
  %3531 = vmatpush1.msra.mxu0 0.0
  %3532 = vmatprep.subr.mxu0 0.0
  %3533 = vmatpush1.msra.mxu0 0.0
  %3534 = vmatprep.subr.mxu0 0.0
  %3535 = vmatpush1.msra.mxu0 0.0
  %3536 = vmatprep.subr.mxu0 0.0
  %3537 = vmatpush1.msra.mxu0 0.0
  %3538 = vmatprep.subr.mxu0 0.0
  %3539 = vmatpush1.msra.mxu0 0.0
  %3540 = vmatprep.subr.mxu0 0.0
  %3541 = vmatpush1.msra.mxu0 0.0
  %3542 = vmatprep.subr.mxu0 0.0
  %3543 = vmatpush1.msra.mxu0 0.0
  %3544 = vmatprep.subr.mxu0 0.0
  %3545 = vmatpush1.msra.mxu0 0.0
  %3546 = vmatprep.subr.mxu0 0.0
  %3547 = vmatpush1.msra.mxu0 0.0
  %3548 = vmatprep.mubr.f32.mxu0 0.0
  %3549 = vmatmul.mubr.f32.gmra.mrb[0].mxu0 %v3411
  %v3550 = vpop.f32.mrb[0].mxu0
  %v3551 = vadd.f32 0.0, %v3550
  %v3552 = vpop.f32.mrb[0].mxu0
  %v3553 = vadd.f32 0.0, %v3552
  %3554 = vdwg.mxu0
  %v3555 = vadd.f32 %v3388, %v3480
  %v3556 = vadd.f32 %v3389, %v3482
  %v3557 = vadd.f32 %v3390, %v3551
  %v3558 = vadd.f32 %v3391, %v3553
  %v3559 = vld [vmem:[%s0 + $0x8] sm:$0xff]
  %v3560 = vld [vmem:[%s0 + $0x10] sm:$0xff]
  %v3561 = vld [vmem:[%s0 + $0x18] sm:$0xff]
  %v3562 = vld [vmem:[%s0 + $0x20] sm:$0xff]
  %v3563 = vld [vmem:[%s0 + $0x28] sm:$0xff]
  %s3564 = scalar_lea.vmem %s1, 168
  %v3565 = vld [vmem:[%s3564] sm:$0xff]
  %3571 = vrot.lane.b32.xlu0 %v3559, 95
  %v3572 = vpop.permute.xlu0 %3571
  %3573 = vrot.lane.b32.xlu0 %v3560, 95
  %v3574 = vpop.permute.xlu0 %3573
  %3575 = vrot.lane.b32.xlu0 %v3561, 95
  %v3576 = vpop.permute.xlu0 %3575
  %3577 = vrot.lane.b32.xlu0 %v3562, 95
  %v3578 = vpop.permute.xlu0 %3577
  %3579 = vrot.lane.b32.xlu0 %v3563, 95
  %v3580 = vpop.permute.xlu0 %3579
  %vm3581 = vcmask 777216
  %v3582 = vsel %vm3581, %v3572, %v3574
  %v3583 = vsel %vm3581, %v3574, %v3576
  %v3584 = vsel %vm3581, %v3576, %v3578
  %v3585 = vsel %vm3581, %v3578, %v3580
  %v3591 = vsel %vm41, %v3565, 0
  %3593 = vmatprep.subr.mxu0 %v3583
  %3594 = vmatpush1.msra.mxu0 %v3582
  %3595 = vmatprep.subr.mxu0 0.0
  %3596 = vmatpush1.msra.mxu0 0.0
  %3597 = vmatprep.subr.mxu0 0.0
  %3598 = vmatpush1.msra.mxu0 0.0
  %3599 = vmatprep.subr.mxu0 0.0
  %3600 = vmatpush1.msra.mxu0 0.0
  %3601 = vmatprep.subr.mxu0 0.0
  %3602 = vmatpush1.msra.mxu0 0.0
  %3603 = vmatprep.subr.mxu0 0.0
  %3604 = vmatpush1.msra.mxu0 0.0
  %3605 = vmatprep.subr.mxu0 0.0
  %3606 = vmatpush1.msra.mxu0 0.0
  %3607 = vmatprep.subr.mxu0 0.0
  %3608 = vmatpush1.msra.mxu0 0.0
  %3609 = vmatprep.subr.mxu0 0.0
  %3610 = vmatpush1.msra.mxu0 0.0
  %3611 = vmatprep.subr.mxu0 0.0
  %3612 = vmatpush1.msra.mxu0 0.0
  %3613 = vmatprep.subr.mxu0 0.0
  %3614 = vmatpush1.msra.mxu0 0.0
  %3615 = vmatprep.subr.mxu0 0.0
  %3616 = vmatpush1.msra.mxu0 0.0
  %3617 = vmatprep.subr.mxu0 0.0
  %3618 = vmatpush1.msra.mxu0 0.0
  %3619 = vmatprep.subr.mxu0 0.0
  %3620 = vmatpush1.msra.mxu0 0.0
  %3621 = vmatprep.subr.mxu0 0.0
  %3622 = vmatpush1.msra.mxu0 0.0
  %3623 = vmatprep.subr.mxu0 0.0
  %3624 = vmatpush1.msra.mxu0 0.0
  %3625 = vmatprep.subr.mxu0 0.0
  %3626 = vmatpush1.msra.mxu0 0.0
  %3627 = vmatprep.subr.mxu0 0.0
  %3628 = vmatpush1.msra.mxu0 0.0
  %3629 = vmatprep.subr.mxu0 0.0
  %3630 = vmatpush1.msra.mxu0 0.0
  %3631 = vmatprep.subr.mxu0 0.0
  %3632 = vmatpush1.msra.mxu0 0.0
  %3633 = vmatprep.subr.mxu0 0.0
  %3634 = vmatpush1.msra.mxu0 0.0
  %3635 = vmatprep.subr.mxu0 0.0
  %3636 = vmatpush1.msra.mxu0 0.0
  %3637 = vmatprep.subr.mxu0 0.0
  %3638 = vmatpush1.msra.mxu0 0.0
  %3639 = vmatprep.subr.mxu0 0.0
  %3640 = vmatpush1.msra.mxu0 0.0
  %3641 = vmatprep.subr.mxu0 0.0
  %3642 = vmatpush1.msra.mxu0 0.0
  %3643 = vmatprep.subr.mxu0 0.0
  %3644 = vmatpush1.msra.mxu0 0.0
  %3645 = vmatprep.subr.mxu0 0.0
  %3646 = vmatpush1.msra.mxu0 0.0
  %3647 = vmatprep.subr.mxu0 0.0
  %3648 = vmatpush1.msra.mxu0 0.0
  %3649 = vmatprep.subr.mxu0 0.0
  %3650 = vmatpush1.msra.mxu0 0.0
  %3651 = vmatprep.subr.mxu0 0.0
  %3652 = vmatpush1.msra.mxu0 0.0
  %3653 = vmatprep.subr.mxu0 0.0
  %3654 = vmatpush1.msra.mxu0 0.0
  %3655 = vmatprep.subr.mxu0 0.0
  %3656 = vmatpush1.msra.mxu0 0.0
  %3657 = vmatprep.mubr.f32.mxu0 0.0
  %3658 = vmatmul.mubr.f32.gmra.mrb[0].mxu0 %v3591
  %v3659 = vpop.f32.mrb[0].mxu0
  %v3660 = vadd.f32 0.0, %v3659
  %v3661 = vpop.f32.mrb[0].mxu0
  %v3662 = vadd.f32 0.0, %v3661
  %3663 = vdwg.mxu0
  %3664 = vmatprep.subr.mxu0 %v3585
  %3665 = vmatpush1.msra.mxu0 %v3584
  %3666 = vmatprep.subr.mxu0 0.0
  %3667 = vmatpush1.msra.mxu0 0.0
  %3668 = vmatprep.subr.mxu0 0.0
  %3669 = vmatpush1.msra.mxu0 0.0
  %3670 = vmatprep.subr.mxu0 0.0
  %3671 = vmatpush1.msra.mxu0 0.0
  %3672 = vmatprep.subr.mxu0 0.0
  %3673 = vmatpush1.msra.mxu0 0.0
  %3674 = vmatprep.subr.mxu0 0.0
  %3675 = vmatpush1.msra.mxu0 0.0
  %3676 = vmatprep.subr.mxu0 0.0
  %3677 = vmatpush1.msra.mxu0 0.0
  %3678 = vmatprep.subr.mxu0 0.0
  %3679 = vmatpush1.msra.mxu0 0.0
  %3680 = vmatprep.subr.mxu0 0.0
  %3681 = vmatpush1.msra.mxu0 0.0
  %3682 = vmatprep.subr.mxu0 0.0
  %3683 = vmatpush1.msra.mxu0 0.0
  %3684 = vmatprep.subr.mxu0 0.0
  %3685 = vmatpush1.msra.mxu0 0.0
  %3686 = vmatprep.subr.mxu0 0.0
  %3687 = vmatpush1.msra.mxu0 0.0
  %3688 = vmatprep.subr.mxu0 0.0
  %3689 = vmatpush1.msra.mxu0 0.0
  %3690 = vmatprep.subr.mxu0 0.0
  %3691 = vmatpush1.msra.mxu0 0.0
  %3692 = vmatprep.subr.mxu0 0.0
  %3693 = vmatpush1.msra.mxu0 0.0
  %3694 = vmatprep.subr.mxu0 0.0
  %3695 = vmatpush1.msra.mxu0 0.0
  %3696 = vmatprep.subr.mxu0 0.0
  %3697 = vmatpush1.msra.mxu0 0.0
  %3698 = vmatprep.subr.mxu0 0.0
  %3699 = vmatpush1.msra.mxu0 0.0
  %3700 = vmatprep.subr.mxu0 0.0
  %3701 = vmatpush1.msra.mxu0 0.0
  %3702 = vmatprep.subr.mxu0 0.0
  %3703 = vmatpush1.msra.mxu0 0.0
  %3704 = vmatprep.subr.mxu0 0.0
  %3705 = vmatpush1.msra.mxu0 0.0
  %3706 = vmatprep.subr.mxu0 0.0
  %3707 = vmatpush1.msra.mxu0 0.0
  %3708 = vmatprep.subr.mxu0 0.0
  %3709 = vmatpush1.msra.mxu0 0.0
  %3710 = vmatprep.subr.mxu0 0.0
  %3711 = vmatpush1.msra.mxu0 0.0
  %3712 = vmatprep.subr.mxu0 0.0
  %3713 = vmatpush1.msra.mxu0 0.0
  %3714 = vmatprep.subr.mxu0 0.0
  %3715 = vmatpush1.msra.mxu0 0.0
  %3716 = vmatprep.subr.mxu0 0.0
  %3717 = vmatpush1.msra.mxu0 0.0
  %3718 = vmatprep.subr.mxu0 0.0
  %3719 = vmatpush1.msra.mxu0 0.0
  %3720 = vmatprep.subr.mxu0 0.0
  %3721 = vmatpush1.msra.mxu0 0.0
  %3722 = vmatprep.subr.mxu0 0.0
  %3723 = vmatpush1.msra.mxu0 0.0
  %3724 = vmatprep.subr.mxu0 0.0
  %3725 = vmatpush1.msra.mxu0 0.0
  %3726 = vmatprep.subr.mxu0 0.0
  %3727 = vmatpush1.msra.mxu0 0.0
  %3728 = vmatprep.mubr.f32.mxu0 0.0
  %3729 = vmatmul.mubr.f32.gmra.mrb[0].mxu0 %v3591
  %v3730 = vpop.f32.mrb[0].mxu0
  %v3731 = vadd.f32 0.0, %v3730
  %v3732 = vpop.f32.mrb[0].mxu0
  %v3733 = vadd.f32 0.0, %v3732
  %3734 = vdwg.mxu0
  %v3735 = vadd.f32 %v3555, %v3660
  %v3736 = vadd.f32 %v3556, %v3662
  %v3737 = vadd.f32 %v3557, %v3731
  %v3738 = vadd.f32 %v3558, %v3733
  %s3739 = scalar_lea.vmem %s1, 176
  %v3740 = vld [vmem:[%s3739] sm:$0xff]
  %3741 = vrot.lane.b32.xlu0 %v3559, 94
  %v3742 = vpop.permute.xlu0 %3741
  %3743 = vrot.lane.b32.xlu0 %v3560, 94
  %v3744 = vpop.permute.xlu0 %3743
  %3745 = vrot.lane.b32.xlu0 %v3561, 94
  %v3746 = vpop.permute.xlu0 %3745
  %3747 = vrot.lane.b32.xlu0 %v3562, 94
  %v3748 = vpop.permute.xlu0 %3747
  %3749 = vrot.lane.b32.xlu0 %v3563, 94
  %v3750 = vpop.permute.xlu0 %3749
  %vm3751 = vcmask 769024
  %v3752 = vsel %vm3751, %v3742, %v3744
  %v3753 = vsel %vm3751, %v3744, %v3746
  %v3754 = vsel %vm3751, %v3746, %v3748
  %v3755 = vsel %vm3751, %v3748, %v3750
  %v3761 = vsel %vm41, %v3740, 0
  %3763 = vmatprep.subr.mxu0 %v3753
  %3764 = vmatpush1.msra.mxu0 %v3752
  %3765 = vmatprep.subr.mxu0 0.0
  %3766 = vmatpush1.msra.mxu0 0.0
  %3767 = vmatprep.subr.mxu0 0.0
  %3768 = vmatpush1.msra.mxu0 0.0
  %3769 = vmatprep.subr.mxu0 0.0
  %3770 = vmatpush1.msra.mxu0 0.0
  %3771 = vmatprep.subr.mxu0 0.0
  %3772 = vmatpush1.msra.mxu0 0.0
  %3773 = vmatprep.subr.mxu0 0.0
  %3774 = vmatpush1.msra.mxu0 0.0
  %3775 = vmatprep.subr.mxu0 0.0
  %3776 = vmatpush1.msra.mxu0 0.0
  %3777 = vmatprep.subr.mxu0 0.0
  %3778 = vmatpush1.msra.mxu0 0.0
  %3779 = vmatprep.subr.mxu0 0.0
  %3780 = vmatpush1.msra.mxu0 0.0
  %3781 = vmatprep.subr.mxu0 0.0
  %3782 = vmatpush1.msra.mxu0 0.0
  %3783 = vmatprep.subr.mxu0 0.0
  %3784 = vmatpush1.msra.mxu0 0.0
  %3785 = vmatprep.subr.mxu0 0.0
  %3786 = vmatpush1.msra.mxu0 0.0
  %3787 = vmatprep.subr.mxu0 0.0
  %3788 = vmatpush1.msra.mxu0 0.0
  %3789 = vmatprep.subr.mxu0 0.0
  %3790 = vmatpush1.msra.mxu0 0.0
  %3791 = vmatprep.subr.mxu0 0.0
  %3792 = vmatpush1.msra.mxu0 0.0
  %3793 = vmatprep.subr.mxu0 0.0
  %3794 = vmatpush1.msra.mxu0 0.0
  %3795 = vmatprep.subr.mxu0 0.0
  %3796 = vmatpush1.msra.mxu0 0.0
  %3797 = vmatprep.subr.mxu0 0.0
  %3798 = vmatpush1.msra.mxu0 0.0
  %3799 = vmatprep.subr.mxu0 0.0
  %3800 = vmatpush1.msra.mxu0 0.0
  %3801 = vmatprep.subr.mxu0 0.0
  %3802 = vmatpush1.msra.mxu0 0.0
  %3803 = vmatprep.subr.mxu0 0.0
  %3804 = vmatpush1.msra.mxu0 0.0
  %3805 = vmatprep.subr.mxu0 0.0
  %3806 = vmatpush1.msra.mxu0 0.0
  %3807 = vmatprep.subr.mxu0 0.0
  %3808 = vmatpush1.msra.mxu0 0.0
  %3809 = vmatprep.subr.mxu0 0.0
  %3810 = vmatpush1.msra.mxu0 0.0
  %3811 = vmatprep.subr.mxu0 0.0
  %3812 = vmatpush1.msra.mxu0 0.0
  %3813 = vmatprep.subr.mxu0 0.0
  %3814 = vmatpush1.msra.mxu0 0.0
  %3815 = vmatprep.subr.mxu0 0.0
  %3816 = vmatpush1.msra.mxu0 0.0
  %3817 = vmatprep.subr.mxu0 0.0
  %3818 = vmatpush1.msra.mxu0 0.0
  %3819 = vmatprep.subr.mxu0 0.0
  %3820 = vmatpush1.msra.mxu0 0.0
  %3821 = vmatprep.subr.mxu0 0.0
  %3822 = vmatpush1.msra.mxu0 0.0
  %3823 = vmatprep.subr.mxu0 0.0
  %3824 = vmatpush1.msra.mxu0 0.0
  %3825 = vmatprep.subr.mxu0 0.0
  %3826 = vmatpush1.msra.mxu0 0.0
  %3827 = vmatprep.mubr.f32.mxu0 0.0
  %3828 = vmatmul.mubr.f32.gmra.mrb[0].mxu0 %v3761
  %v3829 = vpop.f32.mrb[0].mxu0
  %v3830 = vadd.f32 0.0, %v3829
  %v3831 = vpop.f32.mrb[0].mxu0
  %v3832 = vadd.f32 0.0, %v3831
  %3833 = vdwg.mxu0
  %3834 = vmatprep.subr.mxu0 %v3755
  %3835 = vmatpush1.msra.mxu0 %v3754
  %3836 = vmatprep.subr.mxu0 0.0
  %3837 = vmatpush1.msra.mxu0 0.0
  %3838 = vmatprep.subr.mxu0 0.0
  %3839 = vmatpush1.msra.mxu0 0.0
  %3840 = vmatprep.subr.mxu0 0.0
  %3841 = vmatpush1.msra.mxu0 0.0
  %3842 = vmatprep.subr.mxu0 0.0
  %3843 = vmatpush1.msra.mxu0 0.0
  %3844 = vmatprep.subr.mxu0 0.0
  %3845 = vmatpush1.msra.mxu0 0.0
  %3846 = vmatprep.subr.mxu0 0.0
  %3847 = vmatpush1.msra.mxu0 0.0
  %3848 = vmatprep.subr.mxu0 0.0
  %3849 = vmatpush1.msra.mxu0 0.0
  %3850 = vmatprep.subr.mxu0 0.0
  %3851 = vmatpush1.msra.mxu0 0.0
  %3852 = vmatprep.subr.mxu0 0.0
  %3853 = vmatpush1.msra.mxu0 0.0
  %3854 = vmatprep.subr.mxu0 0.0
  %3855 = vmatpush1.msra.mxu0 0.0
  %3856 = vmatprep.subr.mxu0 0.0
  %3857 = vmatpush1.msra.mxu0 0.0
  %3858 = vmatprep.subr.mxu0 0.0
  %3859 = vmatpush1.msra.mxu0 0.0
  %3860 = vmatprep.subr.mxu0 0.0
  %3861 = vmatpush1.msra.mxu0 0.0
  %3862 = vmatprep.subr.mxu0 0.0
  %3863 = vmatpush1.msra.mxu0 0.0
  %3864 = vmatprep.subr.mxu0 0.0
  %3865 = vmatpush1.msra.mxu0 0.0
  %3866 = vmatprep.subr.mxu0 0.0
  %3867 = vmatpush1.msra.mxu0 0.0
  %3868 = vmatprep.subr.mxu0 0.0
  %3869 = vmatpush1.msra.mxu0 0.0
  %3870 = vmatprep.subr.mxu0 0.0
  %3871 = vmatpush1.msra.mxu0 0.0
  %3872 = vmatprep.subr.mxu0 0.0
  %3873 = vmatpush1.msra.mxu0 0.0
  %3874 = vmatprep.subr.mxu0 0.0
  %3875 = vmatpush1.msra.mxu0 0.0
  %3876 = vmatprep.subr.mxu0 0.0
  %3877 = vmatpush1.msra.mxu0 0.0
  %3878 = vmatprep.subr.mxu0 0.0
  %3879 = vmatpush1.msra.mxu0 0.0
  %3880 = vmatprep.subr.mxu0 0.0
  %3881 = vmatpush1.msra.mxu0 0.0
  %3882 = vmatprep.subr.mxu0 0.0
  %3883 = vmatpush1.msra.mxu0 0.0
  %3884 = vmatprep.subr.mxu0 0.0
  %3885 = vmatpush1.msra.mxu0 0.0
  %3886 = vmatprep.subr.mxu0 0.0
  %3887 = vmatpush1.msra.mxu0 0.0
  %3888 = vmatprep.subr.mxu0 0.0
  %3889 = vmatpush1.msra.mxu0 0.0
  %3890 = vmatprep.subr.mxu0 0.0
  %3891 = vmatpush1.msra.mxu0 0.0
  %3892 = vmatprep.subr.mxu0 0.0
  %3893 = vmatpush1.msra.mxu0 0.0
  %3894 = vmatprep.subr.mxu0 0.0
  %3895 = vmatpush1.msra.mxu0 0.0
  %3896 = vmatprep.subr.mxu0 0.0
  %3897 = vmatpush1.msra.mxu0 0.0
  %3898 = vmatprep.mubr.f32.mxu0 0.0
  %3899 = vmatmul.mubr.f32.gmra.mrb[0].mxu0 %v3761
  %v3900 = vpop.f32.mrb[0].mxu0
  %v3901 = vadd.f32 0.0, %v3900
  %v3902 = vpop.f32.mrb[0].mxu0
  %v3903 = vadd.f32 0.0, %v3902
  %3904 = vdwg.mxu0
  %v3905 = vadd.f32 %v3735, %v3830
  %v3906 = vadd.f32 %v3736, %v3832
  %v3907 = vadd.f32 %v3737, %v3901
  %v3908 = vadd.f32 %v3738, %v3903
  %s3909 = scalar_lea.vmem %s1, 184
  %v3910 = vld [vmem:[%s3909] sm:$0xff]
  %3911 = vrot.lane.b32.xlu0 %v3559, 93
  %v3912 = vpop.permute.xlu0 %3911
  %3913 = vrot.lane.b32.xlu0 %v3560, 93
  %v3914 = vpop.permute.xlu0 %3913
  %3915 = vrot.lane.b32.xlu0 %v3561, 93
  %v3916 = vpop.permute.xlu0 %3915
  %3917 = vrot.lane.b32.xlu0 %v3562, 93
  %v3918 = vpop.permute.xlu0 %3917
  %3919 = vrot.lane.b32.xlu0 %v3563, 93
  %v3920 = vpop.permute.xlu0 %3919
  %vm3921 = vcmask 760832
  %v3922 = vsel %vm3921, %v3912, %v3914
  %v3923 = vsel %vm3921, %v3914, %v3916
  %v3924 = vsel %vm3921, %v3916, %v3918
  %v3925 = vsel %vm3921, %v3918, %v3920
  %v3931 = vsel %vm41, %v3910, 0
  %3933 = vmatprep.subr.mxu0 %v3923
  %3934 = vmatpush1.msra.mxu0 %v3922
  %3935 = vmatprep.subr.mxu0 0.0
  %3936 = vmatpush1.msra.mxu0 0.0
  %3937 = vmatprep.subr.mxu0 0.0
  %3938 = vmatpush1.msra.mxu0 0.0
  %3939 = vmatprep.subr.mxu0 0.0
  %3940 = vmatpush1.msra.mxu0 0.0
  %3941 = vmatprep.subr.mxu0 0.0
  %3942 = vmatpush1.msra.mxu0 0.0
  %3943 = vmatprep.subr.mxu0 0.0
  %3944 = vmatpush1.msra.mxu0 0.0
  %3945 = vmatprep.subr.mxu0 0.0
  %3946 = vmatpush1.msra.mxu0 0.0
  %3947 = vmatprep.subr.mxu0 0.0
  %3948 = vmatpush1.msra.mxu0 0.0
  %3949 = vmatprep.subr.mxu0 0.0
  %3950 = vmatpush1.msra.mxu0 0.0
  %3951 = vmatprep.subr.mxu0 0.0
  %3952 = vmatpush1.msra.mxu0 0.0
  %3953 = vmatprep.subr.mxu0 0.0
  %3954 = vmatpush1.msra.mxu0 0.0
  %3955 = vmatprep.subr.mxu0 0.0
  %3956 = vmatpush1.msra.mxu0 0.0
  %3957 = vmatprep.subr.mxu0 0.0
  %3958 = vmatpush1.msra.mxu0 0.0
  %3959 = vmatprep.subr.mxu0 0.0
  %3960 = vmatpush1.msra.mxu0 0.0
  %3961 = vmatprep.subr.mxu0 0.0
  %3962 = vmatpush1.msra.mxu0 0.0
  %3963 = vmatprep.subr.mxu0 0.0
  %3964 = vmatpush1.msra.mxu0 0.0
  %3965 = vmatprep.subr.mxu0 0.0
  %3966 = vmatpush1.msra.mxu0 0.0
  %3967 = vmatprep.subr.mxu0 0.0
  %3968 = vmatpush1.msra.mxu0 0.0
  %3969 = vmatprep.subr.mxu0 0.0
  %3970 = vmatpush1.msra.mxu0 0.0
  %3971 = vmatprep.subr.mxu0 0.0
  %3972 = vmatpush1.msra.mxu0 0.0
  %3973 = vmatprep.subr.mxu0 0.0
  %3974 = vmatpush1.msra.mxu0 0.0
  %3975 = vmatprep.subr.mxu0 0.0
  %3976 = vmatpush1.msra.mxu0 0.0
  %3977 = vmatprep.subr.mxu0 0.0
  %3978 = vmatpush1.msra.mxu0 0.0
  %3979 = vmatprep.subr.mxu0 0.0
  %3980 = vmatpush1.msra.mxu0 0.0
  %3981 = vmatprep.subr.mxu0 0.0
  %3982 = vmatpush1.msra.mxu0 0.0
  %3983 = vmatprep.subr.mxu0 0.0
  %3984 = vmatpush1.msra.mxu0 0.0
  %3985 = vmatprep.subr.mxu0 0.0
  %3986 = vmatpush1.msra.mxu0 0.0
  %3987 = vmatprep.subr.mxu0 0.0
  %3988 = vmatpush1.msra.mxu0 0.0
  %3989 = vmatprep.subr.mxu0 0.0
  %3990 = vmatpush1.msra.mxu0 0.0
  %3991 = vmatprep.subr.mxu0 0.0
  %3992 = vmatpush1.msra.mxu0 0.0
  %3993 = vmatprep.subr.mxu0 0.0
  %3994 = vmatpush1.msra.mxu0 0.0
  %3995 = vmatprep.subr.mxu0 0.0
  %3996 = vmatpush1.msra.mxu0 0.0
  %3997 = vmatprep.mubr.f32.mxu0 0.0
  %3998 = vmatmul.mubr.f32.gmra.mrb[0].mxu0 %v3931
  %v3999 = vpop.f32.mrb[0].mxu0
  %v4000 = vadd.f32 0.0, %v3999
  %v4001 = vpop.f32.mrb[0].mxu0
  %v4002 = vadd.f32 0.0, %v4001
  %4003 = vdwg.mxu0
  %4004 = vmatprep.subr.mxu0 %v3925
  %4005 = vmatpush1.msra.mxu0 %v3924
  %4006 = vmatprep.subr.mxu0 0.0
  %4007 = vmatpush1.msra.mxu0 0.0
  %4008 = vmatprep.subr.mxu0 0.0
  %4009 = vmatpush1.msra.mxu0 0.0
  %4010 = vmatprep.subr.mxu0 0.0
  %4011 = vmatpush1.msra.mxu0 0.0
  %4012 = vmatprep.subr.mxu0 0.0
  %4013 = vmatpush1.msra.mxu0 0.0
  %4014 = vmatprep.subr.mxu0 0.0
  %4015 = vmatpush1.msra.mxu0 0.0
  %4016 = vmatprep.subr.mxu0 0.0
  %4017 = vmatpush1.msra.mxu0 0.0
  %4018 = vmatprep.subr.mxu0 0.0
  %4019 = vmatpush1.msra.mxu0 0.0
  %4020 = vmatprep.subr.mxu0 0.0
  %4021 = vmatpush1.msra.mxu0 0.0
  %4022 = vmatprep.subr.mxu0 0.0
  %4023 = vmatpush1.msra.mxu0 0.0
  %4024 = vmatprep.subr.mxu0 0.0
  %4025 = vmatpush1.msra.mxu0 0.0
  %4026 = vmatprep.subr.mxu0 0.0
  %4027 = vmatpush1.msra.mxu0 0.0
  %4028 = vmatprep.subr.mxu0 0.0
  %4029 = vmatpush1.msra.mxu0 0.0
  %4030 = vmatprep.subr.mxu0 0.0
  %4031 = vmatpush1.msra.mxu0 0.0
  %4032 = vmatprep.subr.mxu0 0.0
  %4033 = vmatpush1.msra.mxu0 0.0
  %4034 = vmatprep.subr.mxu0 0.0
  %4035 = vmatpush1.msra.mxu0 0.0
  %4036 = vmatprep.subr.mxu0 0.0
  %4037 = vmatpush1.msra.mxu0 0.0
  %4038 = vmatprep.subr.mxu0 0.0
  %4039 = vmatpush1.msra.mxu0 0.0
  %4040 = vmatprep.subr.mxu0 0.0
  %4041 = vmatpush1.msra.mxu0 0.0
  %4042 = vmatprep.subr.mxu0 0.0
  %4043 = vmatpush1.msra.mxu0 0.0
  %4044 = vmatprep.subr.mxu0 0.0
  %4045 = vmatpush1.msra.mxu0 0.0
  %4046 = vmatprep.subr.mxu0 0.0
  %4047 = vmatpush1.msra.mxu0 0.0
  %4048 = vmatprep.subr.mxu0 0.0
  %4049 = vmatpush1.msra.mxu0 0.0
  %4050 = vmatprep.subr.mxu0 0.0
  %4051 = vmatpush1.msra.mxu0 0.0
  %4052 = vmatprep.subr.mxu0 0.0
  %4053 = vmatpush1.msra.mxu0 0.0
  %4054 = vmatprep.subr.mxu0 0.0
  %4055 = vmatpush1.msra.mxu0 0.0
  %4056 = vmatprep.subr.mxu0 0.0
  %4057 = vmatpush1.msra.mxu0 0.0
  %4058 = vmatprep.subr.mxu0 0.0
  %4059 = vmatpush1.msra.mxu0 0.0
  %4060 = vmatprep.subr.mxu0 0.0
  %4061 = vmatpush1.msra.mxu0 0.0
  %4062 = vmatprep.subr.mxu0 0.0
  %4063 = vmatpush1.msra.mxu0 0.0
  %4064 = vmatprep.subr.mxu0 0.0
  %4065 = vmatpush1.msra.mxu0 0.0
  %4066 = vmatprep.subr.mxu0 0.0
  %4067 = vmatpush1.msra.mxu0 0.0
  %4068 = vmatprep.mubr.f32.mxu0 0.0
  %4069 = vmatmul.mubr.f32.gmra.mrb[0].mxu0 %v3931
  %v4070 = vpop.f32.mrb[0].mxu0
  %v4071 = vadd.f32 0.0, %v4070
  %v4072 = vpop.f32.mrb[0].mxu0
  %v4073 = vadd.f32 0.0, %v4072
  %4074 = vdwg.mxu0
  %v4075 = vadd.f32 %v3905, %v4000
  %v4076 = vadd.f32 %v3906, %v4002
  %v4077 = vadd.f32 %v3907, %v4071
  %v4078 = vadd.f32 %v3908, %v4073
  %s4079 = scalar_lea.vmem %s1, 192
  %v4080 = vld [vmem:[%s4079] sm:$0xff]
  %4081 = vrot.lane.b32.xlu0 %v3559, 92
  %v4082 = vpop.permute.xlu0 %4081
  %4083 = vrot.lane.b32.xlu0 %v3560, 92
  %v4084 = vpop.permute.xlu0 %4083
  %4085 = vrot.lane.b32.xlu0 %v3561, 92
  %v4086 = vpop.permute.xlu0 %4085
  %4087 = vrot.lane.b32.xlu0 %v3562, 92
  %v4088 = vpop.permute.xlu0 %4087
  %4089 = vrot.lane.b32.xlu0 %v3563, 92
  %v4090 = vpop.permute.xlu0 %4089
  %vm4091 = vcmask 752640
  %v4092 = vsel %vm4091, %v4082, %v4084
  %v4093 = vsel %vm4091, %v4084, %v4086
  %v4094 = vsel %vm4091, %v4086, %v4088
  %v4095 = vsel %vm4091, %v4088, %v4090
  %v4101 = vsel %vm41, %v4080, 0
  %4103 = vmatprep.subr.mxu0 %v4093
  %4104 = vmatpush1.msra.mxu0 %v4092
  %4105 = vmatprep.subr.mxu0 0.0
  %4106 = vmatpush1.msra.mxu0 0.0
  %4107 = vmatprep.subr.mxu0 0.0
  %4108 = vmatpush1.msra.mxu0 0.0
  %4109 = vmatprep.subr.mxu0 0.0
  %4110 = vmatpush1.msra.mxu0 0.0
  %4111 = vmatprep.subr.mxu0 0.0
  %4112 = vmatpush1.msra.mxu0 0.0
  %4113 = vmatprep.subr.mxu0 0.0
  %4114 = vmatpush1.msra.mxu0 0.0
  %4115 = vmatprep.subr.mxu0 0.0
  %4116 = vmatpush1.msra.mxu0 0.0
  %4117 = vmatprep.subr.mxu0 0.0
  %4118 = vmatpush1.msra.mxu0 0.0
  %4119 = vmatprep.subr.mxu0 0.0
  %4120 = vmatpush1.msra.mxu0 0.0
  %4121 = vmatprep.subr.mxu0 0.0
  %4122 = vmatpush1.msra.mxu0 0.0
  %4123 = vmatprep.subr.mxu0 0.0
  %4124 = vmatpush1.msra.mxu0 0.0
  %4125 = vmatprep.subr.mxu0 0.0
  %4126 = vmatpush1.msra.mxu0 0.0
  %4127 = vmatprep.subr.mxu0 0.0
  %4128 = vmatpush1.msra.mxu0 0.0
  %4129 = vmatprep.subr.mxu0 0.0
  %4130 = vmatpush1.msra.mxu0 0.0
  %4131 = vmatprep.subr.mxu0 0.0
  %4132 = vmatpush1.msra.mxu0 0.0
  %4133 = vmatprep.subr.mxu0 0.0
  %4134 = vmatpush1.msra.mxu0 0.0
  %4135 = vmatprep.subr.mxu0 0.0
  %4136 = vmatpush1.msra.mxu0 0.0
  %4137 = vmatprep.subr.mxu0 0.0
  %4138 = vmatpush1.msra.mxu0 0.0
  %4139 = vmatprep.subr.mxu0 0.0
  %4140 = vmatpush1.msra.mxu0 0.0
  %4141 = vmatprep.subr.mxu0 0.0
  %4142 = vmatpush1.msra.mxu0 0.0
  %4143 = vmatprep.subr.mxu0 0.0
  %4144 = vmatpush1.msra.mxu0 0.0
  %4145 = vmatprep.subr.mxu0 0.0
  %4146 = vmatpush1.msra.mxu0 0.0
  %4147 = vmatprep.subr.mxu0 0.0
  %4148 = vmatpush1.msra.mxu0 0.0
  %4149 = vmatprep.subr.mxu0 0.0
  %4150 = vmatpush1.msra.mxu0 0.0
  %4151 = vmatprep.subr.mxu0 0.0
  %4152 = vmatpush1.msra.mxu0 0.0
  %4153 = vmatprep.subr.mxu0 0.0
  %4154 = vmatpush1.msra.mxu0 0.0
  %4155 = vmatprep.subr.mxu0 0.0
  %4156 = vmatpush1.msra.mxu0 0.0
  %4157 = vmatprep.subr.mxu0 0.0
  %4158 = vmatpush1.msra.mxu0 0.0
  %4159 = vmatprep.subr.mxu0 0.0
  %4160 = vmatpush1.msra.mxu0 0.0
  %4161 = vmatprep.subr.mxu0 0.0
  %4162 = vmatpush1.msra.mxu0 0.0
  %4163 = vmatprep.subr.mxu0 0.0
  %4164 = vmatpush1.msra.mxu0 0.0
  %4165 = vmatprep.subr.mxu0 0.0
  %4166 = vmatpush1.msra.mxu0 0.0
  %4167 = vmatprep.mubr.f32.mxu0 0.0
  %4168 = vmatmul.mubr.f32.gmra.mrb[0].mxu0 %v4101
  %v4169 = vpop.f32.mrb[0].mxu0
  %v4170 = vadd.f32 0.0, %v4169
  %v4171 = vpop.f32.mrb[0].mxu0
  %v4172 = vadd.f32 0.0, %v4171
  %4173 = vdwg.mxu0
  %4174 = vmatprep.subr.mxu0 %v4095
  %4175 = vmatpush1.msra.mxu0 %v4094
  %4176 = vmatprep.subr.mxu0 0.0
  %4177 = vmatpush1.msra.mxu0 0.0
  %4178 = vmatprep.subr.mxu0 0.0
  %4179 = vmatpush1.msra.mxu0 0.0
  %4180 = vmatprep.subr.mxu0 0.0
  %4181 = vmatpush1.msra.mxu0 0.0
  %4182 = vmatprep.subr.mxu0 0.0
  %4183 = vmatpush1.msra.mxu0 0.0
  %4184 = vmatprep.subr.mxu0 0.0
  %4185 = vmatpush1.msra.mxu0 0.0
  %4186 = vmatprep.subr.mxu0 0.0
  %4187 = vmatpush1.msra.mxu0 0.0
  %4188 = vmatprep.subr.mxu0 0.0
  %4189 = vmatpush1.msra.mxu0 0.0
  %4190 = vmatprep.subr.mxu0 0.0
  %4191 = vmatpush1.msra.mxu0 0.0
  %4192 = vmatprep.subr.mxu0 0.0
  %4193 = vmatpush1.msra.mxu0 0.0
  %4194 = vmatprep.subr.mxu0 0.0
  %4195 = vmatpush1.msra.mxu0 0.0
  %4196 = vmatprep.subr.mxu0 0.0
  %4197 = vmatpush1.msra.mxu0 0.0
  %4198 = vmatprep.subr.mxu0 0.0
  %4199 = vmatpush1.msra.mxu0 0.0
  %4200 = vmatprep.subr.mxu0 0.0
  %4201 = vmatpush1.msra.mxu0 0.0
  %4202 = vmatprep.subr.mxu0 0.0
  %4203 = vmatpush1.msra.mxu0 0.0
  %4204 = vmatprep.subr.mxu0 0.0
  %4205 = vmatpush1.msra.mxu0 0.0
  %4206 = vmatprep.subr.mxu0 0.0
  %4207 = vmatpush1.msra.mxu0 0.0
  %4208 = vmatprep.subr.mxu0 0.0
  %4209 = vmatpush1.msra.mxu0 0.0
  %4210 = vmatprep.subr.mxu0 0.0
  %4211 = vmatpush1.msra.mxu0 0.0
  %4212 = vmatprep.subr.mxu0 0.0
  %4213 = vmatpush1.msra.mxu0 0.0
  %4214 = vmatprep.subr.mxu0 0.0
  %4215 = vmatpush1.msra.mxu0 0.0
  %4216 = vmatprep.subr.mxu0 0.0
  %4217 = vmatpush1.msra.mxu0 0.0
  %4218 = vmatprep.subr.mxu0 0.0
  %4219 = vmatpush1.msra.mxu0 0.0
  %4220 = vmatprep.subr.mxu0 0.0
  %4221 = vmatpush1.msra.mxu0 0.0
  %4222 = vmatprep.subr.mxu0 0.0
  %4223 = vmatpush1.msra.mxu0 0.0
  %4224 = vmatprep.subr.mxu0 0.0
  %4225 = vmatpush1.msra.mxu0 0.0
  %4226 = vmatprep.subr.mxu0 0.0
  %4227 = vmatpush1.msra.mxu0 0.0
  %4228 = vmatprep.subr.mxu0 0.0
  %4229 = vmatpush1.msra.mxu0 0.0
  %4230 = vmatprep.subr.mxu0 0.0
  %4231 = vmatpush1.msra.mxu0 0.0
  %4232 = vmatprep.subr.mxu0 0.0
  %4233 = vmatpush1.msra.mxu0 0.0
  %4234 = vmatprep.subr.mxu0 0.0
  %4235 = vmatpush1.msra.mxu0 0.0
  %4236 = vmatprep.subr.mxu0 0.0
  %4237 = vmatpush1.msra.mxu0 0.0
  %4238 = vmatprep.mubr.f32.mxu0 0.0
  %4239 = vmatmul.mubr.f32.gmra.mrb[0].mxu0 %v4101
  %v4240 = vpop.f32.mrb[0].mxu0
  %v4241 = vadd.f32 0.0, %v4240
  %v4242 = vpop.f32.mrb[0].mxu0
  %v4243 = vadd.f32 0.0, %v4242
  %4244 = vdwg.mxu0
  %v4245 = vadd.f32 %v4075, %v4170
  %v4246 = vadd.f32 %v4076, %v4172
  %v4247 = vadd.f32 %v4077, %v4241
  %v4248 = vadd.f32 %v4078, %v4243
  %v4249 = vlaneseq
  %v4250 = vand.u32 %v4249, 127
  %v4251 = vadd.s32 %v4250, 128
  %v4252 = vadd.s32 %v4250, 256
  %v4253 = vadd.s32 %v4250, 384
  %vm4254 = vcmp.lt.s32.totalorder %v4250, 0
  %v4255 = vsub.s32 0, %v4250
  %v4256 = vsel %vm4254, %v4255, %v4250
  %v4257 = vmul.u32.u64.compose %v4256, 3435973837
  %v4258 = vextract.low.u32 %v4257
  %v4259 = vextract.high.u32 %v4257
  %v4260 = vshrl.u32 %v4259, 4
  %v4261 = vmul.u32 %v4260, 20
  %v4262 = vsub.s32 %v4256, %v4261
  %v4263 = vsub.s32 0, %v4262
  %v4264 = vsel %vm4254, %v4263, %v4262
  %vm4265 = vcmp.lt.s32.totalorder %v4251, 0
  %v4266 = vsub.s32 0, %v4251
  %v4267 = vsel %vm4265, %v4266, %v4251
  %v4268 = vmul.u32.u64.compose %v4267, 3435973837
  %v4269 = vextract.low.u32 %v4268
  %v4270 = vextract.high.u32 %v4268
  %v4271 = vshrl.u32 %v4270, 4
  %v4272 = vmul.u32 %v4271, 20
  %v4273 = vsub.s32 %v4267, %v4272
  %v4274 = vsub.s32 0, %v4273
  %v4275 = vsel %vm4265, %v4274, %v4273
  %vm4276 = vcmp.lt.s32.totalorder %v4252, 0
  %v4277 = vsub.s32 0, %v4252
  %v4278 = vsel %vm4276, %v4277, %v4252
  %v4279 = vmul.u32.u64.compose %v4278, 3435973837
  %v4280 = vextract.low.u32 %v4279
  %v4281 = vextract.high.u32 %v4279
  %v4282 = vshrl.u32 %v4281, 4
  %v4283 = vmul.u32 %v4282, 20
  %v4284 = vsub.s32 %v4278, %v4283
  %v4285 = vsub.s32 0, %v4284
  %v4286 = vsel %vm4276, %v4285, %v4284
  %vm4287 = vcmp.lt.s32.totalorder %v4253, 0
  %v4288 = vsub.s32 0, %v4253
  %v4289 = vsel %vm4287, %v4288, %v4253
  %v4290 = vmul.u32.u64.compose %v4289, 3435973837
  %v4291 = vextract.low.u32 %v4290
  %v4292 = vextract.high.u32 %v4290
  %v4293 = vshrl.u32 %v4292, 4
  %v4294 = vmul.u32 %v4293, 20
  %v4295 = vsub.s32 %v4289, %v4294
  %v4296 = vsub.s32 0, %v4295
  %v4297 = vsel %vm4287, %v4296, %v4295
  %vm4298 = vcmp.ne.s32.totalorder %v4264, 0
  %vm4299 = vcmp.ne.s32.totalorder %v4275, 0
  %vm4300 = vcmp.ne.s32.totalorder %v4286, 0
  %vm4301 = vcmp.ne.s32.totalorder %v4297, 0
  %vm4302 = vcmp.lt.s32.totalorder %v4264, 0
  %vm4303 = vcmp.lt.s32.totalorder %v4275, 0
  %vm4304 = vcmp.lt.s32.totalorder %v4286, 0
  %vm4305 = vcmp.lt.s32.totalorder %v4297, 0
  %vm4306 = vmand %vm4302, %vm4298
  %vm4307 = vmand %vm4303, %vm4299
  %vm4308 = vmand %vm4304, %vm4300
  %vm4309 = vmand %vm4305, %vm4301
  %v4310 = vadd.s32 %v4264, 20
  %v4311 = vadd.s32 %v4275, 20
  %v4312 = vadd.s32 %v4286, 20
  %v4313 = vadd.s32 %v4297, 20
  %v4314 = vsel %vm4306, %v4310, %v4264
  %v4315 = vsel %vm4307, %v4311, %v4275
  %v4316 = vsel %vm4308, %v4312, %v4286
  %v4317 = vsel %vm4309, %v4313, %v4297
  %vm4318 = vcmp.lt.s32.totalorder %v4314, 16
  %vm4319 = vcmp.lt.s32.totalorder %v4315, 16
  %vm4320 = vcmp.lt.s32.totalorder %v4316, 16
  %vm4321 = vcmp.lt.s32.totalorder %v4317, 16
  %v4322 = vsel %vm4318, %v4245, 0.0
  %v4323 = vsel %vm4319, %v4246, 0.0
  %v4324 = vsel %vm4320, %v4247, 0.0
  %v4325 = vsel %vm4321, %v4248, 0.0
  %v4326 = vadd.f32 %v4322, %v4323
  %v4327 = vadd.f32 %v4326, %v4324
  %v4328 = vsel %vm3402, %v4325, 0.0
  %v4329 = vadd.f32 %v4327, %v4328
  %4330 = vadd.xlane.f32.xlu0 %v4329
  %v4331 = vpop.xlane.xlu0 %4330
  %v4332 = vmul.f32 %v4331, 0.0026041667
  %v4333 = vsub.f32 %v4322, %v4332
  %v4334 = vsub.f32 %v4323, %v4332
  %v4335 = vsub.f32 %v4324, %v4332
  %v4336 = vsub.f32 %v4325, %v4332
  %v4337 = vmul.f32 %v4333, %v4333
  %v4338 = vmul.f32 %v4334, %v4334
  %v4339 = vmul.f32 %v4335, %v4335
  %v4340 = vmul.f32 %v4336, %v4336
  %v4341 = vsel %vm4318, %v4337, 0.0
  %v4342 = vsel %vm4319, %v4338, 0.0
  %v4343 = vsel %vm4320, %v4339, 0.0
  %v4344 = vsel %vm4321, %v4340, 0.0
  %v4345 = vadd.f32 %v4341, %v4342
  %v4346 = vadd.f32 %v4345, %v4343
  %v4347 = vsel %vm3402, %v4344, 0.0
  %v4348 = vadd.f32 %v4346, %v4347
  %4349 = vadd.xlane.f32.xlu0 %v4348
  %v4350 = vpop.xlane.xlu0 %4349
  %v4351 = vmul.f32 %v4350, 0.0026041667
  %v4352 = vld [vmem:[%s2] sm:$0xff]
  %v4353 = vadd.f32 %v4351, 1e-05
  %v4354 = vrsqrt.pop %v4353
  %v4355 = vmul.f32 %v4352, %v4354
  %4357 = vset.pattern.permute.xlu0 0
  %4358 = vperm.xlu0 %4357, %v4355
  %v4359 = vpop.permute.xlu0 %4358
  %v4361 = vmul.f32 %v4333, %v4359
  %v4362 = vmul.f32 %v4334, %v4359
  %v4363 = vmul.f32 %v4335, %v4359
  %v4364 = vmul.f32 %v4336, %v4359
  %4366 = vset.pattern.permute.xlu0 1
  %4367 = vperm.xlu0 %4366, %v4352
  %v4368 = vpop.permute.xlu0 %4367
  %v4370 = vadd.f32 %v4361, %v4368
  %v4371 = vadd.f32 %v4362, %v4368
  %v4372 = vadd.f32 %v4363, %v4368
  %v4373 = vadd.f32 %v4364, %v4368
  %v4374 = vmax.f32 %v4370, 0.0
  %v4375 = vmax.f32 %v4371, 0.0
  %v4376 = vmax.f32 %v4372, 0.0
  %v4377 = vmax.f32 %v4373, 0.0
  %4379 = vrot.lane.b32.xlu0 %v4374, 88
  %v4380 = vpop.permute.xlu0 %4379
  %v4382 = vmax.f32 %v4374, %v4380
  %4383 = vrot.lane.b32.xlu0 %v4374, 48
  %v4384 = vpop.permute.xlu0 %4383
  %v4386 = vmax.f32 %v4382, %v4384
  %4388 = vrot.lane.b32.xlu0 %v4374, 8
  %v4389 = vpop.permute.xlu0 %4388
  %4390 = vrot.lane.b32.xlu0 %v4375, 8
  %v4391 = vpop.permute.xlu0 %4390
  %v4392 = vsel %vm41, %v4389, %v4391
  %v4394 = vmax.f32 %v4386, %v4392
  %4395 = vrot.lane.b32.xlu0 %v4375, 96
  %v4396 = vpop.permute.xlu0 %4395
  %v4398 = vmax.f32 %v4394, %v4396
  %4399 = vrot.lane.b32.xlu0 %v4375, 56
  %v4400 = vpop.permute.xlu0 %4399
  %v4402 = vmax.f32 %v4398, %v4400
  %4404 = vrot.lane.b32.xlu0 %v4375, 16
  %v4405 = vpop.permute.xlu0 %4404
  %4406 = vrot.lane.b32.xlu0 %v4376, 16
  %v4407 = vpop.permute.xlu0 %4406
  %vm4408 = vcmask 130048
  %v4409 = vsel %vm4408, %v4405, %v4407
  %v4411 = vmax.f32 %v4402, %v4409
  %4412 = vrot.lane.b32.xlu0 %v4376, 104
  %v4413 = vpop.permute.xlu0 %4412
  %v4415 = vmax.f32 %v4411, %v4413
  %4416 = vrot.lane.b32.xlu0 %v4376, 64
  %v4417 = vpop.permute.xlu0 %4416
  %v4419 = vmax.f32 %v4415, %v4417
  %4421 = vrot.lane.b32.xlu0 %v4376, 24
  %v4422 = vpop.permute.xlu0 %4421
  %4423 = vrot.lane.b32.xlu0 %v4377, 24
  %v4424 = vpop.permute.xlu0 %4423
  %vm4425 = vcmask 195584
  %v4426 = vsel %vm4425, %v4422, %v4424
  %v4428 = vmax.f32 %v4419, %v4426
  %4429 = vrot.lane.b32.xlu0 %v4377, 112
  %v4430 = vpop.permute.xlu0 %4429
  %v4432 = vmax.f32 %v4428, %v4430
  %4433 = vrot.lane.b32.xlu0 %v4377, 72
  %v4434 = vpop.permute.xlu0 %4433
  %v4436 = vmax.f32 %v4432, %v4434
  %vm4437 = vcmask 326656
  %4438 = vst.msk [vmem:[%s3] sm:$0xff] %vm4437, %v4436
  // Predicated region
  $region14: #{conv_v_forward.1} parent=0 // pred_check
    _
  $region15: #{conv_v_forward.1} parent=0 // pred_check_branch
    %4440 = sbr.rel (0) target = $region17
  $region16: #{conv_v_forward.1} parent=0 // pred_region
    _
  $region17: #{conv_v_forward.1} parent=0 // pred_fallthru
    _
  // Predicated region
  $region18: #{conv_v_forward.1} parent=0 // pred_check
    _
  $region19: #{conv_v_forward.1} parent=0 // pred_check_branch
    %4442 = sbr.rel (0) target = $region21
  $region20: #{conv_v_forward.1} parent=0 // pred_region
    _
  $region21: #{conv_v_forward.1} parent=0 // pred_fallthru
    _

</llo_original>
